<compile_context>
chip_gen: v5e
topology: v5e:2x2
jax: 0.10.0
libtpu: 0.0.40
codegen_flags: <defaults>
</compile_context>

<pallas_src>
import jax
import jax.numpy as jnp
import numpy as np
from jax.experimental import pallas as pl
from jax.experimental.pallas import tpu as pltpu


def _darknet_block_kernel(x_ref, w1_ref, b1_ref, w2_ref, b2_ref, o_ref, hpad_ref):
    # x_ref   : (H+2, W, C_in)  f32   H-zero-padded input image (resident across t)
    # w1_ref  : (C_in, C_hid)   bf16  folded 1x1 conv weight (BN scale absorbed)
    # b1_ref  : (1, C_hid)      f32   folded BN bias
    # w2_ref  : (9*C_hid, C_out) bf16 folded 3x3 conv weight, tap = dy*3+dx
    # b2_ref  : (1, C_out)      f32
    # o_ref   : (TH, W, C_out)  f32   output row-tile
    # hpad_ref: (TH+2, W+2, C_hid) bf16 scratch: zero-padded hidden activations
    TH, W, C_out = o_ref.shape
    C_in = x_ref.shape[-1]
    C_hid = w1_ref.shape[1]

    t = pl.program_id(1)
    num_t = pl.num_programs(1)
    row0 = pl.multiple_of(t * TH, TH)          # start row (in padded-x coords)

    # ---- conv1: 1x1 conv on TH+2 halo rows as a matmul (bf16 in, f32 acc) ----
    xw = x_ref[pl.ds(row0, TH + 2)]            # (TH+2, W, C_in) f32
    xf = xw.reshape((TH + 2) * W, C_in).astype(jnp.bfloat16)
    h = jnp.dot(xf, w1_ref[...], preferred_element_type=jnp.float32)
    h = h + b1_ref[...]
    h = jnp.where(h > 0, h, 0.1 * h)           # LeakyReLU(0.1), f32

    # ---- write padded hidden tile (interior only; borders handled below) ----
    hpad_ref[:, 1:W + 1, :] = h.reshape(TH + 2, W, C_hid).astype(jnp.bfloat16)
    # W-padding columns are never written above -> zero them (tiny strips).
    zcol = jnp.zeros((TH + 2, 1, C_hid), hpad_ref.dtype)
    hpad_ref[:, 0:1, :] = zcol
    hpad_ref[:, W + 1:W + 2, :] = zcol

    # H-boundary halo rows came from the zero-padded x rows; conv1(0) != 0,
    # so they must be forced to zero only at the image edges.
    @pl.when(t == 0)
    def _():
        hpad_ref[0:1, :, :] = jnp.zeros((1, W + 2, C_hid), hpad_ref.dtype)

    @pl.when(t == num_t - 1)
    def _():
        hpad_ref[TH + 1:TH + 2, :, :] = jnp.zeros((1, W + 2, C_hid), hpad_ref.dtype)

    # ---- conv2: 3x3 conv as 9 tap matmuls (bf16 in, f32 acc) ----
    # TODO(synk): the dx windows still carry a small relayout; a roll-based
    # lane-aligned extraction (or fused K=3*C_hid taps) could remove it.
    acc = None
    for dy in range(3):
        band = hpad_ref[dy:dy + TH]            # (TH, W+2, C_hid), outer-dim slice
        for dx in range(3):
            win = band[:, dx:dx + W, :].reshape(TH * W, C_hid)
            tap = dy * 3 + dx
            wk = w2_ref[tap * C_hid:(tap + 1) * C_hid, :]
            p = jnp.dot(win, wk, preferred_element_type=jnp.float32)
            acc = p if acc is None else acc + p

    y = acc + b2_ref[...]
    y = jnp.where(y > 0, y, 0.1 * y)

    # ---- residual add (f32, exact input rows of this tile) ----
    x_res = x_ref[pl.ds(row0 + 1, TH)]         # (TH, W, C_in)
    o_ref[...] = (y.reshape(TH, W, C_out) + x_res).astype(o_ref.dtype)


def _pick_tile_h(H):
    for th in (8, 4, 2, 1):
        if H % th == 0:
            return th
    return 1


@jax.jit
def darknet_block_pallas(x_nchw, w1_bf16, b1, w2_bf16, b2):
    """x_nchw: (N, C_in, H, W) f32. Returns (N, C_in, H, W) f32."""
    N, C_in, H, W = x_nchw.shape
    C_hid = w1_bf16.shape[1]
    C_out = w2_bf16.shape[1]
    assert C_out == C_in

    TH = _pick_tile_h(H)
    num_t = H // TH

    # NCHW -> NHWC (channels on lanes); zero-pad H by 1 on each side so every
    # row tile can read its 1-row halo with a plain dynamic slice.
    x_nhwc = jnp.transpose(x_nchw, (0, 2, 3, 1))
    x_pad = jnp.pad(x_nhwc, ((0, 0), (1, 1), (0, 0), (0, 0)))

    out_nhwc = pl.pallas_call(
        _darknet_block_kernel,
        out_shape=jax.ShapeDtypeStruct((N, H, W, C_out), x_nchw.dtype),
        grid_spec=pltpu.PrefetchScalarGridSpec(
            num_scalar_prefetch=0,
            grid=(N, num_t),
            in_specs=[
                # full padded image per batch; block index ignores t so it
                # stays resident across the row-tile axis (no re-DMA).
                pl.BlockSpec((None, H + 2, W, C_in), lambda n, t: (n, 0, 0, 0)),
                pl.BlockSpec((C_in, C_hid), lambda n, t: (0, 0)),
                pl.BlockSpec((1, C_hid), lambda n, t: (0, 0)),
                pl.BlockSpec((9 * C_hid, C_out), lambda n, t: (0, 0)),
                pl.BlockSpec((1, C_out), lambda n, t: (0, 0)),
            ],
            out_specs=pl.BlockSpec((None, TH, W, C_out),
                                   lambda n, t: (n, t, 0, 0)),
            scratch_shapes=[pltpu.VMEM((TH + 2, W + 2, C_hid), jnp.bfloat16)],
        ),
        compiler_params=pltpu.CompilerParams(
            dimension_semantics=("parallel", "parallel"),
            vmem_limit_bytes=48 * 1024 * 1024,
        ),
    )(x_pad, w1_bf16, b1, w2_bf16, b2)

    return jnp.transpose(out_nhwc, (0, 3, 1, 2))   # NHWC -> NCHW


# ----------------------- parameter setup / BN folding -----------------------

def fold_bn(gamma, beta, mean, var, eps=1e-5):
    scale = gamma / jnp.sqrt(var + eps)
    bias = beta - mean * scale
    return scale, bias


def make_params(key, ch_in):
    ch_hid = ch_in // 2
    ks = jax.random.split(key, 10)
    # conv weights in PyTorch OIHW layout
    w1_t = jax.random.normal(ks[0], (ch_hid, ch_in, 1, 1), jnp.float32) * 0.05
    w2_t = jax.random.normal(ks[1], (ch_in, ch_hid, 3, 3), jnp.float32) * 0.05
    # BatchNorm params / running stats
    g1 = 1.0 + 0.1 * jax.random.normal(ks[2], (ch_hid,), jnp.float32)
    b1 = 0.1 * jax.random.normal(ks[3], (ch_hid,), jnp.float32)
    m1 = 0.1 * jax.random.normal(ks[4], (ch_hid,), jnp.float32)
    v1 = 0.5 + jax.random.uniform(ks[5], (ch_hid,), jnp.float32)
    g2 = 1.0 + 0.1 * jax.random.normal(ks[6], (ch_in,), jnp.float32)
    b2 = 0.1 * jax.random.normal(ks[7], (ch_in,), jnp.float32)
    m2 = 0.1 * jax.random.normal(ks[8], (ch_in,), jnp.float32)
    v2 = 0.5 + jax.random.uniform(ks[9], (ch_in,), jnp.float32)
    return (w1_t, g1, b1, m1, v1), (w2_t, g2, b2, m2, v2)


def fold_params_for_kernel(p1, p2):
    w1_t, g1, b1, m1, v1 = p1
    w2_t, g2, b2, m2, v2 = p2
    ch_hid, ch_in = w1_t.shape[0], w1_t.shape[1]
    s1, bias1 = fold_bn(g1, b1, m1, v1)
    s2, bias2 = fold_bn(g2, b2, m2, v2)
    # 1x1: (C_hid, C_in, 1, 1) -> (C_in, C_hid), absorb BN scale into out-channels
    w1f = jnp.transpose(w1_t[:, :, 0, 0], (1, 0)) * s1[None, :]
    # 3x3: (C_out, C_hid, 3, 3) -> packed (9*C_hid, C_out), tap index = dy*3+dx
    w2f = jnp.transpose(w2_t, (2, 3, 1, 0)).reshape(9 * ch_hid, ch_in) * s2[None, :]
    return (w1f.astype(jnp.bfloat16), bias1.reshape(1, -1).astype(jnp.float32),
            w2f.astype(jnp.bfloat16), bias2.reshape(1, -1).astype(jnp.float32))


# ----------------------------- plain JAX reference ---------------------------

def _convbn_leaky_ref(x, w, gamma, beta, mean, var, padding):
    y = jax.lax.conv_general_dilated(
        x, w, window_strides=(1, 1),
        padding=[(padding, padding), (padding, padding)],
        dimension_numbers=('NCHW', 'OIHW', 'NCHW'))
    scale = gamma / jnp.sqrt(var + 1e-5)
    y = y * scale[None, :, None, None] + (beta - mean * scale)[None, :, None, None]
    return jnp.where(y > 0, y, 0.1 * y)


def darknet_block_ref(x, p1, p2):
    w1_t, g1, b1, m1, v1 = p1
    w2_t, g2, b2, m2, v2 = p2
    h = _convbn_leaky_ref(x, w1_t, g1, b1, m1, v1, padding=0)
    y = _convbn_leaky_ref(h, w2_t, g2, b2, m2, v2, padding=1)
    return y + x


if __name__ == "__main__":
    # Lane-dense small test: ch_in multiple of 128 (-> ch_hid = 128), W % 8 == 0.
    N, C_IN, H, W = 2, 256, 16, 16
    key = jax.random.PRNGKey(0)
    kx, kp = jax.random.split(key)
    x = jax.random.normal(kx, (N, C_IN, H, W), jnp.float32)

    p1, p2 = make_params(kp, C_IN)
    w1f, b1f, w2f, b2f = fold_params_for_kernel(p1, p2)

    out = darknet_block_pallas(x, w1f, b1f, w2f, b2f)
    out = jax.block_until_ready(out)

    ref = jax.block_until_ready(darknet_block_ref(x, p1, p2))
    # bf16 MXU inputs (f32 accumulation) -> slightly looser tolerance.
    np.testing.assert_allclose(np.asarray(out), np.asarray(ref),
                               rtol=2e-2, atol=3e-2)
    print("KERNEL_OK")
</pallas_src>

<mosaic_0001>
module attributes {stable_mosaic.version = 11 : i64} {
  func.func @_darknet_block_kernel(%arg0: i32, %arg1: i32, %arg2: memref<1x18x16x256xf32, #tpu.memory_space<vmem>>, %arg3: memref<256x128xbf16, #tpu.memory_space<vmem>>, %arg4: memref<1x128xf32, #tpu.memory_space<vmem>>, %arg5: memref<1152x256xbf16, #tpu.memory_space<vmem>>, %arg6: memref<1x256xf32, #tpu.memory_space<vmem>>, %arg7: memref<1x8x16x256xf32, #tpu.memory_space<vmem>>, %arg8: memref<10x18x128xbf16, #tpu.memory_space<vmem>>) attributes {dimension_semantics = [#tpu.dimension_semantics<parallel>, #tpu.dimension_semantics<parallel>], iteration_bounds = array<i64: 2, 2>, scalar_prefetch = 0 : i64, scratch_operands = 1 : i64, tpu.core_type = #tpu.core_type<tc>, window_params = [{transform_indices = @transform_0, window_bounds = array<i64: 1, 18, 16, 256>}, {pipeline_mode = #tpu.pipeline_mode<synchronous>, transform_indices = @transform_1, window_bounds = array<i64: 256, 128>}, {pipeline_mode = #tpu.pipeline_mode<synchronous>, transform_indices = @transform_2, window_bounds = array<i64: 1, 128>}, {pipeline_mode = #tpu.pipeline_mode<synchronous>, transform_indices = @transform_3, window_bounds = array<i64: 1152, 256>}, {pipeline_mode = #tpu.pipeline_mode<synchronous>, transform_indices = @transform_4, window_bounds = array<i64: 1, 256>}, {transform_indices = @transform_5, window_bounds = array<i64: 1, 8, 16, 256>}]} {
    %c8_i32 = arith.constant 8 : i32
    %0 = arith.muli %arg1, %c8_i32 : i32
    %1 = tpu.assume_multiple %0, 8 : i32
    %c0 = arith.constant 0 : index
    %2 = arith.index_cast %1 : i32 to index
    %c0_0 = arith.constant 0 : index
    %c0_1 = arith.constant 0 : index
    %3 = vector.load %arg2[%c0, %2, %c0_0, %c0_1] : memref<1x18x16x256xf32, #tpu.memory_space<vmem>>, vector<1x10x16x256xf32>
    %4 = vector.shape_cast %3 : vector<1x10x16x256xf32> to vector<10x16x256xf32>
    %5 = vector.shape_cast %4 : vector<10x16x256xf32> to vector<160x256xf32>
    %6 = arith.truncf %5 : vector<160x256xf32> to vector<160x256xbf16>
    %c0_2 = arith.constant 0 : index
    %c0_3 = arith.constant 0 : index
    %7 = vector.load %arg3[%c0_2, %c0_3] : memref<256x128xbf16, #tpu.memory_space<vmem>>, vector<256x128xbf16>
    %cst = arith.constant dense<0.000000e+00> : vector<160x128xf32>
    %8 = tpu.matmul %6, %7, %cst {dimension_numbers = #tpu.dot_dimension_numbers<[1], [0], [0], [1], [0, 0, 1, 1], [], []>} : vector<160x256xbf16>, vector<256x128xbf16>, vector<160x128xf32> -> vector<160x128xf32>
    %c0_4 = arith.constant 0 : index
    %c0_5 = arith.constant 0 : index
    %9 = vector.load %arg4[%c0_4, %c0_5] : memref<1x128xf32, #tpu.memory_space<vmem>>, vector<1x128xf32>
    %10 = vector.broadcast %9 : vector<1x128xf32> to vector<160x128xf32>
    %11 = arith.addf %8, %10 : vector<160x128xf32>
    %cst_6 = arith.constant 0.000000e+00 : f32
    %12 = vector.broadcast %cst_6 : f32 to vector<160x128xf32>
    %13 = arith.cmpf ogt, %11, %12 : vector<160x128xf32>
    %cst_7 = arith.constant 1.000000e-01 : f32
    %14 = vector.broadcast %cst_7 : f32 to vector<160x128xf32>
    %15 = arith.mulf %14, %11 : vector<160x128xf32>
    %16 = arith.select %13, %11, %15 : vector<160x128xi1>, vector<160x128xf32>
    %17 = vector.shape_cast %16 : vector<160x128xf32> to vector<10x16x128xf32>
    %18 = arith.truncf %17 : vector<10x16x128xf32> to vector<10x16x128xbf16>
    %c0_8 = arith.constant 0 : index
    %c1 = arith.constant 1 : index
    %c0_9 = arith.constant 0 : index
    %19 = vector.load %arg8[%c0_8, %c1, %c0_9] : memref<10x18x128xbf16, #tpu.memory_space<vmem>>, vector<10x16x128xbf16>
    tpu.vector_store %arg8[%c0_8, %c1, %c0_9], %18 {strides = array<i32>} : memref<10x18x128xbf16, #tpu.memory_space<vmem>>, vector<10x16x128xbf16>,
    %cst_10 = arith.constant 0.000000e+00 : bf16
    %20 = vector.broadcast %cst_10 : bf16 to vector<10x1x128xbf16>
    %c0_11 = arith.constant 0 : index
    %c0_12 = arith.constant 0 : index
    %c0_13 = arith.constant 0 : index
    %21 = vector.load %arg8[%c0_11, %c0_12, %c0_13] : memref<10x18x128xbf16, #tpu.memory_space<vmem>>, vector<10x1x128xbf16>
    tpu.vector_store %arg8[%c0_11, %c0_12, %c0_13], %20 {strides = array<i32>} : memref<10x18x128xbf16, #tpu.memory_space<vmem>>, vector<10x1x128xbf16>,
    %c0_14 = arith.constant 0 : index
    %c17 = arith.constant 17 : index
    %c0_15 = arith.constant 0 : index
    %22 = vector.load %arg8[%c0_14, %c17, %c0_15] : memref<10x18x128xbf16, #tpu.memory_space<vmem>>, vector<10x1x128xbf16>
    tpu.vector_store %arg8[%c0_14, %c17, %c0_15], %20 {strides = array<i32>} : memref<10x18x128xbf16, #tpu.memory_space<vmem>>, vector<10x1x128xbf16>,
    %c0_i32 = arith.constant 0 : i32
    %23 = arith.cmpi eq, %arg1, %c0_i32 : i32
    %24 = arith.extui %23 : i1 to i32
    %c0_i32_16 = arith.constant 0 : i32
    %25 = arith.cmpi ne, %24, %c0_i32_16 : i32
    scf.if %25 {
      %cst_57 = arith.constant 0.000000e+00 : bf16
      %93 = vector.broadcast %cst_57 : bf16 to vector<1x18x128xbf16>
      %c0_58 = arith.constant 0 : index
      %c0_59 = arith.constant 0 : index
      %c0_60 = arith.constant 0 : index
      %94 = vector.load %arg8[%c0_58, %c0_59, %c0_60] : memref<10x18x128xbf16, #tpu.memory_space<vmem>>, vector<1x18x128xbf16>
      tpu.vector_store %arg8[%c0_58, %c0_59, %c0_60], %93 {strides = array<i32>} : memref<10x18x128xbf16, #tpu.memory_space<vmem>>, vector<1x18x128xbf16>,
    } else {
    }
    %c1_i32 = arith.constant 1 : i32
    %26 = arith.cmpi eq, %arg1, %c1_i32 : i32
    %27 = arith.extui %26 : i1 to i32
    %c0_i32_17 = arith.constant 0 : i32
    %28 = arith.cmpi ne, %27, %c0_i32_17 : i32
    scf.if %28 {
      %cst_57 = arith.constant 0.000000e+00 : bf16
      %93 = vector.broadcast %cst_57 : bf16 to vector<1x18x128xbf16>
      %c9 = arith.constant 9 : index
      %c0_58 = arith.constant 0 : index
      %c0_59 = arith.constant 0 : index
      %94 = vector.load %arg8[%c9, %c0_58, %c0_59] : memref<10x18x128xbf16, #tpu.memory_space<vmem>>, vector<1x18x128xbf16>
      tpu.vector_store %arg8[%c9, %c0_58, %c0_59], %93 {strides = array<i32>} : memref<10x18x128xbf16, #tpu.memory_space<vmem>>, vector<1x18x128xbf16>,
    } else {
    }
    %c0_18 = arith.constant 0 : index
    %c0_19 = arith.constant 0 : index
    %c0_20 = arith.constant 0 : index
    %29 = vector.load %arg8[%c0_18, %c0_19, %c0_20] : memref<10x18x128xbf16, #tpu.memory_space<vmem>>, vector<8x18x128xbf16>
    %30 = vector.extract_strided_slice %29 {offsets = [0, 0, 0], sizes = [8, 16, 128], strides = [1, 1, 1]} : vector<8x18x128xbf16> to vector<8x16x128xbf16>
    %31 = vector.shape_cast %30 : vector<8x16x128xbf16> to vector<128x128xbf16>
    %c0_21 = arith.constant 0 : index
    %c0_22 = arith.constant 0 : index
    %32 = vector.load %arg5[%c0_21, %c0_22] : memref<1152x256xbf16, #tpu.memory_space<vmem>>, vector<128x256xbf16>
    %cst_23 = arith.constant dense<0.000000e+00> : vector<128x256xf32>
    %33 = tpu.matmul %31, %32, %cst_23 {dimension_numbers = #tpu.dot_dimension_numbers<[1], [0], [0], [1], [0, 0, 1, 1], [], []>} : vector<128x128xbf16>, vector<128x256xbf16>, vector<128x256xf32> -> vector<128x256xf32>
    %34 = vector.extract_strided_slice %29 {offsets = [0, 1, 0], sizes = [8, 16, 128], strides = [1, 1, 1]} : vector<8x18x128xbf16> to vector<8x16x128xbf16>
    %35 = vector.shape_cast %34 : vector<8x16x128xbf16> to vector<128x128xbf16>
    %c128 = arith.constant 128 : index
    %c0_24 = arith.constant 0 : index
    %36 = vector.load %arg5[%c128, %c0_24] : memref<1152x256xbf16, #tpu.memory_space<vmem>>, vector<128x256xbf16>
    %cst_25 = arith.constant dense<0.000000e+00> : vector<128x256xf32>
    %37 = tpu.matmul %35, %36, %cst_25 {dimension_numbers = #tpu.dot_dimension_numbers<[1], [0], [0], [1], [0, 0, 1, 1], [], []>} : vector<128x128xbf16>, vector<128x256xbf16>, vector<128x256xf32> -> vector<128x256xf32>
    %38 = arith.addf %33, %37 : vector<128x256xf32>
    %39 = vector.extract_strided_slice %29 {offsets = [0, 2, 0], sizes = [8, 16, 128], strides = [1, 1, 1]} : vector<8x18x128xbf16> to vector<8x16x128xbf16>
    %40 = vector.shape_cast %39 : vector<8x16x128xbf16> to vector<128x128xbf16>
    %c256 = arith.constant 256 : index
    %c0_26 = arith.constant 0 : index
    %41 = vector.load %arg5[%c256, %c0_26] : memref<1152x256xbf16, #tpu.memory_space<vmem>>, vector<128x256xbf16>
    %cst_27 = arith.constant dense<0.000000e+00> : vector<128x256xf32>
    %42 = tpu.matmul %40, %41, %cst_27 {dimension_numbers = #tpu.dot_dimension_numbers<[1], [0], [0], [1], [0, 0, 1, 1], [], []>} : vector<128x128xbf16>, vector<128x256xbf16>, vector<128x256xf32> -> vector<128x256xf32>
    %43 = arith.addf %38, %42 : vector<128x256xf32>
    %c1_28 = arith.constant 1 : index
    %c0_29 = arith.constant 0 : index
    %c0_30 = arith.constant 0 : index
    %44 = vector.load %arg8[%c1_28, %c0_29, %c0_30] : memref<10x18x128xbf16, #tpu.memory_space<vmem>>, vector<8x18x128xbf16>
    %45 = vector.extract_strided_slice %44 {offsets = [0, 0, 0], sizes = [8, 16, 128], strides = [1, 1, 1]} : vector<8x18x128xbf16> to vector<8x16x128xbf16>
    %46 = vector.shape_cast %45 : vector<8x16x128xbf16> to vector<128x128xbf16>
    %c384 = arith.constant 384 : index
    %c0_31 = arith.constant 0 : index
    %47 = vector.load %arg5[%c384, %c0_31] : memref<1152x256xbf16, #tpu.memory_space<vmem>>, vector<128x256xbf16>
    %cst_32 = arith.constant dense<0.000000e+00> : vector<128x256xf32>
    %48 = tpu.matmul %46, %47, %cst_32 {dimension_numbers = #tpu.dot_dimension_numbers<[1], [0], [0], [1], [0, 0, 1, 1], [], []>} : vector<128x128xbf16>, vector<128x256xbf16>, vector<128x256xf32> -> vector<128x256xf32>
    %49 = arith.addf %43, %48 : vector<128x256xf32>
    %50 = vector.extract_strided_slice %44 {offsets = [0, 1, 0], sizes = [8, 16, 128], strides = [1, 1, 1]} : vector<8x18x128xbf16> to vector<8x16x128xbf16>
    %51 = vector.shape_cast %50 : vector<8x16x128xbf16> to vector<128x128xbf16>
    %c512 = arith.constant 512 : index
    %c0_33 = arith.constant 0 : index
    %52 = vector.load %arg5[%c512, %c0_33] : memref<1152x256xbf16, #tpu.memory_space<vmem>>, vector<128x256xbf16>
    %cst_34 = arith.constant dense<0.000000e+00> : vector<128x256xf32>
    %53 = tpu.matmul %51, %52, %cst_34 {dimension_numbers = #tpu.dot_dimension_numbers<[1], [0], [0], [1], [0, 0, 1, 1], [], []>} : vector<128x128xbf16>, vector<128x256xbf16>, vector<128x256xf32> -> vector<128x256xf32>
    %54 = arith.addf %49, %53 : vector<128x256xf32>
    %55 = vector.extract_strided_slice %44 {offsets = [0, 2, 0], sizes = [8, 16, 128], strides = [1, 1, 1]} : vector<8x18x128xbf16> to vector<8x16x128xbf16>
    %56 = vector.shape_cast %55 : vector<8x16x128xbf16> to vector<128x128xbf16>
    %c640 = arith.constant 640 : index
    %c0_35 = arith.constant 0 : index
    %57 = vector.load %arg5[%c640, %c0_35] : memref<1152x256xbf16, #tpu.memory_space<vmem>>, vector<128x256xbf16>
    %cst_36 = arith.constant dense<0.000000e+00> : vector<128x256xf32>
    %58 = tpu.matmul %56, %57, %cst_36 {dimension_numbers = #tpu.dot_dimension_numbers<[1], [0], [0], [1], [0, 0, 1, 1], [], []>} : vector<128x128xbf16>, vector<128x256xbf16>, vector<128x256xf32> -> vector<128x256xf32>
    %59 = arith.addf %54, %58 : vector<128x256xf32>
    %c2 = arith.constant 2 : index
    %c0_37 = arith.constant 0 : index
    %c0_38 = arith.constant 0 : index
    %60 = vector.load %arg8[%c2, %c0_37, %c0_38] : memref<10x18x128xbf16, #tpu.memory_space<vmem>>, vector<8x18x128xbf16>
    %61 = vector.extract_strided_slice %60 {offsets = [0, 0, 0], sizes = [8, 16, 128], strides = [1, 1, 1]} : vector<8x18x128xbf16> to vector<8x16x128xbf16>
    %62 = vector.shape_cast %61 : vector<8x16x128xbf16> to vector<128x128xbf16>
    %c768 = arith.constant 768 : index
    %c0_39 = arith.constant 0 : index
    %63 = vector.load %arg5[%c768, %c0_39] : memref<1152x256xbf16, #tpu.memory_space<vmem>>, vector<128x256xbf16>
    %cst_40 = arith.constant dense<0.000000e+00> : vector<128x256xf32>
    %64 = tpu.matmul %62, %63, %cst_40 {dimension_numbers = #tpu.dot_dimension_numbers<[1], [0], [0], [1], [0, 0, 1, 1], [], []>} : vector<128x128xbf16>, vector<128x256xbf16>, vector<128x256xf32> -> vector<128x256xf32>
    %65 = arith.addf %59, %64 : vector<128x256xf32>
    %66 = vector.extract_strided_slice %60 {offsets = [0, 1, 0], sizes = [8, 16, 128], strides = [1, 1, 1]} : vector<8x18x128xbf16> to vector<8x16x128xbf16>
    %67 = vector.shape_cast %66 : vector<8x16x128xbf16> to vector<128x128xbf16>
    %c896 = arith.constant 896 : index
    %c0_41 = arith.constant 0 : index
    %68 = vector.load %arg5[%c896, %c0_41] : memref<1152x256xbf16, #tpu.memory_space<vmem>>, vector<128x256xbf16>
    %cst_42 = arith.constant dense<0.000000e+00> : vector<128x256xf32>
    %69 = tpu.matmul %67, %68, %cst_42 {dimension_numbers = #tpu.dot_dimension_numbers<[1], [0], [0], [1], [0, 0, 1, 1], [], []>} : vector<128x128xbf16>, vector<128x256xbf16>, vector<128x256xf32> -> vector<128x256xf32>
    %70 = arith.addf %65, %69 : vector<128x256xf32>
    %71 = vector.extract_strided_slice %60 {offsets = [0, 2, 0], sizes = [8, 16, 128], strides = [1, 1, 1]} : vector<8x18x128xbf16> to vector<8x16x128xbf16>
    %72 = vector.shape_cast %71 : vector<8x16x128xbf16> to vector<128x128xbf16>
    %c1024 = arith.constant 1024 : index
    %c0_43 = arith.constant 0 : index
    %73 = vector.load %arg5[%c1024, %c0_43] : memref<1152x256xbf16, #tpu.memory_space<vmem>>, vector<128x256xbf16>
    %cst_44 = arith.constant dense<0.000000e+00> : vector<128x256xf32>
    %74 = tpu.matmul %72, %73, %cst_44 {dimension_numbers = #tpu.dot_dimension_numbers<[1], [0], [0], [1], [0, 0, 1, 1], [], []>} : vector<128x128xbf16>, vector<128x256xbf16>, vector<128x256xf32> -> vector<128x256xf32>
    %75 = arith.addf %70, %74 : vector<128x256xf32>
    %c0_45 = arith.constant 0 : index
    %c0_46 = arith.constant 0 : index
    %76 = vector.load %arg6[%c0_45, %c0_46] : memref<1x256xf32, #tpu.memory_space<vmem>>, vector<1x256xf32>
    %77 = vector.broadcast %76 : vector<1x256xf32> to vector<128x256xf32>
    %78 = arith.addf %75, %77 : vector<128x256xf32>
    %cst_47 = arith.constant 0.000000e+00 : f32
    %79 = vector.broadcast %cst_47 : f32 to vector<128x256xf32>
    %80 = arith.cmpf ogt, %78, %79 : vector<128x256xf32>
    %cst_48 = arith.constant 1.000000e-01 : f32
    %81 = vector.broadcast %cst_48 : f32 to vector<128x256xf32>
    %82 = arith.mulf %81, %78 : vector<128x256xf32>
    %83 = arith.select %80, %78, %82 : vector<128x256xi1>, vector<128x256xf32>
    %c1_i32_49 = arith.constant 1 : i32
    %84 = arith.addi %1, %c1_i32_49 : i32
    %c0_50 = arith.constant 0 : index
    %85 = arith.index_cast %84 : i32 to index
    %c0_51 = arith.constant 0 : index
    %c0_52 = arith.constant 0 : index
    %86 = vector.load %arg2[%c0_50, %85, %c0_51, %c0_52] : memref<1x18x16x256xf32, #tpu.memory_space<vmem>>, vector<1x8x16x256xf32>
    %87 = vector.shape_cast %86 : vector<1x8x16x256xf32> to vector<8x16x256xf32>
    %88 = vector.shape_cast %83 : vector<128x256xf32> to vector<8x16x256xf32>
    %89 = arith.addf %88, %87 : vector<8x16x256xf32>
    %c0_53 = arith.constant 0 : index
    %c0_54 = arith.constant 0 : index
    %c0_55 = arith.constant 0 : index
    %c0_56 = arith.constant 0 : index
    %90 = vector.load %arg7[%c0_53, %c0_54, %c0_55, %c0_56] : memref<1x8x16x256xf32, #tpu.memory_space<vmem>>, vector<1x8x16x256xf32>
    %91 = vector.shape_cast %90 : vector<1x8x16x256xf32> to vector<8x16x256xf32>
    %92 = vector.shape_cast %89 : vector<8x16x256xf32> to vector<1x8x16x256xf32>
    tpu.vector_store %arg7[%c0_53, %c0_54, %c0_55, %c0_56], %92 {strides = array<i32>} : memref<1x8x16x256xf32, #tpu.memory_space<vmem>>, vector<1x8x16x256xf32>,
    return
  }
  func.func @transform_0(%arg0: i32, %arg1: i32) -> (i32, i32, i32, i32) {
    %c0_i32 = arith.constant 0 : i32
    %c0_i32_0 = arith.constant 0 : i32
    %c0_i32_1 = arith.constant 0 : i32
    %c0_i32_2 = arith.constant 0 : i32
    return %arg0, %c0_i32, %c0_i32_0, %c0_i32_1 : i32, i32, i32, i32
  }
  func.func @transform_1(%arg0: i32, %arg1: i32) -> (i32, i32) {
    %c0_i32 = arith.constant 0 : i32
    %c0_i32_0 = arith.constant 0 : i32
    %c0_i32_1 = arith.constant 0 : i32
    return %c0_i32, %c0_i32_0 : i32, i32
  }
  func.func @transform_2(%arg0: i32, %arg1: i32) -> (i32, i32) {
    %c0_i32 = arith.constant 0 : i32
    %c0_i32_0 = arith.constant 0 : i32
    %c0_i32_1 = arith.constant 0 : i32
    return %c0_i32, %c0_i32_0 : i32, i32
  }
  func.func @transform_3(%arg0: i32, %arg1: i32) -> (i32, i32) {
    %c0_i32 = arith.constant 0 : i32
    %c0_i32_0 = arith.constant 0 : i32
    %c0_i32_1 = arith.constant 0 : i32
    return %c0_i32, %c0_i32_0 : i32, i32
  }
  func.func @transform_4(%arg0: i32, %arg1: i32) -> (i32, i32) {
    %c0_i32 = arith.constant 0 : i32
    %c0_i32_0 = arith.constant 0 : i32
    %c0_i32_1 = arith.constant 0 : i32
    return %c0_i32, %c0_i32_0 : i32, i32
  }
  func.func @transform_5(%arg0: i32, %arg1: i32) -> (i32, i32, i32, i32) {
    %c0_i32 = arith.constant 0 : i32
    %c0_i32_0 = arith.constant 0 : i32
    %c0_i32_1 = arith.constant 0 : i32
    return %arg0, %arg1, %c0_i32, %c0_i32_0 : i32, i32, i32, i32
  }
}

</mosaic_0001>

<llo_original>
// kernel: darknet_block_pallas.1
$region0: #{darknet_block_pallas.1}
  #allocation0 [shape = 'u32[]', space=smem, size = 0x4, offset = 0x4, fixed_abs, tag = 'smem constant byte address 0x4 - core index']
  #allocation1 [shape = 'u32[72,128]{1,0:T(1,128)}', space=vmem, size = 0x9000, scoped, tag = 'internal scratch']
  #allocation2 [shape = 'bf16[10,18,128]{2,1,0:T(8,128)(2,1)}', space=vmem, size = 0xf000, scoped, tag = 'scratch operand']
  %s0 = inlined_call_operand.vmem [shape: f32[2,18,16,256], index: 0, kind: input, shape index: {}]
  %s1 = inlined_call_operand.vmem [shape: bf16[256,128], index: 1, kind: input, shape index: {}]
  %s2 = inlined_call_operand.vmem [shape: f32[1,128], index: 2, kind: input, shape index: {}]
  %s3 = inlined_call_operand.vmem [shape: bf16[1152,256], index: 3, kind: input, shape index: {}]
  %s4 = inlined_call_operand.vmem [shape: f32[1,256], index: 4, kind: input, shape index: {}]
  %s5 = inlined_call_operand.hbm [shape: f32[2,16,16,256], index: 5, kind: output, shape index: {}]
  %s6 = sld [smem:[#allocation0]]
  $region61: #{darknet_block_pallas.1} parent=0
    _
  %s8 = ssub.s32 1, %s6
  %s9 = scalar_select 0, %s8, %s6
  $region1: #{darknet_block_pallas.1} parent=0
    #allocation3 [shape = 'u8[262144]{0}', space=vmem, size = 0x40000, scoped, tag = 'output window, operand 0']
    #allocation4 [shape = 's32[2]{0}', space=sflag, size = 0x8, scoped, tag = 'scoped memory for darknet_block_pallas.1']
    %10 = vsyncpa [#allocation4], 0
    %s11 = scalar_lea.sflag [#allocation4], 1
    %12 = vsyncpa %s11, 0
    loop: start=0, step=1, limit=6
    $region2: #{darknet_block_pallas.1} parent=1 // loop_pre_header
      _
    $region3: #{darknet_block_pallas.1} parent=1 // loop_header
      %s14 = sphi 0, %s18
      %p15 = scmp.ge.s32.totalorder %s14, 6
      %s21 = sphi 0, %s33
      %s22 = sphi 0, %s29
      %s23 = sphi 0, %s21
      %s24 = sphi 0, %s22
      %s25 = sphi 0, %s23
      %s26 = sphi 0, %s24
      %s36 = sphi 0, %s38
      %s39 = sphi 0, %s36
      %s40 = sphi 0, %s39
      %s56 = sphi 0, %s40
      %s60 = sphi 0, %s60
      %s62 = sphi 0, %s60
      %s63 = sphi 0, %s62
      %s77 = sphi 0, %s63
      %s81 = sphi 0, %s81
      %s83 = sphi 0, %s81
      %s84 = sphi 0, %s83
      %s98 = sphi 0, %s84
      %s102 = sphi 0, %s102
      %s104 = sphi 0, %s102
      %s105 = sphi 0, %s104
      %s119 = sphi 0, %s105
      %s123 = sphi 0, %s123
      %s125 = sphi 0, %s123
      %s126 = sphi 0, %s125
      %s140 = sphi 0, %s126
      %s148 = sphi 0, %s150
      %s151 = sphi 0, %s148
      %s152 = sphi 0, %s151
      %s168 = sphi 0, %s152
    $region4: #{darknet_block_pallas.1} parent=1 // loop_header_branch
      %17 = sbr.rel (%p15) target = $region8
    $region5: #{darknet_block_pallas.1} parent=1 // loop_body
      %s19 = ssub.s32 %s14, 1
      %s20 = ssub.s32 %s14, 2
      %s27 = sadd.s32 1, %s22
      %p28 = scmp.ge.s32.totalorder %s27, 2
      %s29 = scalar_select %p28, 0, %s27
      %s30 = sadd.s32 1, %s21
      %s31 = scalar_select %p28, %s30, %s21
      %p32 = scmp.ge.s32.totalorder %s31, 2
      %s33 = scalar_select %p32, 0, %s31
      %s34 = ssub.s32 %s21, %s33
      %p35 = scmp.eq.s32.totalorder %s34, 0
      %s37 = sadd.s32 %s36, 1
      %s38 = scalar_select %p35, %s36, %s37
      %p41 = pneg %p35
      %p42 = scmp.eq.s32.totalorder %s14, 3
      %p43 = por %p41, %p42
      %p44 = scmp.ne.s32.totalorder %s36, %s39
      %p45 = scmp.eq.s32.totalorder %s14, 0
      %p46 = por %p44, %p45
      %p47 = scmp.ne.s32.totalorder %s36, %s39
      %p48 = scmp.eq.s32.totalorder %s19, 3
      %p49 = por %p47, %p48
      %p50 = scmp.ne.s32.totalorder %s39, %s40
      %p51 = scmp.eq.s32.totalorder %s19, 0
      %p52 = por %p50, %p51
      %p53 = scmp.ne.s32.totalorder %s39, %s40
      %p54 = scmp.eq.s32.totalorder %s20, 3
      %p55 = por %p53, %p54
      %p57 = scmp.ne.s32.totalorder %s40, %s56
      %p58 = scmp.eq.s32.totalorder %s20, 0
      %p59 = por %p57, %p58
      %s61 = sadd.s32 %s60, 1
      %p64 = scmp.eq.s32.totalorder %s14, 3
      %p65 = scmp.ne.s32.totalorder %s60, %s62
      %p66 = scmp.eq.s32.totalorder %s14, 0
      %p67 = por %p65, %p66
      %p68 = scmp.ne.s32.totalorder %s60, %s62
      %p69 = scmp.eq.s32.totalorder %s19, 3
      %p70 = por %p68, %p69
      %p71 = scmp.ne.s32.totalorder %s62, %s63
      %p72 = scmp.eq.s32.totalorder %s19, 0
      %p73 = por %p71, %p72
      %p74 = scmp.ne.s32.totalorder %s62, %s63
      %p75 = scmp.eq.s32.totalorder %s20, 3
      %p76 = por %p74, %p75
      %p78 = scmp.ne.s32.totalorder %s63, %s77
      %p79 = scmp.eq.s32.totalorder %s20, 0
      %p80 = por %p78, %p79
      %s82 = sadd.s32 %s81, 1
      %p85 = scmp.eq.s32.totalorder %s14, 3
      %p86 = scmp.ne.s32.totalorder %s81, %s83
      %p87 = scmp.eq.s32.totalorder %s14, 0
      %p88 = por %p86, %p87
      %p89 = scmp.ne.s32.totalorder %s81, %s83
      %p90 = scmp.eq.s32.totalorder %s19, 3
      %p91 = por %p89, %p90
      %p92 = scmp.ne.s32.totalorder %s83, %s84
      %p93 = scmp.eq.s32.totalorder %s19, 0
      %p94 = por %p92, %p93
      %p95 = scmp.ne.s32.totalorder %s83, %s84
      %p96 = scmp.eq.s32.totalorder %s20, 3
      %p97 = por %p95, %p96
      %p99 = scmp.ne.s32.totalorder %s84, %s98
      %p100 = scmp.eq.s32.totalorder %s20, 0
      %p101 = por %p99, %p100
      %s103 = sadd.s32 %s102, 1
      %p106 = scmp.eq.s32.totalorder %s14, 3
      %p107 = scmp.ne.s32.totalorder %s102, %s104
      %p108 = scmp.eq.s32.totalorder %s14, 0
      %p109 = por %p107, %p108
      %p110 = scmp.ne.s32.totalorder %s102, %s104
      %p111 = scmp.eq.s32.totalorder %s19, 3
      %p112 = por %p110, %p111
      %p113 = scmp.ne.s32.totalorder %s104, %s105
      %p114 = scmp.eq.s32.totalorder %s19, 0
      %p115 = por %p113, %p114
      %p116 = scmp.ne.s32.totalorder %s104, %s105
      %p117 = scmp.eq.s32.totalorder %s20, 3
      %p118 = por %p116, %p117
      %p120 = scmp.ne.s32.totalorder %s105, %s119
      %p121 = scmp.eq.s32.totalorder %s20, 0
      %p122 = por %p120, %p121
      %s124 = sadd.s32 %s123, 1
      %p127 = scmp.eq.s32.totalorder %s14, 3
      %p128 = scmp.ne.s32.totalorder %s123, %s125
      %p129 = scmp.eq.s32.totalorder %s14, 0
      %p130 = por %p128, %p129
      %p131 = scmp.ne.s32.totalorder %s123, %s125
      %p132 = scmp.eq.s32.totalorder %s19, 3
      %p133 = por %p131, %p132
      %p134 = scmp.ne.s32.totalorder %s125, %s126
      %p135 = scmp.eq.s32.totalorder %s19, 0
      %p136 = por %p134, %p135
      %p137 = scmp.ne.s32.totalorder %s125, %s126
      %p138 = scmp.eq.s32.totalorder %s20, 3
      %p139 = por %p137, %p138
      %p141 = scmp.ne.s32.totalorder %s126, %s140
      %p142 = scmp.eq.s32.totalorder %s20, 0
      %p143 = por %p141, %p142
      %s144 = ssub.s32 %s21, %s33
      %s145 = ssub.s32 %s22, %s29
      %s146 = sor.u32 %s144, %s145
      %p147 = scmp.eq.s32.totalorder %s146, 0
      %s149 = sadd.s32 %s148, 1
      %s150 = scalar_select %p147, %s148, %s149
      %p153 = pneg %p147
      %p154 = scmp.eq.s32.totalorder %s14, 3
      %p155 = por %p153, %p154
      %p156 = scmp.ne.s32.totalorder %s148, %s151
      %p157 = scmp.eq.s32.totalorder %s14, 0
      %p158 = por %p156, %p157
      %p159 = scmp.ne.s32.totalorder %s148, %s151
      %p160 = scmp.eq.s32.totalorder %s19, 3
      %p161 = por %p159, %p160
      %p162 = scmp.ne.s32.totalorder %s151, %s152
      %p163 = scmp.eq.s32.totalorder %s19, 0
      %p164 = por %p162, %p163
      %p165 = scmp.ne.s32.totalorder %s151, %s152
      %p166 = scmp.eq.s32.totalorder %s20, 3
      %p167 = por %p165, %p166
      %p169 = scmp.ne.s32.totalorder %s152, %s168
      %p170 = scmp.eq.s32.totalorder %s20, 0
      %p171 = por %p169, %p170
      %p172 = scmp.le.s32.totalorder 1, %s14
      %p173 = scmp.lt.s32.totalorder %s14, 5
      %p174 = pnand %p172, %p173
      %p175 = pneg %p174
      // Predicated region
      $region9: #{darknet_block_pallas.1} parent=5 // pred_check
        _
      $region10: #{darknet_block_pallas.1} parent=5 // pred_check_branch
        %177 = sbr.rel (%p174) target = $region12
      $region11: #{darknet_block_pallas.1} parent=5 // pred_region
        %s178 = ssub.s32 %s14, 1
        // Predicated region
        $region13: #{darknet_block_pallas.1} parent=11 // pred_check
          %p179 = pneg %p73
        $region14: #{darknet_block_pallas.1} parent=11 // pred_check_branch
          %181 = sbr.rel (%p179) target = $region16
        $region15: #{darknet_block_pallas.1} parent=11 // pred_region
          _
        $region16: #{darknet_block_pallas.1} parent=11 // pred_fallthru
          _
        // Predicated region
        $region17: #{darknet_block_pallas.1} parent=11 // pred_check
          %p182 = pneg %p94
        $region18: #{darknet_block_pallas.1} parent=11 // pred_check_branch
          %184 = sbr.rel (%p182) target = $region20
        $region19: #{darknet_block_pallas.1} parent=11 // pred_region
          _
        $region20: #{darknet_block_pallas.1} parent=11 // pred_fallthru
          _
        // Predicated region
        $region21: #{darknet_block_pallas.1} parent=11 // pred_check
          %p185 = pneg %p115
        $region22: #{darknet_block_pallas.1} parent=11 // pred_check_branch
          %187 = sbr.rel (%p185) target = $region24
        $region23: #{darknet_block_pallas.1} parent=11 // pred_region
          _
        $region24: #{darknet_block_pallas.1} parent=11 // pred_fallthru
          _
        // Predicated region
        $region25: #{darknet_block_pallas.1} parent=11 // pred_check
          %p188 = pneg %p136
        $region26: #{darknet_block_pallas.1} parent=11 // pred_check_branch
          %190 = sbr.rel (%p188) target = $region28
        $region27: #{darknet_block_pallas.1} parent=11 // pred_region
          _
        $region28: #{darknet_block_pallas.1} parent=11 // pred_fallthru
          _
      $region12: #{darknet_block_pallas.1} parent=5 // pred_fallthru
        _
      %p191 = scmp.lt.s32.totalorder %s14, 4
      // Predicated region
      $region29: #{darknet_block_pallas.1} parent=5 // pred_check
        %p192 = pneg %p191
      $region30: #{darknet_block_pallas.1} parent=5 // pred_check_branch
        %194 = sbr.rel (%p192) target = $region32
      $region31: #{darknet_block_pallas.1} parent=5 // pred_region
        // Predicated region
        $region33: #{darknet_block_pallas.1} parent=31 // pred_check
          %p195 = pneg %p46
        $region34: #{darknet_block_pallas.1} parent=31 // pred_check_branch
          %197 = sbr.rel (%p195) target = $region36
        $region35: #{darknet_block_pallas.1} parent=31 // pred_region
          %p198 = scmp.lt.s32.totalorder %s21, 1
          %s199 = scalar_select %p198, %s21, 1
          %s200 = smul.addr %s199, 72
          %s201 = smul.addr %s200, 8
          %s202 = scalar_lea.vmem %s0, %s201
        $region36: #{darknet_block_pallas.1} parent=31 // pred_fallthru
          _
      $region32: #{darknet_block_pallas.1} parent=5 // pred_fallthru
        _
      %p203 = scmp.le.s32.totalorder 1, %s14
      %p204 = scmp.lt.s32.totalorder %s14, 5
      %p205 = pnand %p203, %p204
      %p206 = pneg %p205
      // Predicated region
      $region37: #{darknet_block_pallas.1} parent=5 // pred_check
        _
      $region38: #{darknet_block_pallas.1} parent=5 // pred_check_branch
        %208 = sbr.rel (%p205) target = $region40
      $region39: #{darknet_block_pallas.1} parent=5 // pred_region
        %s209 = ssub.s32 %s14, 1
        %p210 = scmp.lt.s32.totalorder %s23, 1
        %s211 = scalar_select %p210, %s23, 1
        %s212 = smul.addr %s211, 72
        %s213 = smul.addr %s212, 8
        %s214 = scalar_lea.vmem %s0, %s213
        %p215 = pneg %p52
        %p216 = pneg %p49
        %p217 = pneg %p73
        %p218 = pneg %p70
        %p219 = pneg %p94
        %p220 = pneg %p91
        %p221 = pneg %p115
        %p222 = pneg %p112
        %p223 = pneg %p136
        %p224 = pneg %p133
        %p225 = pneg %p164
        %p226 = pneg %p161
        %s227 = sand.u32 %s151, 1
        %s228 = scalar_lea.sflag [#allocation4], %s227
        %s229 = sand.u32 %s151, 1
        %s230 = smul.addr %s229, 256
        %s231 = scalar_lea.vmem [#allocation3], %s230
        %p232 = scmp.lt.s32.totalorder %s23, 1
        %s233 = scalar_select %p232, %s23, 1
        %s234 = smul.addr %s233, 72
        %s235 = smul.addr %s234, 8
        %s236 = scalar_lea.vmem %s0, %s235
        %s237 = smul.u32 8, %s24
        %s239 = smul.u32 %s24, 8
        %s240 = smul.u32 %s239, 4
        %s241 = smul.addr %s240, 8
        %s242 = scalar_lea.vmem %s236, %s241
        %v243 = vld [vmem:[%s242] sm:$0xff]
        %v244 = vld [vmem:[%s242 + $0x8] sm:$0xff]
        %v245 = vld [vmem:[%s242 + $0x10] sm:$0xff]
        %v246 = vld [vmem:[%s242 + $0x18] sm:$0xff]
        %v247 = vld [vmem:[%s242 + $0x20] sm:$0xff]
        %v248 = vld [vmem:[%s242 + $0x28] sm:$0xff]
        %v249 = vld [vmem:[%s242 + $0x30] sm:$0xff]
        %v250 = vld [vmem:[%s242 + $0x38] sm:$0xff]
        %v251 = vld [vmem:[%s242 + $0x40] sm:$0xff]
        %v252 = vld [vmem:[%s242 + $0x48] sm:$0xff]
        %v253 = vld [vmem:[%s242 + $0x50] sm:$0xff]
        %v254 = vld [vmem:[%s242 + $0x58] sm:$0xff]
        %v255 = vld [vmem:[%s242 + $0x60] sm:$0xff]
        %v256 = vld [vmem:[%s242 + $0x68] sm:$0xff]
        %v257 = vld [vmem:[%s242 + $0x70] sm:$0xff]
        %v258 = vld [vmem:[%s242 + $0x78] sm:$0xff]
        %v259 = vld [vmem:[%s242 + $0x80] sm:$0xff]
        %v260 = vld [vmem:[%s242 + $0x88] sm:$0xff]
        %v261 = vld [vmem:[%s242 + $0x90] sm:$0xff]
        %v262 = vld [vmem:[%s242 + $0x98] sm:$0xff]
        %v263 = vld [vmem:[%s242 + $0xa0] sm:$0xff]
        %v264 = vld [vmem:[%s242 + $0xa8] sm:$0xff]
        %v265 = vld [vmem:[%s242 + $0xb0] sm:$0xff]
        %v266 = vld [vmem:[%s242 + $0xb8] sm:$0xff]
        %v267 = vld [vmem:[%s242 + $0xc0] sm:$0xff]
        %v268 = vld [vmem:[%s242 + $0xc8] sm:$0xff]
        %v269 = vld [vmem:[%s242 + $0xd0] sm:$0xff]
        %v270 = vld [vmem:[%s242 + $0xd8] sm:$0xff]
        %v271 = vld [vmem:[%s242 + $0xe0] sm:$0xff]
        %v272 = vld [vmem:[%s242 + $0xe8] sm:$0xff]
        %v273 = vld [vmem:[%s242 + $0xf0] sm:$0xff]
        %v274 = vld [vmem:[%s242 + $0xf8] sm:$0xff]
        %v275 = vld [vmem:[%s242 + $0x100] sm:$0xff]
        %v276 = vld [vmem:[%s242 + $0x108] sm:$0xff]
        %v277 = vld [vmem:[%s242 + $0x110] sm:$0xff]
        %v278 = vld [vmem:[%s242 + $0x118] sm:$0xff]
        %v279 = vld [vmem:[%s242 + $0x120] sm:$0xff]
        %v280 = vld [vmem:[%s242 + $0x128] sm:$0xff]
        %v281 = vld [vmem:[%s242 + $0x130] sm:$0xff]
        %v282 = vld [vmem:[%s242 + $0x138] sm:$0xff]
        %v283 = vpack.c.bf16 %v245, %v243
        %v284 = vpack.c.bf16 %v246, %v244
        %v285 = vpack.c.bf16 %v249, %v247
        %v286 = vpack.c.bf16 %v250, %v248
        %v287 = vpack.c.bf16 %v253, %v251
        %v288 = vpack.c.bf16 %v254, %v252
        %v289 = vpack.c.bf16 %v257, %v255
        %v290 = vpack.c.bf16 %v258, %v256
        %v291 = vpack.c.bf16 %v261, %v259
        %v292 = vpack.c.bf16 %v262, %v260
        %v293 = vpack.c.bf16 %v265, %v263
        %v294 = vpack.c.bf16 %v266, %v264
        %v295 = vpack.c.bf16 %v269, %v267
        %v296 = vpack.c.bf16 %v270, %v268
        %v297 = vpack.c.bf16 %v273, %v271
        %v298 = vpack.c.bf16 %v274, %v272
        %v299 = vpack.c.bf16 %v277, %v275
        %v300 = vpack.c.bf16 %v278, %v276
        %v301 = vpack.c.bf16 %v281, %v279
        %v302 = vpack.c.bf16 %v282, %v280
        %v303 = vld [vmem:[%s1] sm:$0xf]
        %v304 = vld [vmem:[%s1 + $0x4] sm:$0xf]
        %v305 = vld [vmem:[%s1 + $0x8] sm:$0xf]
        %v306 = vld [vmem:[%s1 + $0xc] sm:$0xf]
        %v307 = vld [vmem:[%s1 + $0x10] sm:$0xf]
        %v308 = vld [vmem:[%s1 + $0x14] sm:$0xf]
        %v309 = vld [vmem:[%s1 + $0x18] sm:$0xf]
        %v310 = vld [vmem:[%s1 + $0x1c] sm:$0xf]
        %v311 = vld [vmem:[%s1 + $0x20] sm:$0xf]
        %v312 = vld [vmem:[%s1 + $0x24] sm:$0xf]
        %v313 = vld [vmem:[%s1 + $0x28] sm:$0xf]
        %v314 = vld [vmem:[%s1 + $0x2c] sm:$0xf]
        %v315 = vld [vmem:[%s1 + $0x30] sm:$0xf]
        %v316 = vld [vmem:[%s1 + $0x34] sm:$0xf]
        %v317 = vld [vmem:[%s1 + $0x38] sm:$0xf]
        %v318 = vld [vmem:[%s1 + $0x3c] sm:$0xf]
        %v319 = vld [vmem:[%s1 + $0x40] sm:$0xf]
        %v320 = vld [vmem:[%s1 + $0x44] sm:$0xf]
        %v321 = vld [vmem:[%s1 + $0x48] sm:$0xf]
        %v322 = vld [vmem:[%s1 + $0x4c] sm:$0xf]
        %v323 = vld [vmem:[%s1 + $0x50] sm:$0xf]
        %v324 = vld [vmem:[%s1 + $0x54] sm:$0xf]
        %v325 = vld [vmem:[%s1 + $0x58] sm:$0xf]
        %v326 = vld [vmem:[%s1 + $0x5c] sm:$0xf]
        %v327 = vld [vmem:[%s1 + $0x60] sm:$0xf]
        %v328 = vld [vmem:[%s1 + $0x64] sm:$0xf]
        %v329 = vld [vmem:[%s1 + $0x68] sm:$0xf]
        %v330 = vld [vmem:[%s1 + $0x6c] sm:$0xf]
        %v331 = vld [vmem:[%s1 + $0x70] sm:$0xf]
        %v332 = vld [vmem:[%s1 + $0x74] sm:$0xf]
        %v333 = vld [vmem:[%s1 + $0x78] sm:$0xf]
        %v334 = vld [vmem:[%s1 + $0x7c] sm:$0xf]
        %v335 = vld [vmem:[%s2] sm:$0x1]
        %v337 = vperm.slane %v335, 0
        %v371 = vunpack.c.l.b16 %v303
        %v372 = vunpack.c.l.b16 %v304
        %v373 = vunpack.c.l.b16 %v305
        %v374 = vunpack.c.l.b16 %v306
        %v375 = vunpack.c.l.b16 %v307
        %v376 = vunpack.c.l.b16 %v308
        %v377 = vunpack.c.l.b16 %v309
        %v378 = vunpack.c.l.b16 %v310
        %v379 = vunpack.c.l.b16 %v311
        %v380 = vunpack.c.l.b16 %v312
        %v381 = vunpack.c.l.b16 %v313
        %v382 = vunpack.c.l.b16 %v314
        %v383 = vunpack.c.l.b16 %v315
        %v384 = vunpack.c.l.b16 %v316
        %v385 = vunpack.c.l.b16 %v317
        %v386 = vunpack.c.l.b16 %v318
        %v387 = vunpack.c.l.b16 %v319
        %v388 = vunpack.c.l.b16 %v320
        %v389 = vunpack.c.l.b16 %v321
        %v390 = vunpack.c.l.b16 %v322
        %v391 = vunpack.c.l.b16 %v323
        %v392 = vunpack.c.l.b16 %v324
        %v393 = vunpack.c.l.b16 %v325
        %v394 = vunpack.c.l.b16 %v326
        %v395 = vunpack.c.l.b16 %v327
        %v396 = vunpack.c.l.b16 %v328
        %v397 = vunpack.c.l.b16 %v329
        %v398 = vunpack.c.l.b16 %v330
        %v399 = vunpack.c.l.b16 %v331
        %v400 = vunpack.c.l.b16 %v332
        %v401 = vunpack.c.l.b16 %v333
        %v402 = vunpack.c.l.b16 %v334
        %v403 = vpack.c.b16 %v372, %v371
        %v404 = vpack.c.b16 %v374, %v373
        %v405 = vpack.c.b16 %v376, %v375
        %v406 = vpack.c.b16 %v378, %v377
        %v407 = vpack.c.b16 %v380, %v379
        %v408 = vpack.c.b16 %v382, %v381
        %v409 = vpack.c.b16 %v384, %v383
        %v410 = vpack.c.b16 %v386, %v385
        %v411 = vpack.c.b16 %v388, %v387
        %v412 = vpack.c.b16 %v390, %v389
        %v413 = vpack.c.b16 %v392, %v391
        %v414 = vpack.c.b16 %v394, %v393
        %v415 = vpack.c.b16 %v396, %v395
        %v416 = vpack.c.b16 %v398, %v397
        %v417 = vpack.c.b16 %v400, %v399
        %v418 = vpack.c.b16 %v402, %v401
        %435 = vmatpush.bf16.msra.mxu0 %v410
        %436 = vmatpush.bf16.msra.mxu0 %v409
        %437 = vmatpush.bf16.msra.mxu0 %v408
        %438 = vmatpush.bf16.msra.mxu0 %v407
        %439 = vmatpush.bf16.msra.mxu0 %v406
        %440 = vmatpush.bf16.msra.mxu0 %v405
        %441 = vmatpush.bf16.msra.mxu0 %v404
        %442 = vmatpush.bf16.msra.mxu0 %v403
        %443 = vmatmul.bf16.gmra.mxu0 %v283
        %v444 = vpop.f32.mrf.mxu0
        %v445 = vadd.f32 %v337, %v444
        %v446 = vpop.f32.mrf.mxu0
        %v447 = vadd.f32 %v337, %v446
        %448 = vmatmul.bf16.gmra.mxu0 %v285
        %v449 = vpop.f32.mrf.mxu0
        %v450 = vadd.f32 %v337, %v449
        %v451 = vpop.f32.mrf.mxu0
        %v452 = vadd.f32 %v337, %v451
        %453 = vmatmul.bf16.gmra.mxu0 %v287
        %v454 = vpop.f32.mrf.mxu0
        %v455 = vadd.f32 %v337, %v454
        %v456 = vpop.f32.mrf.mxu0
        %v457 = vadd.f32 %v337, %v456
        %458 = vmatmul.bf16.gmra.mxu0 %v289
        %v459 = vpop.f32.mrf.mxu0
        %v460 = vadd.f32 %v337, %v459
        %v461 = vpop.f32.mrf.mxu0
        %v462 = vadd.f32 %v337, %v461
        %463 = vmatmul.bf16.gmra.mxu0 %v291
        %v464 = vpop.f32.mrf.mxu0
        %v465 = vadd.f32 %v337, %v464
        %v466 = vpop.f32.mrf.mxu0
        %v467 = vadd.f32 %v337, %v466
        %468 = vmatmul.bf16.gmra.mxu0 %v293
        %v469 = vpop.f32.mrf.mxu0
        %v470 = vadd.f32 %v337, %v469
        %v471 = vpop.f32.mrf.mxu0
        %v472 = vadd.f32 %v337, %v471
        %473 = vmatmul.bf16.gmra.mxu0 %v295
        %v474 = vpop.f32.mrf.mxu0
        %v475 = vadd.f32 %v337, %v474
        %v476 = vpop.f32.mrf.mxu0
        %v477 = vadd.f32 %v337, %v476
        %478 = vmatmul.bf16.gmra.mxu0 %v297
        %v479 = vpop.f32.mrf.mxu0
        %v480 = vadd.f32 %v337, %v479
        %v481 = vpop.f32.mrf.mxu0
        %v482 = vadd.f32 %v337, %v481
        %483 = vmatmul.bf16.gmra.mxu0 %v299
        %v484 = vpop.f32.mrf.mxu0
        %v485 = vadd.f32 %v337, %v484
        %v486 = vpop.f32.mrf.mxu0
        %v487 = vadd.f32 %v337, %v486
        %488 = vmatmul.bf16.gmra.mxu0 %v301
        %v489 = vpop.f32.mrf.mxu0
        %v490 = vadd.f32 %v337, %v489
        %v491 = vpop.f32.mrf.mxu0
        %v492 = vadd.f32 %v337, %v491
        %493 = vdwg.mxu0
        %494 = vmatpush.bf16.msra.mxu0 %v418
        %495 = vmatpush.bf16.msra.mxu0 %v417
        %496 = vmatpush.bf16.msra.mxu0 %v416
        %497 = vmatpush.bf16.msra.mxu0 %v415
        %498 = vmatpush.bf16.msra.mxu0 %v414
        %499 = vmatpush.bf16.msra.mxu0 %v413
        %500 = vmatpush.bf16.msra.mxu0 %v412
        %501 = vmatpush.bf16.msra.mxu0 %v411
        %502 = vmatmul.bf16.gmra.mxu0 %v284
        %v503 = vpop.f32.mrf.mxu0
        %v504 = vadd.f32 %v445, %v503
        %v505 = vpop.f32.mrf.mxu0
        %v506 = vadd.f32 %v447, %v505
        %507 = vmatmul.bf16.gmra.mxu0 %v286
        %v508 = vpop.f32.mrf.mxu0
        %v509 = vadd.f32 %v450, %v508
        %v510 = vpop.f32.mrf.mxu0
        %v511 = vadd.f32 %v452, %v510
        %512 = vmatmul.bf16.gmra.mxu0 %v288
        %v513 = vpop.f32.mrf.mxu0
        %v514 = vadd.f32 %v455, %v513
        %v515 = vpop.f32.mrf.mxu0
        %v516 = vadd.f32 %v457, %v515
        %517 = vmatmul.bf16.gmra.mxu0 %v290
        %v518 = vpop.f32.mrf.mxu0
        %v519 = vadd.f32 %v460, %v518
        %v520 = vpop.f32.mrf.mxu0
        %v521 = vadd.f32 %v462, %v520
        %522 = vmatmul.bf16.gmra.mxu0 %v292
        %v523 = vpop.f32.mrf.mxu0
        %v524 = vadd.f32 %v465, %v523
        %v525 = vpop.f32.mrf.mxu0
        %v526 = vadd.f32 %v467, %v525
        %527 = vmatmul.bf16.gmra.mxu0 %v294
        %v528 = vpop.f32.mrf.mxu0
        %v529 = vadd.f32 %v470, %v528
        %v530 = vpop.f32.mrf.mxu0
        %v531 = vadd.f32 %v472, %v530
        %532 = vmatmul.bf16.gmra.mxu0 %v296
        %v533 = vpop.f32.mrf.mxu0
        %v534 = vadd.f32 %v475, %v533
        %v535 = vpop.f32.mrf.mxu0
        %v536 = vadd.f32 %v477, %v535
        %537 = vmatmul.bf16.gmra.mxu0 %v298
        %v538 = vpop.f32.mrf.mxu0
        %v539 = vadd.f32 %v480, %v538
        %v540 = vpop.f32.mrf.mxu0
        %v541 = vadd.f32 %v482, %v540
        %542 = vmatmul.bf16.gmra.mxu0 %v300
        %v543 = vpop.f32.mrf.mxu0
        %v544 = vadd.f32 %v485, %v543
        %v545 = vpop.f32.mrf.mxu0
        %v546 = vadd.f32 %v487, %v545
        %547 = vmatmul.bf16.gmra.mxu0 %v302
        %v548 = vpop.f32.mrf.mxu0
        %v549 = vadd.f32 %v490, %v548
        %v550 = vpop.f32.mrf.mxu0
        %v551 = vadd.f32 %v492, %v550
        %552 = vdwg.mxu0
        %vm553 = vcmp.gt.f32.partialorder %v504, 0.0
        %vm554 = vcmp.gt.f32.partialorder %v506, 0.0
        %vm555 = vcmp.gt.f32.partialorder %v509, 0.0
        %vm556 = vcmp.gt.f32.partialorder %v511, 0.0
        %vm557 = vcmp.gt.f32.partialorder %v514, 0.0
        %vm558 = vcmp.gt.f32.partialorder %v516, 0.0
        %vm559 = vcmp.gt.f32.partialorder %v519, 0.0
        %vm560 = vcmp.gt.f32.partialorder %v521, 0.0
        %vm561 = vcmp.gt.f32.partialorder %v524, 0.0
        %vm562 = vcmp.gt.f32.partialorder %v526, 0.0
        %vm563 = vcmp.gt.f32.partialorder %v529, 0.0
        %vm564 = vcmp.gt.f32.partialorder %v531, 0.0
        %vm565 = vcmp.gt.f32.partialorder %v534, 0.0
        %vm566 = vcmp.gt.f32.partialorder %v536, 0.0
        %vm567 = vcmp.gt.f32.partialorder %v539, 0.0
        %vm568 = vcmp.gt.f32.partialorder %v541, 0.0
        %vm569 = vcmp.gt.f32.partialorder %v544, 0.0
        %vm570 = vcmp.gt.f32.partialorder %v546, 0.0
        %vm571 = vcmp.gt.f32.partialorder %v549, 0.0
        %vm572 = vcmp.gt.f32.partialorder %v551, 0.0
        %v573 = vmul.f32 %v504, 0.1
        %v574 = vmul.f32 %v506, 0.1
        %v575 = vmul.f32 %v509, 0.1
        %v576 = vmul.f32 %v511, 0.1
        %v577 = vmul.f32 %v514, 0.1
        %v578 = vmul.f32 %v516, 0.1
        %v579 = vmul.f32 %v519, 0.1
        %v580 = vmul.f32 %v521, 0.1
        %v581 = vmul.f32 %v524, 0.1
        %v582 = vmul.f32 %v526, 0.1
        %v583 = vmul.f32 %v529, 0.1
        %v584 = vmul.f32 %v531, 0.1
        %v585 = vmul.f32 %v534, 0.1
        %v586 = vmul.f32 %v536, 0.1
        %v587 = vmul.f32 %v539, 0.1
        %v588 = vmul.f32 %v541, 0.1
        %v589 = vmul.f32 %v544, 0.1
        %v590 = vmul.f32 %v546, 0.1
        %v591 = vmul.f32 %v549, 0.1
        %v592 = vmul.f32 %v551, 0.1
        %v593 = vsel %vm553, %v504, %v573
        %v594 = vsel %vm554, %v506, %v574
        %v595 = vsel %vm555, %v509, %v575
        %v596 = vsel %vm556, %v511, %v576
        %v597 = vsel %vm557, %v514, %v577
        %v598 = vsel %vm558, %v516, %v578
        %v599 = vsel %vm559, %v519, %v579
        %v600 = vsel %vm560, %v521, %v580
        %v601 = vsel %vm561, %v524, %v581
        %v602 = vsel %vm562, %v526, %v582
        %v603 = vsel %vm563, %v529, %v583
        %v604 = vsel %vm564, %v531, %v584
        %v605 = vsel %vm565, %v534, %v585
        %v606 = vsel %vm566, %v536, %v586
        %v607 = vsel %vm567, %v539, %v587
        %v608 = vsel %vm568, %v541, %v588
        %v609 = vsel %vm569, %v544, %v589
        %v610 = vsel %vm570, %v546, %v590
        %v611 = vsel %vm571, %v549, %v591
        %v612 = vsel %vm572, %v551, %v592
        %v613 = vpack.c.bf16 %v593, %v593
        %v614 = vpack.c.bf16 %v594, %v594
        %v615 = vpack.c.bf16 %v595, %v595
        %v616 = vpack.c.bf16 %v596, %v596
        %v617 = vpack.c.bf16 %v597, %v597
        %v618 = vpack.c.bf16 %v598, %v598
        %v619 = vpack.c.bf16 %v599, %v599
        %v620 = vpack.c.bf16 %v600, %v600
        %v621 = vpack.c.bf16 %v601, %v601
        %v622 = vpack.c.bf16 %v602, %v602
        %v623 = vpack.c.bf16 %v603, %v603
        %v624 = vpack.c.bf16 %v604, %v604
        %v625 = vpack.c.bf16 %v605, %v605
        %v626 = vpack.c.bf16 %v606, %v606
        %v627 = vpack.c.bf16 %v607, %v607
        %v628 = vpack.c.bf16 %v608, %v608
        %v629 = vpack.c.bf16 %v609, %v609
        %v630 = vpack.c.bf16 %v610, %v610
        %v631 = vpack.c.bf16 %v611, %v611
        %v632 = vpack.c.bf16 %v612, %v612
        %vm633 = vsmask.f32 256
        %vm634 = vsmask.f32 4368
        %vm635 = vmor %vm633, %vm634
        %v637 = vshrl.u32 %v613, 16
        %v639 = vrot.slane %v637, 7
        %v640 = vshll.u32 %v613, 16
        %v642 = vor.u32 %v639, %v640
        %v643 = vrot.slane %v639, 4
        %v645 = vshrl.u32 %v614, 16
        %v647 = vrot.slane %v645, 7
        %v648 = vshll.u32 %v614, 16
        %v650 = vor.u32 %v647, %v648
        %v651 = vsel %vm635, %v643, %v650
        %v652 = vrot.slane %v647, 4
        %v654 = vshrl.u32 %v615, 16
        %v656 = vrot.slane %v654, 7
        %v657 = vshll.u32 %v615, 16
        %v659 = vor.u32 %v656, %v657
        %v660 = vrot.slane %v656, 4
        %v662 = vshrl.u32 %v616, 16
        %v664 = vrot.slane %v662, 7
        %v665 = vshll.u32 %v616, 16
        %v667 = vor.u32 %v664, %v665
        %v668 = vsel %vm635, %v660, %v667
        %v669 = vrot.slane %v664, 4
        %v671 = vshrl.u32 %v617, 16
        %v673 = vrot.slane %v671, 7
        %v674 = vshll.u32 %v617, 16
        %v676 = vor.u32 %v673, %v674
        %v677 = vrot.slane %v673, 4
        %v679 = vshrl.u32 %v618, 16
        %v681 = vrot.slane %v679, 7
        %v682 = vshll.u32 %v618, 16
        %v684 = vor.u32 %v681, %v682
        %v685 = vsel %vm635, %v677, %v684
        %v686 = vrot.slane %v681, 4
        %v688 = vshrl.u32 %v619, 16
        %v690 = vrot.slane %v688, 7
        %v691 = vshll.u32 %v619, 16
        %v693 = vor.u32 %v690, %v691
        %v694 = vrot.slane %v690, 4
        %v696 = vshrl.u32 %v620, 16
        %v698 = vrot.slane %v696, 7
        %v699 = vshll.u32 %v620, 16
        %v701 = vor.u32 %v698, %v699
        %v702 = vsel %vm635, %v694, %v701
        %v703 = vrot.slane %v698, 4
        %v705 = vshrl.u32 %v621, 16
        %v707 = vrot.slane %v705, 7
        %v708 = vshll.u32 %v621, 16
        %v710 = vor.u32 %v707, %v708
        %v711 = vrot.slane %v707, 4
        %v713 = vshrl.u32 %v622, 16
        %v715 = vrot.slane %v713, 7
        %v716 = vshll.u32 %v622, 16
        %v718 = vor.u32 %v715, %v716
        %v719 = vsel %vm635, %v711, %v718
        %v720 = vrot.slane %v715, 4
        %v722 = vshrl.u32 %v623, 16
        %v724 = vrot.slane %v722, 7
        %v725 = vshll.u32 %v623, 16
        %v727 = vor.u32 %v724, %v725
        %v728 = vrot.slane %v724, 4
        %v730 = vshrl.u32 %v624, 16
        %v732 = vrot.slane %v730, 7
        %v733 = vshll.u32 %v624, 16
        %v735 = vor.u32 %v732, %v733
        %v736 = vsel %vm635, %v728, %v735
        %v737 = vrot.slane %v732, 4
        %v739 = vshrl.u32 %v625, 16
        %v741 = vrot.slane %v739, 7
        %v742 = vshll.u32 %v625, 16
        %v744 = vor.u32 %v741, %v742
        %v745 = vrot.slane %v741, 4
        %v747 = vshrl.u32 %v626, 16
        %v749 = vrot.slane %v747, 7
        %v750 = vshll.u32 %v626, 16
        %v752 = vor.u32 %v749, %v750
        %v753 = vsel %vm635, %v745, %v752
        %v754 = vrot.slane %v749, 4
        %v756 = vshrl.u32 %v627, 16
        %v758 = vrot.slane %v756, 7
        %v759 = vshll.u32 %v627, 16
        %v761 = vor.u32 %v758, %v759
        %v762 = vrot.slane %v758, 4
        %v764 = vshrl.u32 %v628, 16
        %v766 = vrot.slane %v764, 7
        %v767 = vshll.u32 %v628, 16
        %v769 = vor.u32 %v766, %v767
        %v770 = vsel %vm635, %v762, %v769
        %v771 = vrot.slane %v766, 4
        %v773 = vshrl.u32 %v629, 16
        %v775 = vrot.slane %v773, 7
        %v776 = vshll.u32 %v629, 16
        %v778 = vor.u32 %v775, %v776
        %v779 = vrot.slane %v775, 4
        %v781 = vshrl.u32 %v630, 16
        %v783 = vrot.slane %v781, 7
        %v784 = vshll.u32 %v630, 16
        %v786 = vor.u32 %v783, %v784
        %v787 = vsel %vm635, %v779, %v786
        %v788 = vrot.slane %v783, 4
        %v790 = vshrl.u32 %v631, 16
        %v792 = vrot.slane %v790, 7
        %v793 = vshll.u32 %v631, 16
        %v795 = vor.u32 %v792, %v793
        %v796 = vrot.slane %v792, 4
        %v798 = vshrl.u32 %v632, 16
        %v800 = vrot.slane %v798, 7
        %v801 = vshll.u32 %v632, 16
        %v803 = vor.u32 %v800, %v801
        %v804 = vsel %vm635, %v796, %v803
        %v805 = vrot.slane %v800, 4
        %vm836 = vcmask 1043456
        %vm837 = vsmask.f32 7938
        %vm838 = vmand %vm836, %vm837
        %v839 = vld [vmem:[#allocation2] sm:$0xf]
        %v840 = vsel %vm838, %v642, %v839
        %841 = vst [vmem:[#allocation2] sm:$0xf] %v840
        %842 = vst [vmem:[#allocation2 + $0x4] sm:$0xf] %v651
        %vm843 = vcmask 1040384
        %vm844 = vmand %vm843, %vm633
        %v845 = vld [vmem:[#allocation2 + $0x8] sm:$0x1]
        %v846 = vsel %vm844, %v652, %v845
        %847 = vst [vmem:[#allocation2 + $0x8] sm:$0x1] %v846
        %v848 = vld [vmem:[#allocation2 + $0xc] sm:$0xf]
        %v849 = vsel %vm838, %v659, %v848
        %850 = vst [vmem:[#allocation2 + $0xc] sm:$0xf] %v849
        %851 = vst [vmem:[#allocation2 + $0x10] sm:$0xf] %v668
        %v852 = vld [vmem:[#allocation2 + $0x14] sm:$0x1]
        %v853 = vsel %vm844, %v669, %v852
        %854 = vst [vmem:[#allocation2 + $0x14] sm:$0x1] %v853
        %v855 = vld [vmem:[#allocation2 + $0x18] sm:$0xf]
        %v856 = vsel %vm838, %v676, %v855
        %857 = vst [vmem:[#allocation2 + $0x18] sm:$0xf] %v856
        %858 = vst [vmem:[#allocation2 + $0x1c] sm:$0xf] %v685
        %v859 = vld [vmem:[#allocation2 + $0x20] sm:$0x1]
        %v860 = vsel %vm844, %v686, %v859
        %861 = vst [vmem:[#allocation2 + $0x20] sm:$0x1] %v860
        %v862 = vld [vmem:[#allocation2 + $0x24] sm:$0xf]
        %v863 = vsel %vm838, %v693, %v862
        %864 = vst [vmem:[#allocation2 + $0x24] sm:$0xf] %v863
        %865 = vst [vmem:[#allocation2 + $0x28] sm:$0xf] %v702
        %v866 = vld [vmem:[#allocation2 + $0x2c] sm:$0x1]
        %v867 = vsel %vm844, %v703, %v866
        %868 = vst [vmem:[#allocation2 + $0x2c] sm:$0x1] %v867
        %v869 = vld [vmem:[#allocation2 + $0x30] sm:$0xf]
        %v870 = vsel %vm838, %v710, %v869
        %871 = vst [vmem:[#allocation2 + $0x30] sm:$0xf] %v870
        %872 = vst [vmem:[#allocation2 + $0x34] sm:$0xf] %v719
        %v873 = vld [vmem:[#allocation2 + $0x38] sm:$0x1]
        %v874 = vsel %vm844, %v720, %v873
        %875 = vst [vmem:[#allocation2 + $0x38] sm:$0x1] %v874
        %v876 = vld [vmem:[#allocation2 + $0x3c] sm:$0xf]
        %v877 = vsel %vm838, %v727, %v876
        %878 = vst [vmem:[#allocation2 + $0x3c] sm:$0xf] %v877
        %879 = vst [vmem:[#allocation2 + $0x40] sm:$0xf] %v736
        %v880 = vld [vmem:[#allocation2 + $0x44] sm:$0x1]
        %v881 = vsel %vm844, %v737, %v880
        %882 = vst [vmem:[#allocation2 + $0x44] sm:$0x1] %v881
        %v883 = vld [vmem:[#allocation2 + $0x48] sm:$0xf]
        %v884 = vsel %vm838, %v744, %v883
        %885 = vst [vmem:[#allocation2 + $0x48] sm:$0xf] %v884
        %886 = vst [vmem:[#allocation2 + $0x4c] sm:$0xf] %v753
        %v887 = vld [vmem:[#allocation2 + $0x50] sm:$0x1]
        %v888 = vsel %vm844, %v754, %v887
        %889 = vst [vmem:[#allocation2 + $0x50] sm:$0x1] %v888
        %v890 = vld [vmem:[#allocation2 + $0x54] sm:$0xf]
        %v891 = vsel %vm838, %v761, %v890
        %892 = vst [vmem:[#allocation2 + $0x54] sm:$0xf] %v891
        %893 = vst [vmem:[#allocation2 + $0x58] sm:$0xf] %v770
        %v894 = vld [vmem:[#allocation2 + $0x5c] sm:$0x1]
        %v895 = vsel %vm844, %v771, %v894
        %896 = vst [vmem:[#allocation2 + $0x5c] sm:$0x1] %v895
        %v897 = vld [vmem:[#allocation2 + $0x60] sm:$0xf]
        %v898 = vsel %vm838, %v778, %v897
        %899 = vst [vmem:[#allocation2 + $0x60] sm:$0xf] %v898
        %900 = vst [vmem:[#allocation2 + $0x64] sm:$0xf] %v787
        %v901 = vld [vmem:[#allocation2 + $0x68] sm:$0x1]
        %v902 = vsel %vm844, %v788, %v901
        %903 = vst [vmem:[#allocation2 + $0x68] sm:$0x1] %v902
        %v904 = vld [vmem:[#allocation2 + $0x6c] sm:$0xf]
        %v905 = vsel %vm838, %v795, %v904
        %906 = vst [vmem:[#allocation2 + $0x6c] sm:$0xf] %v905
        %907 = vst [vmem:[#allocation2 + $0x70] sm:$0xf] %v804
        %v908 = vld [vmem:[#allocation2 + $0x74] sm:$0x1]
        %v909 = vsel %vm844, %v805, %v908
        %910 = vst [vmem:[#allocation2 + $0x74] sm:$0x1] %v909
        %v911 = vld [vmem:[#allocation2] sm:$0x1]
        %v912 = vsel %vm844, 0, %v911
        %913 = vst [vmem:[#allocation2] sm:$0x1] %v912
        %v914 = vld [vmem:[#allocation2 + $0xc] sm:$0x1]
        %v915 = vsel %vm844, 0, %v914
        %916 = vst [vmem:[#allocation2 + $0xc] sm:$0x1] %v915
        %v917 = vld [vmem:[#allocation2 + $0x18] sm:$0x1]
        %v918 = vsel %vm844, 0, %v917
        %919 = vst [vmem:[#allocation2 + $0x18] sm:$0x1] %v918
        %v920 = vld [vmem:[#allocation2 + $0x24] sm:$0x1]
        %v921 = vsel %vm844, 0, %v920
        %922 = vst [vmem:[#allocation2 + $0x24] sm:$0x1] %v921
        %v923 = vld [vmem:[#allocation2 + $0x30] sm:$0x1]
        %v924 = vsel %vm844, 0, %v923
        %925 = vst [vmem:[#allocation2 + $0x30] sm:$0x1] %v924
        %v926 = vld [vmem:[#allocation2 + $0x3c] sm:$0x1]
        %v927 = vsel %vm844, 0, %v926
        %928 = vst [vmem:[#allocation2 + $0x3c] sm:$0x1] %v927
        %v929 = vld [vmem:[#allocation2 + $0x48] sm:$0x1]
        %v930 = vsel %vm844, 0, %v929
        %931 = vst [vmem:[#allocation2 + $0x48] sm:$0x1] %v930
        %v932 = vld [vmem:[#allocation2 + $0x54] sm:$0x1]
        %v933 = vsel %vm844, 0, %v932
        %934 = vst [vmem:[#allocation2 + $0x54] sm:$0x1] %v933
        %v935 = vld [vmem:[#allocation2 + $0x60] sm:$0x1]
        %v936 = vsel %vm844, 0, %v935
        %937 = vst [vmem:[#allocation2 + $0x60] sm:$0x1] %v936
        %v938 = vld [vmem:[#allocation2 + $0x6c] sm:$0x1]
        %v939 = vsel %vm844, 0, %v938
        %940 = vst [vmem:[#allocation2 + $0x6c] sm:$0x1] %v939
        %vm941 = vmand %vm843, %vm837
        %v942 = vld [vmem:[#allocation2 + $0x8] sm:$0x1]
        %v943 = vsel %vm941, 0, %v942
        %944 = vst [vmem:[#allocation2 + $0x8] sm:$0x1] %v943
        %v945 = vld [vmem:[#allocation2 + $0x14] sm:$0x1]
        %v946 = vsel %vm941, 0, %v945
        %947 = vst [vmem:[#allocation2 + $0x14] sm:$0x1] %v946
        %v948 = vld [vmem:[#allocation2 + $0x20] sm:$0x1]
        %v949 = vsel %vm941, 0, %v948
        %950 = vst [vmem:[#allocation2 + $0x20] sm:$0x1] %v949
        %v951 = vld [vmem:[#allocation2 + $0x2c] sm:$0x1]
        %v952 = vsel %vm941, 0, %v951
        %953 = vst [vmem:[#allocation2 + $0x2c] sm:$0x1] %v952
        %v954 = vld [vmem:[#allocation2 + $0x38] sm:$0x1]
        %v955 = vsel %vm941, 0, %v954
        %956 = vst [vmem:[#allocation2 + $0x38] sm:$0x1] %v955
        %v957 = vld [vmem:[#allocation2 + $0x44] sm:$0x1]
        %v958 = vsel %vm941, 0, %v957
        %959 = vst [vmem:[#allocation2 + $0x44] sm:$0x1] %v958
        %v960 = vld [vmem:[#allocation2 + $0x50] sm:$0x1]
        %v961 = vsel %vm941, 0, %v960
        %962 = vst [vmem:[#allocation2 + $0x50] sm:$0x1] %v961
        %v963 = vld [vmem:[#allocation2 + $0x5c] sm:$0x1]
        %v964 = vsel %vm941, 0, %v963
        %965 = vst [vmem:[#allocation2 + $0x5c] sm:$0x1] %v964
        %v966 = vld [vmem:[#allocation2 + $0x68] sm:$0x1]
        %v967 = vsel %vm941, 0, %v966
        %968 = vst [vmem:[#allocation2 + $0x68] sm:$0x1] %v967
        %v969 = vld [vmem:[#allocation2 + $0x74] sm:$0x1]
        %v970 = vsel %vm941, 0, %v969
        %971 = vst [vmem:[#allocation2 + $0x74] sm:$0x1] %v970
        %p972 = scmp.eq.s32.totalorder %s24, 0
        // Predicated region
        $region41: #{darknet_block_pallas.1} parent=39 // pred_check
          %p973 = pneg %p972
        $region42: #{darknet_block_pallas.1} parent=39 // pred_check_branch
          %975 = sbr.rel (%p973) target = $region44
        $region43: #{darknet_block_pallas.1} parent=39 // pred_region
          %976 = vst [vmem:[#allocation2] sm:$0xf] 0
          %977 = vst [vmem:[#allocation2 + $0x4] sm:$0xf] 0
          %978 = vst [vmem:[#allocation2 + $0x8] sm:$0x1] 0
        $region44: #{darknet_block_pallas.1} parent=39 // pred_fallthru
          _
        %p979 = scmp.eq.s32.totalorder %s24, 1
        // Predicated region
        $region45: #{darknet_block_pallas.1} parent=39 // pred_check
          %p980 = pneg %p979
        $region46: #{darknet_block_pallas.1} parent=39 // pred_check_branch
          %982 = sbr.rel (%p980) target = $region48
        $region47: #{darknet_block_pallas.1} parent=39 // pred_region
          %s983 = scalar_lea.vmem [#allocation2], 108
          %984 = vst [vmem:[%s983] sm:$0xf] 0
          %985 = vst [vmem:[%s983 + $0x4] sm:$0xf] 0
          %986 = vst [vmem:[%s983 + $0x8] sm:$0x1] 0
        $region48: #{darknet_block_pallas.1} parent=39 // pred_fallthru
          _
        %v987 = vld [vmem:[#allocation2] sm:$0xf]
        %v988 = vld [vmem:[#allocation2 + $0x4] sm:$0xf]
        %v989 = vld [vmem:[#allocation2 + $0x8] sm:$0x1]
        %v990 = vld [vmem:[#allocation2 + $0xc] sm:$0xf]
        %v991 = vld [vmem:[#allocation2 + $0x10] sm:$0xf]
        %v992 = vld [vmem:[#allocation2 + $0x14] sm:$0x1]
        %v993 = vld [vmem:[#allocation2 + $0x18] sm:$0xf]
        %v994 = vld [vmem:[#allocation2 + $0x1c] sm:$0xf]
        %v995 = vld [vmem:[#allocation2 + $0x20] sm:$0x1]
        %v996 = vld [vmem:[#allocation2 + $0x24] sm:$0xf]
        %v997 = vld [vmem:[#allocation2 + $0x28] sm:$0xf]
        %v998 = vld [vmem:[#allocation2 + $0x2c] sm:$0x1]
        %v999 = vld [vmem:[#allocation2 + $0x30] sm:$0xf]
        %v1000 = vld [vmem:[#allocation2 + $0x34] sm:$0xf]
        %v1001 = vld [vmem:[#allocation2 + $0x38] sm:$0x1]
        %v1002 = vld [vmem:[#allocation2 + $0x3c] sm:$0xf]
        %v1003 = vld [vmem:[#allocation2 + $0x40] sm:$0xf]
        %v1004 = vld [vmem:[#allocation2 + $0x44] sm:$0x1]
        %v1005 = vld [vmem:[#allocation2 + $0x48] sm:$0xf]
        %v1006 = vld [vmem:[#allocation2 + $0x4c] sm:$0xf]
        %v1007 = vld [vmem:[#allocation2 + $0x50] sm:$0x1]
        %v1008 = vld [vmem:[#allocation2 + $0x54] sm:$0xf]
        %v1009 = vld [vmem:[#allocation2 + $0x58] sm:$0xf]
        %v1010 = vld [vmem:[#allocation2 + $0x5c] sm:$0x1]
        %v1011 = vld [vmem:[%s3] sm:$0xff]
        %v1012 = vld [vmem:[%s3 + $0x8] sm:$0xff]
        %v1013 = vld [vmem:[%s3 + $0x10] sm:$0xff]
        %v1014 = vld [vmem:[%s3 + $0x18] sm:$0xff]
        %v1015 = vld [vmem:[%s3 + $0x20] sm:$0xff]
        %v1016 = vld [vmem:[%s3 + $0x28] sm:$0xff]
        %v1017 = vld [vmem:[%s3 + $0x30] sm:$0xff]
        %v1018 = vld [vmem:[%s3 + $0x38] sm:$0xff]
        %v1019 = vld [vmem:[%s3 + $0x40] sm:$0xff]
        %v1020 = vld [vmem:[%s3 + $0x48] sm:$0xff]
        %v1021 = vld [vmem:[%s3 + $0x50] sm:$0xff]
        %v1022 = vld [vmem:[%s3 + $0x58] sm:$0xff]
        %v1023 = vld [vmem:[%s3 + $0x60] sm:$0xff]
        %v1024 = vld [vmem:[%s3 + $0x68] sm:$0xff]
        %v1025 = vld [vmem:[%s3 + $0x70] sm:$0xff]
        %v1026 = vld [vmem:[%s3 + $0x78] sm:$0xff]
        %vm1027 = vsmask.f32 3328
        %vm1028 = vsmask.f32 7440
        %vm1029 = vmor %vm1027, %vm1028
        %v1031 = vshrl.u32 %v987, 16
        %v1033 = vrot.slane %v1031, 4
        %v1034 = vshll.u32 %v987, 16
        %v1036 = vrot.slane %v1034, 5
        %v1037 = vor.u32 %v1033, %v1036
        %v1038 = vrot.slane %v1037, 4
        %v1040 = vshll.u32 %v988, 16
        %v1042 = vrot.slane %v1040, 5
        %v1043 = vsel %vm1029, %v1038, %v1042
        %v1044 = vshrl.u32 %v988, 16
        %v1046 = vrot.slane %v1044, 4
        %v1047 = vor.u32 %v1046, %v1042
        %v1048 = vrot.slane %v1047, 4
        %v1050 = vshll.u32 %v989, 16
        %v1052 = vrot.slane %v1050, 5
        %v1053 = vsel %vm1029, %v1048, %v1052
        %v1055 = vshrl.u32 %v990, 16
        %v1057 = vrot.slane %v1055, 4
        %v1058 = vshll.u32 %v990, 16
        %v1060 = vrot.slane %v1058, 5
        %v1061 = vor.u32 %v1057, %v1060
        %v1062 = vrot.slane %v1061, 4
        %v1064 = vshll.u32 %v991, 16
        %v1066 = vrot.slane %v1064, 5
        %v1067 = vsel %vm1029, %v1062, %v1066
        %v1068 = vshrl.u32 %v991, 16
        %v1070 = vrot.slane %v1068, 4
        %v1071 = vor.u32 %v1070, %v1066
        %v1072 = vrot.slane %v1071, 4
        %v1074 = vshll.u32 %v992, 16
        %v1076 = vrot.slane %v1074, 5
        %v1077 = vsel %vm1029, %v1072, %v1076
        %v1079 = vshrl.u32 %v993, 16
        %v1081 = vrot.slane %v1079, 4
        %v1082 = vshll.u32 %v993, 16
        %v1084 = vrot.slane %v1082, 5
        %v1085 = vor.u32 %v1081, %v1084
        %v1086 = vrot.slane %v1085, 4
        %v1088 = vshll.u32 %v994, 16
        %v1090 = vrot.slane %v1088, 5
        %v1091 = vsel %vm1029, %v1086, %v1090
        %v1092 = vshrl.u32 %v994, 16
        %v1094 = vrot.slane %v1092, 4
        %v1095 = vor.u32 %v1094, %v1090
        %v1096 = vrot.slane %v1095, 4
        %v1098 = vshll.u32 %v995, 16
        %v1100 = vrot.slane %v1098, 5
        %v1101 = vsel %vm1029, %v1096, %v1100
        %v1103 = vshrl.u32 %v996, 16
        %v1105 = vrot.slane %v1103, 4
        %v1106 = vshll.u32 %v996, 16
        %v1108 = vrot.slane %v1106, 5
        %v1109 = vor.u32 %v1105, %v1108
        %v1110 = vrot.slane %v1109, 4
        %v1112 = vshll.u32 %v997, 16
        %v1114 = vrot.slane %v1112, 5
        %v1115 = vsel %vm1029, %v1110, %v1114
        %v1116 = vshrl.u32 %v997, 16
        %v1118 = vrot.slane %v1116, 4
        %v1119 = vor.u32 %v1118, %v1114
        %v1120 = vrot.slane %v1119, 4
        %v1122 = vshll.u32 %v998, 16
        %v1124 = vrot.slane %v1122, 5
        %v1125 = vsel %vm1029, %v1120, %v1124
        %v1127 = vshrl.u32 %v999, 16
        %v1129 = vrot.slane %v1127, 4
        %v1130 = vshll.u32 %v999, 16
        %v1132 = vrot.slane %v1130, 5
        %v1133 = vor.u32 %v1129, %v1132
        %v1134 = vrot.slane %v1133, 4
        %v1136 = vshll.u32 %v1000, 16
        %v1138 = vrot.slane %v1136, 5
        %v1139 = vsel %vm1029, %v1134, %v1138
        %v1140 = vshrl.u32 %v1000, 16
        %v1142 = vrot.slane %v1140, 4
        %v1143 = vor.u32 %v1142, %v1138
        %v1144 = vrot.slane %v1143, 4
        %v1146 = vshll.u32 %v1001, 16
        %v1148 = vrot.slane %v1146, 5
        %v1149 = vsel %vm1029, %v1144, %v1148
        %v1151 = vshrl.u32 %v1002, 16
        %v1153 = vrot.slane %v1151, 4
        %v1154 = vshll.u32 %v1002, 16
        %v1156 = vrot.slane %v1154, 5
        %v1157 = vor.u32 %v1153, %v1156
        %v1158 = vrot.slane %v1157, 4
        %v1160 = vshll.u32 %v1003, 16
        %v1162 = vrot.slane %v1160, 5
        %v1163 = vsel %vm1029, %v1158, %v1162
        %v1164 = vshrl.u32 %v1003, 16
        %v1166 = vrot.slane %v1164, 4
        %v1167 = vor.u32 %v1166, %v1162
        %v1168 = vrot.slane %v1167, 4
        %v1170 = vshll.u32 %v1004, 16
        %v1172 = vrot.slane %v1170, 5
        %v1173 = vsel %vm1029, %v1168, %v1172
        %v1175 = vshrl.u32 %v1005, 16
        %v1177 = vrot.slane %v1175, 4
        %v1178 = vshll.u32 %v1005, 16
        %v1180 = vrot.slane %v1178, 5
        %v1181 = vor.u32 %v1177, %v1180
        %v1182 = vrot.slane %v1181, 4
        %v1184 = vshll.u32 %v1006, 16
        %v1186 = vrot.slane %v1184, 5
        %v1187 = vsel %vm1029, %v1182, %v1186
        %v1188 = vshrl.u32 %v1006, 16
        %v1190 = vrot.slane %v1188, 4
        %v1191 = vor.u32 %v1190, %v1186
        %v1192 = vrot.slane %v1191, 4
        %v1194 = vshll.u32 %v1007, 16
        %v1196 = vrot.slane %v1194, 5
        %v1197 = vsel %vm1029, %v1192, %v1196
        %v1199 = vshrl.u32 %v1008, 16
        %v1201 = vrot.slane %v1199, 4
        %v1202 = vshll.u32 %v1008, 16
        %v1204 = vrot.slane %v1202, 5
        %v1205 = vor.u32 %v1201, %v1204
        %v1206 = vrot.slane %v1205, 4
        %v1208 = vshll.u32 %v1009, 16
        %v1210 = vrot.slane %v1208, 5
        %v1211 = vsel %vm1029, %v1206, %v1210
        %v1212 = vshrl.u32 %v1009, 16
        %v1214 = vrot.slane %v1212, 4
        %v1215 = vor.u32 %v1214, %v1210
        %v1216 = vrot.slane %v1215, 4
        %v1218 = vshll.u32 %v1010, 16
        %v1220 = vrot.slane %v1218, 5
        %v1221 = vsel %vm1029, %v1216, %v1220
        %v1222 = vld [vmem:[%s3 + $0x80] sm:$0xff]
        %v1223 = vld [vmem:[%s3 + $0x88] sm:$0xff]
        %v1224 = vld [vmem:[%s3 + $0x90] sm:$0xff]
        %v1225 = vld [vmem:[%s3 + $0x98] sm:$0xff]
        %v1226 = vld [vmem:[%s3 + $0xa0] sm:$0xff]
        %v1227 = vld [vmem:[%s3 + $0xa8] sm:$0xff]
        %v1228 = vld [vmem:[%s3 + $0xb0] sm:$0xff]
        %v1229 = vld [vmem:[%s3 + $0xb8] sm:$0xff]
        %v1230 = vld [vmem:[%s3 + $0xc0] sm:$0xff]
        %v1231 = vld [vmem:[%s3 + $0xc8] sm:$0xff]
        %v1232 = vld [vmem:[%s3 + $0xd0] sm:$0xff]
        %v1233 = vld [vmem:[%s3 + $0xd8] sm:$0xff]
        %v1234 = vld [vmem:[%s3 + $0xe0] sm:$0xff]
        %v1235 = vld [vmem:[%s3 + $0xe8] sm:$0xff]
        %v1236 = vld [vmem:[%s3 + $0xf0] sm:$0xff]
        %v1237 = vld [vmem:[%s3 + $0xf8] sm:$0xff]
        %v1238 = vunpack.c.l.b16 %v1043
        %v1239 = vunpack.c.l.b16 %v1053
        %v1240 = vunpack.c.l.b16 %v1067
        %v1241 = vunpack.c.l.b16 %v1077
        %v1242 = vunpack.c.l.b16 %v1091
        %v1243 = vunpack.c.l.b16 %v1101
        %v1244 = vunpack.c.l.b16 %v1115
        %v1245 = vunpack.c.l.b16 %v1125
        %v1246 = vunpack.c.l.b16 %v1139
        %v1247 = vunpack.c.l.b16 %v1149
        %v1248 = vunpack.c.l.b16 %v1163
        %v1249 = vunpack.c.l.b16 %v1173
        %v1250 = vunpack.c.l.b16 %v1187
        %v1251 = vunpack.c.l.b16 %v1197
        %v1252 = vunpack.c.l.b16 %v1211
        %v1253 = vunpack.c.l.b16 %v1221
        %v1254 = vpack.c.b16 %v1239, %v1238
        %v1255 = vpack.c.b16 %v1241, %v1240
        %v1256 = vpack.c.b16 %v1243, %v1242
        %v1257 = vpack.c.b16 %v1245, %v1244
        %v1258 = vpack.c.b16 %v1247, %v1246
        %v1259 = vpack.c.b16 %v1249, %v1248
        %v1260 = vpack.c.b16 %v1251, %v1250
        %v1261 = vpack.c.b16 %v1253, %v1252
        %v1286 = vunpack.c.l.b16 %v1222
        %v1287 = vunpack.c.h.b16 %v1222
        %v1288 = vunpack.c.l.b16 %v1223
        %v1289 = vunpack.c.h.b16 %v1223
        %v1290 = vunpack.c.l.b16 %v1224
        %v1291 = vunpack.c.h.b16 %v1224
        %v1292 = vunpack.c.l.b16 %v1225
        %v1293 = vunpack.c.h.b16 %v1225
        %v1294 = vunpack.c.l.b16 %v1226
        %v1295 = vunpack.c.h.b16 %v1226
        %v1296 = vunpack.c.l.b16 %v1227
        %v1297 = vunpack.c.h.b16 %v1227
        %v1298 = vunpack.c.l.b16 %v1228
        %v1299 = vunpack.c.h.b16 %v1228
        %v1300 = vunpack.c.l.b16 %v1229
        %v1301 = vunpack.c.h.b16 %v1229
        %v1302 = vunpack.c.l.b16 %v1230
        %v1303 = vunpack.c.h.b16 %v1230
        %v1304 = vunpack.c.l.b16 %v1231
        %v1305 = vunpack.c.h.b16 %v1231
        %v1306 = vunpack.c.l.b16 %v1232
        %v1307 = vunpack.c.h.b16 %v1232
        %v1308 = vunpack.c.l.b16 %v1233
        %v1309 = vunpack.c.h.b16 %v1233
        %v1310 = vunpack.c.l.b16 %v1234
        %v1311 = vunpack.c.h.b16 %v1234
        %v1312 = vunpack.c.l.b16 %v1235
        %v1313 = vunpack.c.h.b16 %v1235
        %v1314 = vunpack.c.l.b16 %v1236
        %v1315 = vunpack.c.h.b16 %v1236
        %v1316 = vunpack.c.l.b16 %v1237
        %v1317 = vunpack.c.h.b16 %v1237
        %v1318 = vpack.c.b16 %v1288, %v1286
        %v1319 = vpack.c.b16 %v1289, %v1287
        %v1320 = vpack.c.b16 %v1292, %v1290
        %v1321 = vpack.c.b16 %v1293, %v1291
        %v1322 = vpack.c.b16 %v1296, %v1294
        %v1323 = vpack.c.b16 %v1297, %v1295
        %v1324 = vpack.c.b16 %v1300, %v1298
        %v1325 = vpack.c.b16 %v1301, %v1299
        %v1326 = vpack.c.b16 %v1304, %v1302
        %v1327 = vpack.c.b16 %v1305, %v1303
        %v1328 = vpack.c.b16 %v1308, %v1306
        %v1329 = vpack.c.b16 %v1309, %v1307
        %v1330 = vpack.c.b16 %v1312, %v1310
        %v1331 = vpack.c.b16 %v1313, %v1311
        %v1332 = vpack.c.b16 %v1316, %v1314
        %v1333 = vpack.c.b16 %v1317, %v1315
        %1350 = vmatpush.bf16.msra.mxu0 %v1332
        %1351 = vmatpush.bf16.msra.mxu0 %v1330
        %1352 = vmatpush.bf16.msra.mxu0 %v1328
        %1353 = vmatpush.bf16.msra.mxu0 %v1326
        %1354 = vmatpush.bf16.msra.mxu0 %v1324
        %1355 = vmatpush.bf16.msra.mxu0 %v1322
        %1356 = vmatpush.bf16.msra.mxu0 %v1320
        %1357 = vmatpush.bf16.msra.mxu0 %v1318
        %1358 = vmatmul.bf16.gmra.mxu0 %v1254
        %v1359 = vpop.f32.mrf.mxu0
        %v1360 = vadd.f32 0.0, %v1359
        %v1361 = vpop.f32.mrf.mxu0
        %v1362 = vadd.f32 0.0, %v1361
        %1363 = vmatmul.bf16.gmra.mxu0 %v1255
        %v1364 = vpop.f32.mrf.mxu0
        %v1365 = vadd.f32 0.0, %v1364
        %v1366 = vpop.f32.mrf.mxu0
        %v1367 = vadd.f32 0.0, %v1366
        %1368 = vmatmul.bf16.gmra.mxu0 %v1256
        %v1369 = vpop.f32.mrf.mxu0
        %v1370 = vadd.f32 0.0, %v1369
        %v1371 = vpop.f32.mrf.mxu0
        %v1372 = vadd.f32 0.0, %v1371
        %1373 = vmatmul.bf16.gmra.mxu0 %v1257
        %v1374 = vpop.f32.mrf.mxu0
        %v1375 = vadd.f32 0.0, %v1374
        %v1376 = vpop.f32.mrf.mxu0
        %v1377 = vadd.f32 0.0, %v1376
        %1378 = vmatmul.bf16.gmra.mxu0 %v1258
        %v1379 = vpop.f32.mrf.mxu0
        %v1380 = vadd.f32 0.0, %v1379
        %v1381 = vpop.f32.mrf.mxu0
        %v1382 = vadd.f32 0.0, %v1381
        %1383 = vmatmul.bf16.gmra.mxu0 %v1259
        %v1384 = vpop.f32.mrf.mxu0
        %v1385 = vadd.f32 0.0, %v1384
        %v1386 = vpop.f32.mrf.mxu0
        %v1387 = vadd.f32 0.0, %v1386
        %1388 = vmatmul.bf16.gmra.mxu0 %v1260
        %v1389 = vpop.f32.mrf.mxu0
        %v1390 = vadd.f32 0.0, %v1389
        %v1391 = vpop.f32.mrf.mxu0
        %v1392 = vadd.f32 0.0, %v1391
        %1393 = vmatmul.bf16.gmra.mxu0 %v1261
        %v1394 = vpop.f32.mrf.mxu0
        %v1395 = vadd.f32 0.0, %v1394
        %v1396 = vpop.f32.mrf.mxu0
        %v1397 = vadd.f32 0.0, %v1396
        %1398 = vdwg.mxu0
        %1399 = vmatpush.bf16.msra.mxu0 %v1333
        %1400 = vmatpush.bf16.msra.mxu0 %v1331
        %1401 = vmatpush.bf16.msra.mxu0 %v1329
        %1402 = vmatpush.bf16.msra.mxu0 %v1327
        %1403 = vmatpush.bf16.msra.mxu0 %v1325
        %1404 = vmatpush.bf16.msra.mxu0 %v1323
        %1405 = vmatpush.bf16.msra.mxu0 %v1321
        %1406 = vmatpush.bf16.msra.mxu0 %v1319
        %1407 = vmatmul.bf16.gmra.mxu0 %v1254
        %v1408 = vpop.f32.mrf.mxu0
        %v1409 = vadd.f32 0.0, %v1408
        %v1410 = vpop.f32.mrf.mxu0
        %v1411 = vadd.f32 0.0, %v1410
        %1412 = vmatmul.bf16.gmra.mxu0 %v1255
        %v1413 = vpop.f32.mrf.mxu0
        %v1414 = vadd.f32 0.0, %v1413
        %v1415 = vpop.f32.mrf.mxu0
        %v1416 = vadd.f32 0.0, %v1415
        %1417 = vmatmul.bf16.gmra.mxu0 %v1256
        %v1418 = vpop.f32.mrf.mxu0
        %v1419 = vadd.f32 0.0, %v1418
        %v1420 = vpop.f32.mrf.mxu0
        %v1421 = vadd.f32 0.0, %v1420
        %1422 = vmatmul.bf16.gmra.mxu0 %v1257
        %v1423 = vpop.f32.mrf.mxu0
        %v1424 = vadd.f32 0.0, %v1423
        %v1425 = vpop.f32.mrf.mxu0
        %v1426 = vadd.f32 0.0, %v1425
        %1427 = vmatmul.bf16.gmra.mxu0 %v1258
        %v1428 = vpop.f32.mrf.mxu0
        %v1429 = vadd.f32 0.0, %v1428
        %v1430 = vpop.f32.mrf.mxu0
        %v1431 = vadd.f32 0.0, %v1430
        %1432 = vmatmul.bf16.gmra.mxu0 %v1259
        %v1433 = vpop.f32.mrf.mxu0
        %v1434 = vadd.f32 0.0, %v1433
        %v1435 = vpop.f32.mrf.mxu0
        %v1436 = vadd.f32 0.0, %v1435
        %1437 = vmatmul.bf16.gmra.mxu0 %v1260
        %v1438 = vpop.f32.mrf.mxu0
        %v1439 = vadd.f32 0.0, %v1438
        %v1440 = vpop.f32.mrf.mxu0
        %v1441 = vadd.f32 0.0, %v1440
        %1442 = vmatmul.bf16.gmra.mxu0 %v1261
        %v1443 = vpop.f32.mrf.mxu0
        %v1444 = vadd.f32 0.0, %v1443
        %v1445 = vpop.f32.mrf.mxu0
        %v1446 = vadd.f32 0.0, %v1445
        %1447 = vdwg.mxu0
        %v1464 = vunpack.c.l.b16 %v987
        %v1465 = vunpack.c.l.b16 %v988
        %v1466 = vunpack.c.l.b16 %v990
        %v1467 = vunpack.c.l.b16 %v991
        %v1468 = vunpack.c.l.b16 %v993
        %v1469 = vunpack.c.l.b16 %v994
        %v1470 = vunpack.c.l.b16 %v996
        %v1471 = vunpack.c.l.b16 %v997
        %v1472 = vunpack.c.l.b16 %v999
        %v1473 = vunpack.c.l.b16 %v1000
        %v1474 = vunpack.c.l.b16 %v1002
        %v1475 = vunpack.c.l.b16 %v1003
        %v1476 = vunpack.c.l.b16 %v1005
        %v1477 = vunpack.c.l.b16 %v1006
        %v1478 = vunpack.c.l.b16 %v1008
        %v1479 = vunpack.c.l.b16 %v1009
        %v1480 = vpack.c.b16 %v1465, %v1464
        %v1481 = vpack.c.b16 %v1467, %v1466
        %v1482 = vpack.c.b16 %v1469, %v1468
        %v1483 = vpack.c.b16 %v1471, %v1470
        %v1484 = vpack.c.b16 %v1473, %v1472
        %v1485 = vpack.c.b16 %v1475, %v1474
        %v1486 = vpack.c.b16 %v1477, %v1476
        %v1487 = vpack.c.b16 %v1479, %v1478
        %v1512 = vunpack.c.l.b16 %v1011
        %v1513 = vunpack.c.h.b16 %v1011
        %v1514 = vunpack.c.l.b16 %v1012
        %v1515 = vunpack.c.h.b16 %v1012
        %v1516 = vunpack.c.l.b16 %v1013
        %v1517 = vunpack.c.h.b16 %v1013
        %v1518 = vunpack.c.l.b16 %v1014
        %v1519 = vunpack.c.h.b16 %v1014
        %v1520 = vunpack.c.l.b16 %v1015
        %v1521 = vunpack.c.h.b16 %v1015
        %v1522 = vunpack.c.l.b16 %v1016
        %v1523 = vunpack.c.h.b16 %v1016
        %v1524 = vunpack.c.l.b16 %v1017
        %v1525 = vunpack.c.h.b16 %v1017
        %v1526 = vunpack.c.l.b16 %v1018
        %v1527 = vunpack.c.h.b16 %v1018
        %v1528 = vunpack.c.l.b16 %v1019
        %v1529 = vunpack.c.h.b16 %v1019
        %v1530 = vunpack.c.l.b16 %v1020
        %v1531 = vunpack.c.h.b16 %v1020
        %v1532 = vunpack.c.l.b16 %v1021
        %v1533 = vunpack.c.h.b16 %v1021
        %v1534 = vunpack.c.l.b16 %v1022
        %v1535 = vunpack.c.h.b16 %v1022
        %v1536 = vunpack.c.l.b16 %v1023
        %v1537 = vunpack.c.h.b16 %v1023
        %v1538 = vunpack.c.l.b16 %v1024
        %v1539 = vunpack.c.h.b16 %v1024
        %v1540 = vunpack.c.l.b16 %v1025
        %v1541 = vunpack.c.h.b16 %v1025
        %v1542 = vunpack.c.l.b16 %v1026
        %v1543 = vunpack.c.h.b16 %v1026
        %v1544 = vpack.c.b16 %v1514, %v1512
        %v1545 = vpack.c.b16 %v1515, %v1513
        %v1546 = vpack.c.b16 %v1518, %v1516
        %v1547 = vpack.c.b16 %v1519, %v1517
        %v1548 = vpack.c.b16 %v1522, %v1520
        %v1549 = vpack.c.b16 %v1523, %v1521
        %v1550 = vpack.c.b16 %v1526, %v1524
        %v1551 = vpack.c.b16 %v1527, %v1525
        %v1552 = vpack.c.b16 %v1530, %v1528
        %v1553 = vpack.c.b16 %v1531, %v1529
        %v1554 = vpack.c.b16 %v1534, %v1532
        %v1555 = vpack.c.b16 %v1535, %v1533
        %v1556 = vpack.c.b16 %v1538, %v1536
        %v1557 = vpack.c.b16 %v1539, %v1537
        %v1558 = vpack.c.b16 %v1542, %v1540
        %v1559 = vpack.c.b16 %v1543, %v1541
        %1576 = vmatpush.bf16.msra.mxu0 %v1558
        %1577 = vmatpush.bf16.msra.mxu0 %v1556
        %1578 = vmatpush.bf16.msra.mxu0 %v1554
        %1579 = vmatpush.bf16.msra.mxu0 %v1552
        %1580 = vmatpush.bf16.msra.mxu0 %v1550
        %1581 = vmatpush.bf16.msra.mxu0 %v1548
        %1582 = vmatpush.bf16.msra.mxu0 %v1546
        %1583 = vmatpush.bf16.msra.mxu0 %v1544
        %1584 = vmatmul.bf16.gmra.mxu0 %v1480
        %v1585 = vpop.f32.mrf.mxu0
        %v1586 = vadd.f32 %v1360, %v1585
        %v1587 = vpop.f32.mrf.mxu0
        %v1588 = vadd.f32 %v1362, %v1587
        %1589 = vmatmul.bf16.gmra.mxu0 %v1481
        %v1590 = vpop.f32.mrf.mxu0
        %v1591 = vadd.f32 %v1365, %v1590
        %v1592 = vpop.f32.mrf.mxu0
        %v1593 = vadd.f32 %v1367, %v1592
        %1594 = vmatmul.bf16.gmra.mxu0 %v1482
        %v1595 = vpop.f32.mrf.mxu0
        %v1596 = vadd.f32 %v1370, %v1595
        %v1597 = vpop.f32.mrf.mxu0
        %v1598 = vadd.f32 %v1372, %v1597
        %1599 = vmatmul.bf16.gmra.mxu0 %v1483
        %v1600 = vpop.f32.mrf.mxu0
        %v1601 = vadd.f32 %v1375, %v1600
        %v1602 = vpop.f32.mrf.mxu0
        %v1603 = vadd.f32 %v1377, %v1602
        %1604 = vmatmul.bf16.gmra.mxu0 %v1484
        %v1605 = vpop.f32.mrf.mxu0
        %v1606 = vadd.f32 %v1380, %v1605
        %v1607 = vpop.f32.mrf.mxu0
        %v1608 = vadd.f32 %v1382, %v1607
        %1609 = vmatmul.bf16.gmra.mxu0 %v1485
        %v1610 = vpop.f32.mrf.mxu0
        %v1611 = vadd.f32 %v1385, %v1610
        %v1612 = vpop.f32.mrf.mxu0
        %v1613 = vadd.f32 %v1387, %v1612
        %1614 = vmatmul.bf16.gmra.mxu0 %v1486
        %v1615 = vpop.f32.mrf.mxu0
        %v1616 = vadd.f32 %v1390, %v1615
        %v1617 = vpop.f32.mrf.mxu0
        %v1618 = vadd.f32 %v1392, %v1617
        %1619 = vmatmul.bf16.gmra.mxu0 %v1487
        %v1620 = vpop.f32.mrf.mxu0
        %v1621 = vadd.f32 %v1395, %v1620
        %v1622 = vpop.f32.mrf.mxu0
        %v1623 = vadd.f32 %v1397, %v1622
        %1624 = vdwg.mxu0
        %1625 = vmatpush.bf16.msra.mxu0 %v1559
        %1626 = vmatpush.bf16.msra.mxu0 %v1557
        %1627 = vmatpush.bf16.msra.mxu0 %v1555
        %1628 = vmatpush.bf16.msra.mxu0 %v1553
        %1629 = vmatpush.bf16.msra.mxu0 %v1551
        %1630 = vmatpush.bf16.msra.mxu0 %v1549
        %1631 = vmatpush.bf16.msra.mxu0 %v1547
        %1632 = vmatpush.bf16.msra.mxu0 %v1545
        %1633 = vmatmul.bf16.gmra.mxu0 %v1480
        %v1634 = vpop.f32.mrf.mxu0
        %v1635 = vadd.f32 %v1409, %v1634
        %v1636 = vpop.f32.mrf.mxu0
        %v1637 = vadd.f32 %v1411, %v1636
        %1638 = vmatmul.bf16.gmra.mxu0 %v1481
        %v1639 = vpop.f32.mrf.mxu0
        %v1640 = vadd.f32 %v1414, %v1639
        %v1641 = vpop.f32.mrf.mxu0
        %v1642 = vadd.f32 %v1416, %v1641
        %1643 = vmatmul.bf16.gmra.mxu0 %v1482
        %v1644 = vpop.f32.mrf.mxu0
        %v1645 = vadd.f32 %v1419, %v1644
        %v1646 = vpop.f32.mrf.mxu0
        %v1647 = vadd.f32 %v1421, %v1646
        %1648 = vmatmul.bf16.gmra.mxu0 %v1483
        %v1649 = vpop.f32.mrf.mxu0
        %v1650 = vadd.f32 %v1424, %v1649
        %v1651 = vpop.f32.mrf.mxu0
        %v1652 = vadd.f32 %v1426, %v1651
        %1653 = vmatmul.bf16.gmra.mxu0 %v1484
        %v1654 = vpop.f32.mrf.mxu0
        %v1655 = vadd.f32 %v1429, %v1654
        %v1656 = vpop.f32.mrf.mxu0
        %v1657 = vadd.f32 %v1431, %v1656
        %1658 = vmatmul.bf16.gmra.mxu0 %v1485
        %v1659 = vpop.f32.mrf.mxu0
        %v1660 = vadd.f32 %v1434, %v1659
        %v1661 = vpop.f32.mrf.mxu0
        %v1662 = vadd.f32 %v1436, %v1661
        %1663 = vmatmul.bf16.gmra.mxu0 %v1486
        %v1664 = vpop.f32.mrf.mxu0
        %v1665 = vadd.f32 %v1439, %v1664
        %v1666 = vpop.f32.mrf.mxu0
        %v1667 = vadd.f32 %v1441, %v1666
        %1668 = vmatmul.bf16.gmra.mxu0 %v1487
        %v1669 = vpop.f32.mrf.mxu0
        %v1670 = vadd.f32 %v1444, %v1669
        %v1671 = vpop.f32.mrf.mxu0
        %v1672 = vadd.f32 %v1446, %v1671
        %1673 = vdwg.mxu0
        %vm1682 = vcmask 1042432
        %vm1683 = vcmask 1046532
        %vm1684 = vmor %vm1682, %vm1683
        %v1685 = vrot.slane %v987, 5
        %v1686 = vrot.slane %v1685, 4
        %v1687 = vrot.slane %v988, 5
        %v1688 = vsel %vm1684, %v1686, %v1687
        %v1689 = vrot.slane %v1687, 4
        %v1690 = vrot.slane %v989, 5
        %v1691 = vsel %vm1684, %v1689, %v1690
        %v1692 = vrot.slane %v990, 5
        %v1693 = vrot.slane %v1692, 4
        %v1694 = vrot.slane %v991, 5
        %v1695 = vsel %vm1684, %v1693, %v1694
        %v1696 = vrot.slane %v1694, 4
        %v1697 = vrot.slane %v992, 5
        %v1698 = vsel %vm1684, %v1696, %v1697
        %v1699 = vrot.slane %v993, 5
        %v1700 = vrot.slane %v1699, 4
        %v1701 = vrot.slane %v994, 5
        %v1702 = vsel %vm1684, %v1700, %v1701
        %v1703 = vrot.slane %v1701, 4
        %v1704 = vrot.slane %v995, 5
        %v1705 = vsel %vm1684, %v1703, %v1704
        %v1706 = vrot.slane %v996, 5
        %v1707 = vrot.slane %v1706, 4
        %v1708 = vrot.slane %v997, 5
        %v1709 = vsel %vm1684, %v1707, %v1708
        %v1710 = vrot.slane %v1708, 4
        %v1711 = vrot.slane %v998, 5
        %v1712 = vsel %vm1684, %v1710, %v1711
        %v1713 = vrot.slane %v999, 5
        %v1714 = vrot.slane %v1713, 4
        %v1715 = vrot.slane %v1000, 5
        %v1716 = vsel %vm1684, %v1714, %v1715
        %v1717 = vrot.slane %v1715, 4
        %v1718 = vrot.slane %v1001, 5
        %v1719 = vsel %vm1684, %v1717, %v1718
        %v1720 = vrot.slane %v1002, 5
        %v1721 = vrot.slane %v1720, 4
        %v1722 = vrot.slane %v1003, 5
        %v1723 = vsel %vm1684, %v1721, %v1722
        %v1724 = vrot.slane %v1722, 4
        %v1725 = vrot.slane %v1004, 5
        %v1726 = vsel %vm1684, %v1724, %v1725
        %v1727 = vrot.slane %v1005, 5
        %v1728 = vrot.slane %v1727, 4
        %v1729 = vrot.slane %v1006, 5
        %v1730 = vsel %vm1684, %v1728, %v1729
        %v1731 = vrot.slane %v1729, 4
        %v1732 = vrot.slane %v1007, 5
        %v1733 = vsel %vm1684, %v1731, %v1732
        %v1734 = vrot.slane %v1008, 5
        %v1735 = vrot.slane %v1734, 4
        %v1736 = vrot.slane %v1009, 5
        %v1737 = vsel %vm1684, %v1735, %v1736
        %v1738 = vrot.slane %v1736, 4
        %v1739 = vrot.slane %v1010, 5
        %v1740 = vsel %vm1684, %v1738, %v1739
        %v1741 = vld [vmem:[%s3 + $0x100] sm:$0xff]
        %v1742 = vld [vmem:[%s3 + $0x108] sm:$0xff]
        %v1743 = vld [vmem:[%s3 + $0x110] sm:$0xff]
        %v1744 = vld [vmem:[%s3 + $0x118] sm:$0xff]
        %v1745 = vld [vmem:[%s3 + $0x120] sm:$0xff]
        %v1746 = vld [vmem:[%s3 + $0x128] sm:$0xff]
        %v1747 = vld [vmem:[%s3 + $0x130] sm:$0xff]
        %v1748 = vld [vmem:[%s3 + $0x138] sm:$0xff]
        %v1749 = vld [vmem:[%s3 + $0x140] sm:$0xff]
        %v1750 = vld [vmem:[%s3 + $0x148] sm:$0xff]
        %v1751 = vld [vmem:[%s3 + $0x150] sm:$0xff]
        %v1752 = vld [vmem:[%s3 + $0x158] sm:$0xff]
        %v1753 = vld [vmem:[%s3 + $0x160] sm:$0xff]
        %v1754 = vld [vmem:[%s3 + $0x168] sm:$0xff]
        %v1755 = vld [vmem:[%s3 + $0x170] sm:$0xff]
        %v1756 = vld [vmem:[%s3 + $0x178] sm:$0xff]
        %v1757 = vunpack.c.l.b16 %v1688
        %v1758 = vunpack.c.l.b16 %v1691
        %v1759 = vunpack.c.l.b16 %v1695
        %v1760 = vunpack.c.l.b16 %v1698
        %v1761 = vunpack.c.l.b16 %v1702
        %v1762 = vunpack.c.l.b16 %v1705
        %v1763 = vunpack.c.l.b16 %v1709
        %v1764 = vunpack.c.l.b16 %v1712
        %v1765 = vunpack.c.l.b16 %v1716
        %v1766 = vunpack.c.l.b16 %v1719
        %v1767 = vunpack.c.l.b16 %v1723
        %v1768 = vunpack.c.l.b16 %v1726
        %v1769 = vunpack.c.l.b16 %v1730
        %v1770 = vunpack.c.l.b16 %v1733
        %v1771 = vunpack.c.l.b16 %v1737
        %v1772 = vunpack.c.l.b16 %v1740
        %v1773 = vpack.c.b16 %v1758, %v1757
        %v1774 = vpack.c.b16 %v1760, %v1759
        %v1775 = vpack.c.b16 %v1762, %v1761
        %v1776 = vpack.c.b16 %v1764, %v1763
        %v1777 = vpack.c.b16 %v1766, %v1765
        %v1778 = vpack.c.b16 %v1768, %v1767
        %v1779 = vpack.c.b16 %v1770, %v1769
        %v1780 = vpack.c.b16 %v1772, %v1771
        %v1805 = vunpack.c.l.b16 %v1741
        %v1806 = vunpack.c.h.b16 %v1741
        %v1807 = vunpack.c.l.b16 %v1742
        %v1808 = vunpack.c.h.b16 %v1742
        %v1809 = vunpack.c.l.b16 %v1743
        %v1810 = vunpack.c.h.b16 %v1743
        %v1811 = vunpack.c.l.b16 %v1744
        %v1812 = vunpack.c.h.b16 %v1744
        %v1813 = vunpack.c.l.b16 %v1745
        %v1814 = vunpack.c.h.b16 %v1745
        %v1815 = vunpack.c.l.b16 %v1746
        %v1816 = vunpack.c.h.b16 %v1746
        %v1817 = vunpack.c.l.b16 %v1747
        %v1818 = vunpack.c.h.b16 %v1747
        %v1819 = vunpack.c.l.b16 %v1748
        %v1820 = vunpack.c.h.b16 %v1748
        %v1821 = vunpack.c.l.b16 %v1749
        %v1822 = vunpack.c.h.b16 %v1749
        %v1823 = vunpack.c.l.b16 %v1750
        %v1824 = vunpack.c.h.b16 %v1750
        %v1825 = vunpack.c.l.b16 %v1751
        %v1826 = vunpack.c.h.b16 %v1751
        %v1827 = vunpack.c.l.b16 %v1752
        %v1828 = vunpack.c.h.b16 %v1752
        %v1829 = vunpack.c.l.b16 %v1753
        %v1830 = vunpack.c.h.b16 %v1753
        %v1831 = vunpack.c.l.b16 %v1754
        %v1832 = vunpack.c.h.b16 %v1754
        %v1833 = vunpack.c.l.b16 %v1755
        %v1834 = vunpack.c.h.b16 %v1755
        %v1835 = vunpack.c.l.b16 %v1756
        %v1836 = vunpack.c.h.b16 %v1756
        %v1837 = vpack.c.b16 %v1807, %v1805
        %v1838 = vpack.c.b16 %v1808, %v1806
        %v1839 = vpack.c.b16 %v1811, %v1809
        %v1840 = vpack.c.b16 %v1812, %v1810
        %v1841 = vpack.c.b16 %v1815, %v1813
        %v1842 = vpack.c.b16 %v1816, %v1814
        %v1843 = vpack.c.b16 %v1819, %v1817
        %v1844 = vpack.c.b16 %v1820, %v1818
        %v1845 = vpack.c.b16 %v1823, %v1821
        %v1846 = vpack.c.b16 %v1824, %v1822
        %v1847 = vpack.c.b16 %v1827, %v1825
        %v1848 = vpack.c.b16 %v1828, %v1826
        %v1849 = vpack.c.b16 %v1831, %v1829
        %v1850 = vpack.c.b16 %v1832, %v1830
        %v1851 = vpack.c.b16 %v1835, %v1833
        %v1852 = vpack.c.b16 %v1836, %v1834
        %1869 = vmatpush.bf16.msra.mxu0 %v1851
        %1870 = vmatpush.bf16.msra.mxu0 %v1849
        %1871 = vmatpush.bf16.msra.mxu0 %v1847
        %1872 = vmatpush.bf16.msra.mxu0 %v1845
        %1873 = vmatpush.bf16.msra.mxu0 %v1843
        %1874 = vmatpush.bf16.msra.mxu0 %v1841
        %1875 = vmatpush.bf16.msra.mxu0 %v1839
        %1876 = vmatpush.bf16.msra.mxu0 %v1837
        %1877 = vmatmul.bf16.gmra.mxu0 %v1773
        %v1878 = vpop.f32.mrf.mxu0
        %v1879 = vadd.f32 0.0, %v1878
        %v1880 = vpop.f32.mrf.mxu0
        %v1881 = vadd.f32 0.0, %v1880
        %1882 = vmatmul.bf16.gmra.mxu0 %v1774
        %v1883 = vpop.f32.mrf.mxu0
        %v1884 = vadd.f32 0.0, %v1883
        %v1885 = vpop.f32.mrf.mxu0
        %v1886 = vadd.f32 0.0, %v1885
        %1887 = vmatmul.bf16.gmra.mxu0 %v1775
        %v1888 = vpop.f32.mrf.mxu0
        %v1889 = vadd.f32 0.0, %v1888
        %v1890 = vpop.f32.mrf.mxu0
        %v1891 = vadd.f32 0.0, %v1890
        %1892 = vmatmul.bf16.gmra.mxu0 %v1776
        %v1893 = vpop.f32.mrf.mxu0
        %v1894 = vadd.f32 0.0, %v1893
        %v1895 = vpop.f32.mrf.mxu0
        %v1896 = vadd.f32 0.0, %v1895
        %1897 = vmatmul.bf16.gmra.mxu0 %v1777
        %v1898 = vpop.f32.mrf.mxu0
        %v1899 = vadd.f32 0.0, %v1898
        %v1900 = vpop.f32.mrf.mxu0
        %v1901 = vadd.f32 0.0, %v1900
        %1902 = vmatmul.bf16.gmra.mxu0 %v1778
        %v1903 = vpop.f32.mrf.mxu0
        %v1904 = vadd.f32 0.0, %v1903
        %v1905 = vpop.f32.mrf.mxu0
        %v1906 = vadd.f32 0.0, %v1905
        %1907 = vmatmul.bf16.gmra.mxu0 %v1779
        %v1908 = vpop.f32.mrf.mxu0
        %v1909 = vadd.f32 0.0, %v1908
        %v1910 = vpop.f32.mrf.mxu0
        %v1911 = vadd.f32 0.0, %v1910
        %1912 = vmatmul.bf16.gmra.mxu0 %v1780
        %v1913 = vpop.f32.mrf.mxu0
        %v1914 = vadd.f32 0.0, %v1913
        %v1915 = vpop.f32.mrf.mxu0
        %v1916 = vadd.f32 0.0, %v1915
        %1917 = vdwg.mxu0
        %1918 = vmatpush.bf16.msra.mxu0 %v1852
        %1919 = vmatpush.bf16.msra.mxu0 %v1850
        %1920 = vmatpush.bf16.msra.mxu0 %v1848
        %1921 = vmatpush.bf16.msra.mxu0 %v1846
        %1922 = vmatpush.bf16.msra.mxu0 %v1844
        %1923 = vmatpush.bf16.msra.mxu0 %v1842
        %1924 = vmatpush.bf16.msra.mxu0 %v1840
        %1925 = vmatpush.bf16.msra.mxu0 %v1838
        %1926 = vmatmul.bf16.gmra.mxu0 %v1773
        %v1927 = vpop.f32.mrf.mxu0
        %v1928 = vadd.f32 0.0, %v1927
        %v1929 = vpop.f32.mrf.mxu0
        %v1930 = vadd.f32 0.0, %v1929
        %1931 = vmatmul.bf16.gmra.mxu0 %v1774
        %v1932 = vpop.f32.mrf.mxu0
        %v1933 = vadd.f32 0.0, %v1932
        %v1934 = vpop.f32.mrf.mxu0
        %v1935 = vadd.f32 0.0, %v1934
        %1936 = vmatmul.bf16.gmra.mxu0 %v1775
        %v1937 = vpop.f32.mrf.mxu0
        %v1938 = vadd.f32 0.0, %v1937
        %v1939 = vpop.f32.mrf.mxu0
        %v1940 = vadd.f32 0.0, %v1939
        %1941 = vmatmul.bf16.gmra.mxu0 %v1776
        %v1942 = vpop.f32.mrf.mxu0
        %v1943 = vadd.f32 0.0, %v1942
        %v1944 = vpop.f32.mrf.mxu0
        %v1945 = vadd.f32 0.0, %v1944
        %1946 = vmatmul.bf16.gmra.mxu0 %v1777
        %v1947 = vpop.f32.mrf.mxu0
        %v1948 = vadd.f32 0.0, %v1947
        %v1949 = vpop.f32.mrf.mxu0
        %v1950 = vadd.f32 0.0, %v1949
        %1951 = vmatmul.bf16.gmra.mxu0 %v1778
        %v1952 = vpop.f32.mrf.mxu0
        %v1953 = vadd.f32 0.0, %v1952
        %v1954 = vpop.f32.mrf.mxu0
        %v1955 = vadd.f32 0.0, %v1954
        %1956 = vmatmul.bf16.gmra.mxu0 %v1779
        %v1957 = vpop.f32.mrf.mxu0
        %v1958 = vadd.f32 0.0, %v1957
        %v1959 = vpop.f32.mrf.mxu0
        %v1960 = vadd.f32 0.0, %v1959
        %1961 = vmatmul.bf16.gmra.mxu0 %v1780
        %v1962 = vpop.f32.mrf.mxu0
        %v1963 = vadd.f32 0.0, %v1962
        %v1964 = vpop.f32.mrf.mxu0
        %v1965 = vadd.f32 0.0, %v1964
        %1966 = vdwg.mxu0
        %v1967 = vadd.f32 %v1586, %v1879
        %v1968 = vadd.f32 %v1635, %v1928
        %v1969 = vadd.f32 %v1588, %v1881
        %v1970 = vadd.f32 %v1637, %v1930
        %v1971 = vadd.f32 %v1591, %v1884
        %v1972 = vadd.f32 %v1640, %v1933
        %v1973 = vadd.f32 %v1593, %v1886
        %v1974 = vadd.f32 %v1642, %v1935
        %v1975 = vadd.f32 %v1596, %v1889
        %v1976 = vadd.f32 %v1645, %v1938
        %v1977 = vadd.f32 %v1598, %v1891
        %v1978 = vadd.f32 %v1647, %v1940
        %v1979 = vadd.f32 %v1601, %v1894
        %v1980 = vadd.f32 %v1650, %v1943
        %v1981 = vadd.f32 %v1603, %v1896
        %v1982 = vadd.f32 %v1652, %v1945
        %v1983 = vadd.f32 %v1606, %v1899
        %v1984 = vadd.f32 %v1655, %v1948
        %v1985 = vadd.f32 %v1608, %v1901
        %v1986 = vadd.f32 %v1657, %v1950
        %v1987 = vadd.f32 %v1611, %v1904
        %v1988 = vadd.f32 %v1660, %v1953
        %v1989 = vadd.f32 %v1613, %v1906
        %v1990 = vadd.f32 %v1662, %v1955
        %v1991 = vadd.f32 %v1616, %v1909
        %v1992 = vadd.f32 %v1665, %v1958
        %v1993 = vadd.f32 %v1618, %v1911
        %v1994 = vadd.f32 %v1667, %v1960
        %v1995 = vadd.f32 %v1621, %v1914
        %v1996 = vadd.f32 %v1670, %v1963
        %v1997 = vadd.f32 %v1623, %v1916
        %v1998 = vadd.f32 %v1672, %v1965
        %s1999 = scalar_lea.vmem [#allocation2], 12
        %v2000 = vld [vmem:[%s1999] sm:$0xf]
        %v2001 = vld [vmem:[%s1999 + $0x4] sm:$0xf]
        %v2002 = vld [vmem:[%s1999 + $0x8] sm:$0x1]
        %v2003 = vld [vmem:[%s1999 + $0xc] sm:$0xf]
        %v2004 = vld [vmem:[%s1999 + $0x10] sm:$0xf]
        %v2005 = vld [vmem:[%s1999 + $0x14] sm:$0x1]
        %v2006 = vld [vmem:[%s1999 + $0x18] sm:$0xf]
        %v2007 = vld [vmem:[%s1999 + $0x1c] sm:$0xf]
        %v2008 = vld [vmem:[%s1999 + $0x20] sm:$0x1]
        %v2009 = vld [vmem:[%s1999 + $0x24] sm:$0xf]
        %v2010 = vld [vmem:[%s1999 + $0x28] sm:$0xf]
        %v2011 = vld [vmem:[%s1999 + $0x2c] sm:$0x1]
        %v2012 = vld [vmem:[%s1999 + $0x30] sm:$0xf]
        %v2013 = vld [vmem:[%s1999 + $0x34] sm:$0xf]
        %v2014 = vld [vmem:[%s1999 + $0x38] sm:$0x1]
        %v2015 = vld [vmem:[%s1999 + $0x3c] sm:$0xf]
        %v2016 = vld [vmem:[%s1999 + $0x40] sm:$0xf]
        %v2017 = vld [vmem:[%s1999 + $0x44] sm:$0x1]
        %v2018 = vld [vmem:[%s1999 + $0x48] sm:$0xf]
        %v2019 = vld [vmem:[%s1999 + $0x4c] sm:$0xf]
        %v2020 = vld [vmem:[%s1999 + $0x50] sm:$0x1]
        %v2021 = vld [vmem:[%s1999 + $0x54] sm:$0xf]
        %v2022 = vld [vmem:[%s1999 + $0x58] sm:$0xf]
        %v2023 = vld [vmem:[%s1999 + $0x5c] sm:$0x1]
        %v2024 = vld [vmem:[%s3 + $0x180] sm:$0xff]
        %v2025 = vld [vmem:[%s3 + $0x188] sm:$0xff]
        %v2026 = vld [vmem:[%s3 + $0x190] sm:$0xff]
        %v2027 = vld [vmem:[%s3 + $0x198] sm:$0xff]
        %v2028 = vld [vmem:[%s3 + $0x1a0] sm:$0xff]
        %v2029 = vld [vmem:[%s3 + $0x1a8] sm:$0xff]
        %v2030 = vld [vmem:[%s3 + $0x1b0] sm:$0xff]
        %v2031 = vld [vmem:[%s3 + $0x1b8] sm:$0xff]
        %v2032 = vld [vmem:[%s3 + $0x1c0] sm:$0xff]
        %v2033 = vld [vmem:[%s3 + $0x1c8] sm:$0xff]
        %v2034 = vld [vmem:[%s3 + $0x1d0] sm:$0xff]
        %v2035 = vld [vmem:[%s3 + $0x1d8] sm:$0xff]
        %v2036 = vld [vmem:[%s3 + $0x1e0] sm:$0xff]
        %v2037 = vld [vmem:[%s3 + $0x1e8] sm:$0xff]
        %v2038 = vld [vmem:[%s3 + $0x1f0] sm:$0xff]
        %v2039 = vld [vmem:[%s3 + $0x1f8] sm:$0xff]
        %v2056 = vunpack.c.l.b16 %v2000
        %v2057 = vunpack.c.l.b16 %v2001
        %v2058 = vunpack.c.l.b16 %v2003
        %v2059 = vunpack.c.l.b16 %v2004
        %v2060 = vunpack.c.l.b16 %v2006
        %v2061 = vunpack.c.l.b16 %v2007
        %v2062 = vunpack.c.l.b16 %v2009
        %v2063 = vunpack.c.l.b16 %v2010
        %v2064 = vunpack.c.l.b16 %v2012
        %v2065 = vunpack.c.l.b16 %v2013
        %v2066 = vunpack.c.l.b16 %v2015
        %v2067 = vunpack.c.l.b16 %v2016
        %v2068 = vunpack.c.l.b16 %v2018
        %v2069 = vunpack.c.l.b16 %v2019
        %v2070 = vunpack.c.l.b16 %v2021
        %v2071 = vunpack.c.l.b16 %v2022
        %v2072 = vpack.c.b16 %v2057, %v2056
        %v2073 = vpack.c.b16 %v2059, %v2058
        %v2074 = vpack.c.b16 %v2061, %v2060
        %v2075 = vpack.c.b16 %v2063, %v2062
        %v2076 = vpack.c.b16 %v2065, %v2064
        %v2077 = vpack.c.b16 %v2067, %v2066
        %v2078 = vpack.c.b16 %v2069, %v2068
        %v2079 = vpack.c.b16 %v2071, %v2070
        %v2104 = vunpack.c.l.b16 %v2024
        %v2105 = vunpack.c.h.b16 %v2024
        %v2106 = vunpack.c.l.b16 %v2025
        %v2107 = vunpack.c.h.b16 %v2025
        %v2108 = vunpack.c.l.b16 %v2026
        %v2109 = vunpack.c.h.b16 %v2026
        %v2110 = vunpack.c.l.b16 %v2027
        %v2111 = vunpack.c.h.b16 %v2027
        %v2112 = vunpack.c.l.b16 %v2028
        %v2113 = vunpack.c.h.b16 %v2028
        %v2114 = vunpack.c.l.b16 %v2029
        %v2115 = vunpack.c.h.b16 %v2029
        %v2116 = vunpack.c.l.b16 %v2030
        %v2117 = vunpack.c.h.b16 %v2030
        %v2118 = vunpack.c.l.b16 %v2031
        %v2119 = vunpack.c.h.b16 %v2031
        %v2120 = vunpack.c.l.b16 %v2032
        %v2121 = vunpack.c.h.b16 %v2032
        %v2122 = vunpack.c.l.b16 %v2033
        %v2123 = vunpack.c.h.b16 %v2033
        %v2124 = vunpack.c.l.b16 %v2034
        %v2125 = vunpack.c.h.b16 %v2034
        %v2126 = vunpack.c.l.b16 %v2035
        %v2127 = vunpack.c.h.b16 %v2035
        %v2128 = vunpack.c.l.b16 %v2036
        %v2129 = vunpack.c.h.b16 %v2036
        %v2130 = vunpack.c.l.b16 %v2037
        %v2131 = vunpack.c.h.b16 %v2037
        %v2132 = vunpack.c.l.b16 %v2038
        %v2133 = vunpack.c.h.b16 %v2038
        %v2134 = vunpack.c.l.b16 %v2039
        %v2135 = vunpack.c.h.b16 %v2039
        %v2136 = vpack.c.b16 %v2106, %v2104
        %v2137 = vpack.c.b16 %v2107, %v2105
        %v2138 = vpack.c.b16 %v2110, %v2108
        %v2139 = vpack.c.b16 %v2111, %v2109
        %v2140 = vpack.c.b16 %v2114, %v2112
        %v2141 = vpack.c.b16 %v2115, %v2113
        %v2142 = vpack.c.b16 %v2118, %v2116
        %v2143 = vpack.c.b16 %v2119, %v2117
        %v2144 = vpack.c.b16 %v2122, %v2120
        %v2145 = vpack.c.b16 %v2123, %v2121
        %v2146 = vpack.c.b16 %v2126, %v2124
        %v2147 = vpack.c.b16 %v2127, %v2125
        %v2148 = vpack.c.b16 %v2130, %v2128
        %v2149 = vpack.c.b16 %v2131, %v2129
        %v2150 = vpack.c.b16 %v2134, %v2132
        %v2151 = vpack.c.b16 %v2135, %v2133
        %2168 = vmatpush.bf16.msra.mxu0 %v2150
        %2169 = vmatpush.bf16.msra.mxu0 %v2148
        %2170 = vmatpush.bf16.msra.mxu0 %v2146
        %2171 = vmatpush.bf16.msra.mxu0 %v2144
        %2172 = vmatpush.bf16.msra.mxu0 %v2142
        %2173 = vmatpush.bf16.msra.mxu0 %v2140
        %2174 = vmatpush.bf16.msra.mxu0 %v2138
        %2175 = vmatpush.bf16.msra.mxu0 %v2136
        %2176 = vmatmul.bf16.gmra.mxu0 %v2072
        %v2177 = vpop.f32.mrf.mxu0
        %v2178 = vadd.f32 0.0, %v2177
        %v2179 = vpop.f32.mrf.mxu0
        %v2180 = vadd.f32 0.0, %v2179
        %2181 = vmatmul.bf16.gmra.mxu0 %v2073
        %v2182 = vpop.f32.mrf.mxu0
        %v2183 = vadd.f32 0.0, %v2182
        %v2184 = vpop.f32.mrf.mxu0
        %v2185 = vadd.f32 0.0, %v2184
        %2186 = vmatmul.bf16.gmra.mxu0 %v2074
        %v2187 = vpop.f32.mrf.mxu0
        %v2188 = vadd.f32 0.0, %v2187
        %v2189 = vpop.f32.mrf.mxu0
        %v2190 = vadd.f32 0.0, %v2189
        %2191 = vmatmul.bf16.gmra.mxu0 %v2075
        %v2192 = vpop.f32.mrf.mxu0
        %v2193 = vadd.f32 0.0, %v2192
        %v2194 = vpop.f32.mrf.mxu0
        %v2195 = vadd.f32 0.0, %v2194
        %2196 = vmatmul.bf16.gmra.mxu0 %v2076
        %v2197 = vpop.f32.mrf.mxu0
        %v2198 = vadd.f32 0.0, %v2197
        %v2199 = vpop.f32.mrf.mxu0
        %v2200 = vadd.f32 0.0, %v2199
        %2201 = vmatmul.bf16.gmra.mxu0 %v2077
        %v2202 = vpop.f32.mrf.mxu0
        %v2203 = vadd.f32 0.0, %v2202
        %v2204 = vpop.f32.mrf.mxu0
        %v2205 = vadd.f32 0.0, %v2204
        %2206 = vmatmul.bf16.gmra.mxu0 %v2078
        %v2207 = vpop.f32.mrf.mxu0
        %v2208 = vadd.f32 0.0, %v2207
        %v2209 = vpop.f32.mrf.mxu0
        %v2210 = vadd.f32 0.0, %v2209
        %2211 = vmatmul.bf16.gmra.mxu0 %v2079
        %v2212 = vpop.f32.mrf.mxu0
        %v2213 = vadd.f32 0.0, %v2212
        %v2214 = vpop.f32.mrf.mxu0
        %v2215 = vadd.f32 0.0, %v2214
        %2216 = vdwg.mxu0
        %2217 = vmatpush.bf16.msra.mxu0 %v2151
        %2218 = vmatpush.bf16.msra.mxu0 %v2149
        %2219 = vmatpush.bf16.msra.mxu0 %v2147
        %2220 = vmatpush.bf16.msra.mxu0 %v2145
        %2221 = vmatpush.bf16.msra.mxu0 %v2143
        %2222 = vmatpush.bf16.msra.mxu0 %v2141
        %2223 = vmatpush.bf16.msra.mxu0 %v2139
        %2224 = vmatpush.bf16.msra.mxu0 %v2137
        %2225 = vmatmul.bf16.gmra.mxu0 %v2072
        %v2226 = vpop.f32.mrf.mxu0
        %v2227 = vadd.f32 0.0, %v2226
        %v2228 = vpop.f32.mrf.mxu0
        %v2229 = vadd.f32 0.0, %v2228
        %2230 = vmatmul.bf16.gmra.mxu0 %v2073
        %v2231 = vpop.f32.mrf.mxu0
        %v2232 = vadd.f32 0.0, %v2231
        %v2233 = vpop.f32.mrf.mxu0
        %v2234 = vadd.f32 0.0, %v2233
        %2235 = vmatmul.bf16.gmra.mxu0 %v2074
        %v2236 = vpop.f32.mrf.mxu0
        %v2237 = vadd.f32 0.0, %v2236
        %v2238 = vpop.f32.mrf.mxu0
        %v2239 = vadd.f32 0.0, %v2238
        %2240 = vmatmul.bf16.gmra.mxu0 %v2075
        %v2241 = vpop.f32.mrf.mxu0
        %v2242 = vadd.f32 0.0, %v2241
        %v2243 = vpop.f32.mrf.mxu0
        %v2244 = vadd.f32 0.0, %v2243
        %2245 = vmatmul.bf16.gmra.mxu0 %v2076
        %v2246 = vpop.f32.mrf.mxu0
        %v2247 = vadd.f32 0.0, %v2246
        %v2248 = vpop.f32.mrf.mxu0
        %v2249 = vadd.f32 0.0, %v2248
        %2250 = vmatmul.bf16.gmra.mxu0 %v2077
        %v2251 = vpop.f32.mrf.mxu0
        %v2252 = vadd.f32 0.0, %v2251
        %v2253 = vpop.f32.mrf.mxu0
        %v2254 = vadd.f32 0.0, %v2253
        %2255 = vmatmul.bf16.gmra.mxu0 %v2078
        %v2256 = vpop.f32.mrf.mxu0
        %v2257 = vadd.f32 0.0, %v2256
        %v2258 = vpop.f32.mrf.mxu0
        %v2259 = vadd.f32 0.0, %v2258
        %2260 = vmatmul.bf16.gmra.mxu0 %v2079
        %v2261 = vpop.f32.mrf.mxu0
        %v2262 = vadd.f32 0.0, %v2261
        %v2263 = vpop.f32.mrf.mxu0
        %v2264 = vadd.f32 0.0, %v2263
        %2265 = vdwg.mxu0
        %v2266 = vadd.f32 %v1967, %v2178
        %v2267 = vadd.f32 %v1968, %v2227
        %v2268 = vadd.f32 %v1969, %v2180
        %v2269 = vadd.f32 %v1970, %v2229
        %v2270 = vadd.f32 %v1971, %v2183
        %v2271 = vadd.f32 %v1972, %v2232
        %v2272 = vadd.f32 %v1973, %v2185
        %v2273 = vadd.f32 %v1974, %v2234
        %v2274 = vadd.f32 %v1975, %v2188
        %v2275 = vadd.f32 %v1976, %v2237
        %v2276 = vadd.f32 %v1977, %v2190
        %v2277 = vadd.f32 %v1978, %v2239
        %v2278 = vadd.f32 %v1979, %v2193
        %v2279 = vadd.f32 %v1980, %v2242
        %v2280 = vadd.f32 %v1981, %v2195
        %v2281 = vadd.f32 %v1982, %v2244
        %v2282 = vadd.f32 %v1983, %v2198
        %v2283 = vadd.f32 %v1984, %v2247
        %v2284 = vadd.f32 %v1985, %v2200
        %v2285 = vadd.f32 %v1986, %v2249
        %v2286 = vadd.f32 %v1987, %v2203
        %v2287 = vadd.f32 %v1988, %v2252
        %v2288 = vadd.f32 %v1989, %v2205
        %v2289 = vadd.f32 %v1990, %v2254
        %v2290 = vadd.f32 %v1991, %v2208
        %v2291 = vadd.f32 %v1992, %v2257
        %v2292 = vadd.f32 %v1993, %v2210
        %v2293 = vadd.f32 %v1994, %v2259
        %v2294 = vadd.f32 %v1995, %v2213
        %v2295 = vadd.f32 %v1996, %v2262
        %v2296 = vadd.f32 %v1997, %v2215
        %v2297 = vadd.f32 %v1998, %v2264
        %v2299 = vshrl.u32 %v2000, 16
        %v2301 = vrot.slane %v2299, 4
        %v2302 = vshll.u32 %v2000, 16
        %v2304 = vrot.slane %v2302, 5
        %v2305 = vor.u32 %v2301, %v2304
        %v2306 = vrot.slane %v2305, 4
        %v2308 = vshll.u32 %v2001, 16
        %v2310 = vrot.slane %v2308, 5
        %v2311 = vsel %vm1029, %v2306, %v2310
        %v2312 = vshrl.u32 %v2001, 16
        %v2314 = vrot.slane %v2312, 4
        %v2315 = vor.u32 %v2314, %v2310
        %v2316 = vrot.slane %v2315, 4
        %v2318 = vshll.u32 %v2002, 16
        %v2320 = vrot.slane %v2318, 5
        %v2321 = vsel %vm1029, %v2316, %v2320
        %v2323 = vshrl.u32 %v2003, 16
        %v2325 = vrot.slane %v2323, 4
        %v2326 = vshll.u32 %v2003, 16
        %v2328 = vrot.slane %v2326, 5
        %v2329 = vor.u32 %v2325, %v2328
        %v2330 = vrot.slane %v2329, 4
        %v2332 = vshll.u32 %v2004, 16
        %v2334 = vrot.slane %v2332, 5
        %v2335 = vsel %vm1029, %v2330, %v2334
        %v2336 = vshrl.u32 %v2004, 16
        %v2338 = vrot.slane %v2336, 4
        %v2339 = vor.u32 %v2338, %v2334
        %v2340 = vrot.slane %v2339, 4
        %v2342 = vshll.u32 %v2005, 16
        %v2344 = vrot.slane %v2342, 5
        %v2345 = vsel %vm1029, %v2340, %v2344
        %v2347 = vshrl.u32 %v2006, 16
        %v2349 = vrot.slane %v2347, 4
        %v2350 = vshll.u32 %v2006, 16
        %v2352 = vrot.slane %v2350, 5
        %v2353 = vor.u32 %v2349, %v2352
        %v2354 = vrot.slane %v2353, 4
        %v2356 = vshll.u32 %v2007, 16
        %v2358 = vrot.slane %v2356, 5
        %v2359 = vsel %vm1029, %v2354, %v2358
        %v2360 = vshrl.u32 %v2007, 16
        %v2362 = vrot.slane %v2360, 4
        %v2363 = vor.u32 %v2362, %v2358
        %v2364 = vrot.slane %v2363, 4
        %v2366 = vshll.u32 %v2008, 16
        %v2368 = vrot.slane %v2366, 5
        %v2369 = vsel %vm1029, %v2364, %v2368
        %v2371 = vshrl.u32 %v2009, 16
        %v2373 = vrot.slane %v2371, 4
        %v2374 = vshll.u32 %v2009, 16
        %v2376 = vrot.slane %v2374, 5
        %v2377 = vor.u32 %v2373, %v2376
        %v2378 = vrot.slane %v2377, 4
        %v2380 = vshll.u32 %v2010, 16
        %v2382 = vrot.slane %v2380, 5
        %v2383 = vsel %vm1029, %v2378, %v2382
        %v2384 = vshrl.u32 %v2010, 16
        %v2386 = vrot.slane %v2384, 4
        %v2387 = vor.u32 %v2386, %v2382
        %v2388 = vrot.slane %v2387, 4
        %v2390 = vshll.u32 %v2011, 16
        %v2392 = vrot.slane %v2390, 5
        %v2393 = vsel %vm1029, %v2388, %v2392
        %v2395 = vshrl.u32 %v2012, 16
        %v2397 = vrot.slane %v2395, 4
        %v2398 = vshll.u32 %v2012, 16
        %v2400 = vrot.slane %v2398, 5
        %v2401 = vor.u32 %v2397, %v2400
        %v2402 = vrot.slane %v2401, 4
        %v2404 = vshll.u32 %v2013, 16
        %v2406 = vrot.slane %v2404, 5
        %v2407 = vsel %vm1029, %v2402, %v2406
        %v2408 = vshrl.u32 %v2013, 16
        %v2410 = vrot.slane %v2408, 4
        %v2411 = vor.u32 %v2410, %v2406
        %v2412 = vrot.slane %v2411, 4
        %v2414 = vshll.u32 %v2014, 16
        %v2416 = vrot.slane %v2414, 5
        %v2417 = vsel %vm1029, %v2412, %v2416
        %v2419 = vshrl.u32 %v2015, 16
        %v2421 = vrot.slane %v2419, 4
        %v2422 = vshll.u32 %v2015, 16
        %v2424 = vrot.slane %v2422, 5
        %v2425 = vor.u32 %v2421, %v2424
        %v2426 = vrot.slane %v2425, 4
        %v2428 = vshll.u32 %v2016, 16
        %v2430 = vrot.slane %v2428, 5
        %v2431 = vsel %vm1029, %v2426, %v2430
        %v2432 = vshrl.u32 %v2016, 16
        %v2434 = vrot.slane %v2432, 4
        %v2435 = vor.u32 %v2434, %v2430
        %v2436 = vrot.slane %v2435, 4
        %v2438 = vshll.u32 %v2017, 16
        %v2440 = vrot.slane %v2438, 5
        %v2441 = vsel %vm1029, %v2436, %v2440
        %v2443 = vshrl.u32 %v2018, 16
        %v2445 = vrot.slane %v2443, 4
        %v2446 = vshll.u32 %v2018, 16
        %v2448 = vrot.slane %v2446, 5
        %v2449 = vor.u32 %v2445, %v2448
        %v2450 = vrot.slane %v2449, 4
        %v2452 = vshll.u32 %v2019, 16
        %v2454 = vrot.slane %v2452, 5
        %v2455 = vsel %vm1029, %v2450, %v2454
        %v2456 = vshrl.u32 %v2019, 16
        %v2458 = vrot.slane %v2456, 4
        %v2459 = vor.u32 %v2458, %v2454
        %v2460 = vrot.slane %v2459, 4
        %v2462 = vshll.u32 %v2020, 16
        %v2464 = vrot.slane %v2462, 5
        %v2465 = vsel %vm1029, %v2460, %v2464
        %v2467 = vshrl.u32 %v2021, 16
        %v2469 = vrot.slane %v2467, 4
        %v2470 = vshll.u32 %v2021, 16
        %v2472 = vrot.slane %v2470, 5
        %v2473 = vor.u32 %v2469, %v2472
        %v2474 = vrot.slane %v2473, 4
        %v2476 = vshll.u32 %v2022, 16
        %v2478 = vrot.slane %v2476, 5
        %v2479 = vsel %vm1029, %v2474, %v2478
        %v2480 = vshrl.u32 %v2022, 16
        %v2482 = vrot.slane %v2480, 4
        %v2483 = vor.u32 %v2482, %v2478
        %v2484 = vrot.slane %v2483, 4
        %v2486 = vshll.u32 %v2023, 16
        %v2488 = vrot.slane %v2486, 5
        %v2489 = vsel %vm1029, %v2484, %v2488
        %v2490 = vld [vmem:[%s3 + $0x200] sm:$0xff]
        %v2491 = vld [vmem:[%s3 + $0x208] sm:$0xff]
        %v2492 = vld [vmem:[%s3 + $0x210] sm:$0xff]
        %v2493 = vld [vmem:[%s3 + $0x218] sm:$0xff]
        %v2494 = vld [vmem:[%s3 + $0x220] sm:$0xff]
        %v2495 = vld [vmem:[%s3 + $0x228] sm:$0xff]
        %v2496 = vld [vmem:[%s3 + $0x230] sm:$0xff]
        %v2497 = vld [vmem:[%s3 + $0x238] sm:$0xff]
        %v2498 = vld [vmem:[%s3 + $0x240] sm:$0xff]
        %v2499 = vld [vmem:[%s3 + $0x248] sm:$0xff]
        %v2500 = vld [vmem:[%s3 + $0x250] sm:$0xff]
        %v2501 = vld [vmem:[%s3 + $0x258] sm:$0xff]
        %v2502 = vld [vmem:[%s3 + $0x260] sm:$0xff]
        %v2503 = vld [vmem:[%s3 + $0x268] sm:$0xff]
        %v2504 = vld [vmem:[%s3 + $0x270] sm:$0xff]
        %v2505 = vld [vmem:[%s3 + $0x278] sm:$0xff]
        %v2506 = vunpack.c.l.b16 %v2311
        %v2507 = vunpack.c.l.b16 %v2321
        %v2508 = vunpack.c.l.b16 %v2335
        %v2509 = vunpack.c.l.b16 %v2345
        %v2510 = vunpack.c.l.b16 %v2359
        %v2511 = vunpack.c.l.b16 %v2369
        %v2512 = vunpack.c.l.b16 %v2383
        %v2513 = vunpack.c.l.b16 %v2393
        %v2514 = vunpack.c.l.b16 %v2407
        %v2515 = vunpack.c.l.b16 %v2417
        %v2516 = vunpack.c.l.b16 %v2431
        %v2517 = vunpack.c.l.b16 %v2441
        %v2518 = vunpack.c.l.b16 %v2455
        %v2519 = vunpack.c.l.b16 %v2465
        %v2520 = vunpack.c.l.b16 %v2479
        %v2521 = vunpack.c.l.b16 %v2489
        %v2522 = vpack.c.b16 %v2507, %v2506
        %v2523 = vpack.c.b16 %v2509, %v2508
        %v2524 = vpack.c.b16 %v2511, %v2510
        %v2525 = vpack.c.b16 %v2513, %v2512
        %v2526 = vpack.c.b16 %v2515, %v2514
        %v2527 = vpack.c.b16 %v2517, %v2516
        %v2528 = vpack.c.b16 %v2519, %v2518
        %v2529 = vpack.c.b16 %v2521, %v2520
        %v2554 = vunpack.c.l.b16 %v2490
        %v2555 = vunpack.c.h.b16 %v2490
        %v2556 = vunpack.c.l.b16 %v2491
        %v2557 = vunpack.c.h.b16 %v2491
        %v2558 = vunpack.c.l.b16 %v2492
        %v2559 = vunpack.c.h.b16 %v2492
        %v2560 = vunpack.c.l.b16 %v2493
        %v2561 = vunpack.c.h.b16 %v2493
        %v2562 = vunpack.c.l.b16 %v2494
        %v2563 = vunpack.c.h.b16 %v2494
        %v2564 = vunpack.c.l.b16 %v2495
        %v2565 = vunpack.c.h.b16 %v2495
        %v2566 = vunpack.c.l.b16 %v2496
        %v2567 = vunpack.c.h.b16 %v2496
        %v2568 = vunpack.c.l.b16 %v2497
        %v2569 = vunpack.c.h.b16 %v2497
        %v2570 = vunpack.c.l.b16 %v2498
        %v2571 = vunpack.c.h.b16 %v2498
        %v2572 = vunpack.c.l.b16 %v2499
        %v2573 = vunpack.c.h.b16 %v2499
        %v2574 = vunpack.c.l.b16 %v2500
        %v2575 = vunpack.c.h.b16 %v2500
        %v2576 = vunpack.c.l.b16 %v2501
        %v2577 = vunpack.c.h.b16 %v2501
        %v2578 = vunpack.c.l.b16 %v2502
        %v2579 = vunpack.c.h.b16 %v2502
        %v2580 = vunpack.c.l.b16 %v2503
        %v2581 = vunpack.c.h.b16 %v2503
        %v2582 = vunpack.c.l.b16 %v2504
        %v2583 = vunpack.c.h.b16 %v2504
        %v2584 = vunpack.c.l.b16 %v2505
        %v2585 = vunpack.c.h.b16 %v2505
        %v2586 = vpack.c.b16 %v2556, %v2554
        %v2587 = vpack.c.b16 %v2557, %v2555
        %v2588 = vpack.c.b16 %v2560, %v2558
        %v2589 = vpack.c.b16 %v2561, %v2559
        %v2590 = vpack.c.b16 %v2564, %v2562
        %v2591 = vpack.c.b16 %v2565, %v2563
        %v2592 = vpack.c.b16 %v2568, %v2566
        %v2593 = vpack.c.b16 %v2569, %v2567
        %v2594 = vpack.c.b16 %v2572, %v2570
        %v2595 = vpack.c.b16 %v2573, %v2571
        %v2596 = vpack.c.b16 %v2576, %v2574
        %v2597 = vpack.c.b16 %v2577, %v2575
        %v2598 = vpack.c.b16 %v2580, %v2578
        %v2599 = vpack.c.b16 %v2581, %v2579
        %v2600 = vpack.c.b16 %v2584, %v2582
        %v2601 = vpack.c.b16 %v2585, %v2583
        %2618 = vmatpush.bf16.msra.mxu0 %v2600
        %2619 = vmatpush.bf16.msra.mxu0 %v2598
        %2620 = vmatpush.bf16.msra.mxu0 %v2596
        %2621 = vmatpush.bf16.msra.mxu0 %v2594
        %2622 = vmatpush.bf16.msra.mxu0 %v2592
        %2623 = vmatpush.bf16.msra.mxu0 %v2590
        %2624 = vmatpush.bf16.msra.mxu0 %v2588
        %2625 = vmatpush.bf16.msra.mxu0 %v2586
        %2626 = vmatmul.bf16.gmra.mxu0 %v2522
        %v2627 = vpop.f32.mrf.mxu0
        %v2628 = vadd.f32 0.0, %v2627
        %v2629 = vpop.f32.mrf.mxu0
        %v2630 = vadd.f32 0.0, %v2629
        %2631 = vmatmul.bf16.gmra.mxu0 %v2523
        %v2632 = vpop.f32.mrf.mxu0
        %v2633 = vadd.f32 0.0, %v2632
        %v2634 = vpop.f32.mrf.mxu0
        %v2635 = vadd.f32 0.0, %v2634
        %2636 = vmatmul.bf16.gmra.mxu0 %v2524
        %v2637 = vpop.f32.mrf.mxu0
        %v2638 = vadd.f32 0.0, %v2637
        %v2639 = vpop.f32.mrf.mxu0
        %v2640 = vadd.f32 0.0, %v2639
        %2641 = vmatmul.bf16.gmra.mxu0 %v2525
        %v2642 = vpop.f32.mrf.mxu0
        %v2643 = vadd.f32 0.0, %v2642
        %v2644 = vpop.f32.mrf.mxu0
        %v2645 = vadd.f32 0.0, %v2644
        %2646 = vmatmul.bf16.gmra.mxu0 %v2526
        %v2647 = vpop.f32.mrf.mxu0
        %v2648 = vadd.f32 0.0, %v2647
        %v2649 = vpop.f32.mrf.mxu0
        %v2650 = vadd.f32 0.0, %v2649
        %2651 = vmatmul.bf16.gmra.mxu0 %v2527
        %v2652 = vpop.f32.mrf.mxu0
        %v2653 = vadd.f32 0.0, %v2652
        %v2654 = vpop.f32.mrf.mxu0
        %v2655 = vadd.f32 0.0, %v2654
        %2656 = vmatmul.bf16.gmra.mxu0 %v2528
        %v2657 = vpop.f32.mrf.mxu0
        %v2658 = vadd.f32 0.0, %v2657
        %v2659 = vpop.f32.mrf.mxu0
        %v2660 = vadd.f32 0.0, %v2659
        %2661 = vmatmul.bf16.gmra.mxu0 %v2529
        %v2662 = vpop.f32.mrf.mxu0
        %v2663 = vadd.f32 0.0, %v2662
        %v2664 = vpop.f32.mrf.mxu0
        %v2665 = vadd.f32 0.0, %v2664
        %2666 = vdwg.mxu0
        %2667 = vmatpush.bf16.msra.mxu0 %v2601
        %2668 = vmatpush.bf16.msra.mxu0 %v2599
        %2669 = vmatpush.bf16.msra.mxu0 %v2597
        %2670 = vmatpush.bf16.msra.mxu0 %v2595
        %2671 = vmatpush.bf16.msra.mxu0 %v2593
        %2672 = vmatpush.bf16.msra.mxu0 %v2591
        %2673 = vmatpush.bf16.msra.mxu0 %v2589
        %2674 = vmatpush.bf16.msra.mxu0 %v2587
        %2675 = vmatmul.bf16.gmra.mxu0 %v2522
        %v2676 = vpop.f32.mrf.mxu0
        %v2677 = vadd.f32 0.0, %v2676
        %v2678 = vpop.f32.mrf.mxu0
        %v2679 = vadd.f32 0.0, %v2678
        %2680 = vmatmul.bf16.gmra.mxu0 %v2523
        %v2681 = vpop.f32.mrf.mxu0
        %v2682 = vadd.f32 0.0, %v2681
        %v2683 = vpop.f32.mrf.mxu0
        %v2684 = vadd.f32 0.0, %v2683
        %2685 = vmatmul.bf16.gmra.mxu0 %v2524
        %v2686 = vpop.f32.mrf.mxu0
        %v2687 = vadd.f32 0.0, %v2686
        %v2688 = vpop.f32.mrf.mxu0
        %v2689 = vadd.f32 0.0, %v2688
        %2690 = vmatmul.bf16.gmra.mxu0 %v2525
        %v2691 = vpop.f32.mrf.mxu0
        %v2692 = vadd.f32 0.0, %v2691
        %v2693 = vpop.f32.mrf.mxu0
        %v2694 = vadd.f32 0.0, %v2693
        %2695 = vmatmul.bf16.gmra.mxu0 %v2526
        %v2696 = vpop.f32.mrf.mxu0
        %v2697 = vadd.f32 0.0, %v2696
        %v2698 = vpop.f32.mrf.mxu0
        %v2699 = vadd.f32 0.0, %v2698
        %2700 = vmatmul.bf16.gmra.mxu0 %v2527
        %v2701 = vpop.f32.mrf.mxu0
        %v2702 = vadd.f32 0.0, %v2701
        %v2703 = vpop.f32.mrf.mxu0
        %v2704 = vadd.f32 0.0, %v2703
        %2705 = vmatmul.bf16.gmra.mxu0 %v2528
        %v2706 = vpop.f32.mrf.mxu0
        %v2707 = vadd.f32 0.0, %v2706
        %v2708 = vpop.f32.mrf.mxu0
        %v2709 = vadd.f32 0.0, %v2708
        %2710 = vmatmul.bf16.gmra.mxu0 %v2529
        %v2711 = vpop.f32.mrf.mxu0
        %v2712 = vadd.f32 0.0, %v2711
        %v2713 = vpop.f32.mrf.mxu0
        %v2714 = vadd.f32 0.0, %v2713
        %2715 = vdwg.mxu0
        %v2716 = vadd.f32 %v2266, %v2628
        %v2717 = vadd.f32 %v2267, %v2677
        %v2718 = vadd.f32 %v2268, %v2630
        %v2719 = vadd.f32 %v2269, %v2679
        %v2720 = vadd.f32 %v2270, %v2633
        %v2721 = vadd.f32 %v2271, %v2682
        %v2722 = vadd.f32 %v2272, %v2635
        %v2723 = vadd.f32 %v2273, %v2684
        %v2724 = vadd.f32 %v2274, %v2638
        %v2725 = vadd.f32 %v2275, %v2687
        %v2726 = vadd.f32 %v2276, %v2640
        %v2727 = vadd.f32 %v2277, %v2689
        %v2728 = vadd.f32 %v2278, %v2643
        %v2729 = vadd.f32 %v2279, %v2692
        %v2730 = vadd.f32 %v2280, %v2645
        %v2731 = vadd.f32 %v2281, %v2694
        %v2732 = vadd.f32 %v2282, %v2648
        %v2733 = vadd.f32 %v2283, %v2697
        %v2734 = vadd.f32 %v2284, %v2650
        %v2735 = vadd.f32 %v2285, %v2699
        %v2736 = vadd.f32 %v2286, %v2653
        %v2737 = vadd.f32 %v2287, %v2702
        %v2738 = vadd.f32 %v2288, %v2655
        %v2739 = vadd.f32 %v2289, %v2704
        %v2740 = vadd.f32 %v2290, %v2658
        %v2741 = vadd.f32 %v2291, %v2707
        %v2742 = vadd.f32 %v2292, %v2660
        %v2743 = vadd.f32 %v2293, %v2709
        %v2744 = vadd.f32 %v2294, %v2663
        %v2745 = vadd.f32 %v2295, %v2712
        %v2746 = vadd.f32 %v2296, %v2665
        %v2747 = vadd.f32 %v2297, %v2714
        %v2756 = vrot.slane %v2000, 5
        %v2757 = vrot.slane %v2756, 4
        %v2758 = vrot.slane %v2001, 5
        %v2759 = vsel %vm1684, %v2757, %v2758
        %v2760 = vrot.slane %v2758, 4
        %v2761 = vrot.slane %v2002, 5
        %v2762 = vsel %vm1684, %v2760, %v2761
        %v2763 = vrot.slane %v2003, 5
        %v2764 = vrot.slane %v2763, 4
        %v2765 = vrot.slane %v2004, 5
        %v2766 = vsel %vm1684, %v2764, %v2765
        %v2767 = vrot.slane %v2765, 4
        %v2768 = vrot.slane %v2005, 5
        %v2769 = vsel %vm1684, %v2767, %v2768
        %v2770 = vrot.slane %v2006, 5
        %v2771 = vrot.slane %v2770, 4
        %v2772 = vrot.slane %v2007, 5
        %v2773 = vsel %vm1684, %v2771, %v2772
        %v2774 = vrot.slane %v2772, 4
        %v2775 = vrot.slane %v2008, 5
        %v2776 = vsel %vm1684, %v2774, %v2775
        %v2777 = vrot.slane %v2009, 5
        %v2778 = vrot.slane %v2777, 4
        %v2779 = vrot.slane %v2010, 5
        %v2780 = vsel %vm1684, %v2778, %v2779
        %v2781 = vrot.slane %v2779, 4
        %v2782 = vrot.slane %v2011, 5
        %v2783 = vsel %vm1684, %v2781, %v2782
        %v2784 = vrot.slane %v2012, 5
        %v2785 = vrot.slane %v2784, 4
        %v2786 = vrot.slane %v2013, 5
        %v2787 = vsel %vm1684, %v2785, %v2786
        %v2788 = vrot.slane %v2786, 4
        %v2789 = vrot.slane %v2014, 5
        %v2790 = vsel %vm1684, %v2788, %v2789
        %v2791 = vrot.slane %v2015, 5
        %v2792 = vrot.slane %v2791, 4
        %v2793 = vrot.slane %v2016, 5
        %v2794 = vsel %vm1684, %v2792, %v2793
        %v2795 = vrot.slane %v2793, 4
        %v2796 = vrot.slane %v2017, 5
        %v2797 = vsel %vm1684, %v2795, %v2796
        %v2798 = vrot.slane %v2018, 5
        %v2799 = vrot.slane %v2798, 4
        %v2800 = vrot.slane %v2019, 5
        %v2801 = vsel %vm1684, %v2799, %v2800
        %v2802 = vrot.slane %v2800, 4
        %v2803 = vrot.slane %v2020, 5
        %v2804 = vsel %vm1684, %v2802, %v2803
        %v2805 = vrot.slane %v2021, 5
        %v2806 = vrot.slane %v2805, 4
        %v2807 = vrot.slane %v2022, 5
        %v2808 = vsel %vm1684, %v2806, %v2807
        %v2809 = vrot.slane %v2807, 4
        %v2810 = vrot.slane %v2023, 5
        %v2811 = vsel %vm1684, %v2809, %v2810
        %v2812 = vld [vmem:[%s3 + $0x280] sm:$0xff]
        %v2813 = vld [vmem:[%s3 + $0x288] sm:$0xff]
        %v2814 = vld [vmem:[%s3 + $0x290] sm:$0xff]
        %v2815 = vld [vmem:[%s3 + $0x298] sm:$0xff]
        %v2816 = vld [vmem:[%s3 + $0x2a0] sm:$0xff]
        %v2817 = vld [vmem:[%s3 + $0x2a8] sm:$0xff]
        %v2818 = vld [vmem:[%s3 + $0x2b0] sm:$0xff]
        %v2819 = vld [vmem:[%s3 + $0x2b8] sm:$0xff]
        %v2820 = vld [vmem:[%s3 + $0x2c0] sm:$0xff]
        %v2821 = vld [vmem:[%s3 + $0x2c8] sm:$0xff]
        %v2822 = vld [vmem:[%s3 + $0x2d0] sm:$0xff]
        %v2823 = vld [vmem:[%s3 + $0x2d8] sm:$0xff]
        %v2824 = vld [vmem:[%s3 + $0x2e0] sm:$0xff]
        %v2825 = vld [vmem:[%s3 + $0x2e8] sm:$0xff]
        %v2826 = vld [vmem:[%s3 + $0x2f0] sm:$0xff]
        %v2827 = vld [vmem:[%s3 + $0x2f8] sm:$0xff]
        %v2828 = vunpack.c.l.b16 %v2759
        %v2829 = vunpack.c.l.b16 %v2762
        %v2830 = vunpack.c.l.b16 %v2766
        %v2831 = vunpack.c.l.b16 %v2769
        %v2832 = vunpack.c.l.b16 %v2773
        %v2833 = vunpack.c.l.b16 %v2776
        %v2834 = vunpack.c.l.b16 %v2780
        %v2835 = vunpack.c.l.b16 %v2783
        %v2836 = vunpack.c.l.b16 %v2787
        %v2837 = vunpack.c.l.b16 %v2790
        %v2838 = vunpack.c.l.b16 %v2794
        %v2839 = vunpack.c.l.b16 %v2797
        %v2840 = vunpack.c.l.b16 %v2801
        %v2841 = vunpack.c.l.b16 %v2804
        %v2842 = vunpack.c.l.b16 %v2808
        %v2843 = vunpack.c.l.b16 %v2811
        %v2844 = vpack.c.b16 %v2829, %v2828
        %v2845 = vpack.c.b16 %v2831, %v2830
        %v2846 = vpack.c.b16 %v2833, %v2832
        %v2847 = vpack.c.b16 %v2835, %v2834
        %v2848 = vpack.c.b16 %v2837, %v2836
        %v2849 = vpack.c.b16 %v2839, %v2838
        %v2850 = vpack.c.b16 %v2841, %v2840
        %v2851 = vpack.c.b16 %v2843, %v2842
        %v2876 = vunpack.c.l.b16 %v2812
        %v2877 = vunpack.c.h.b16 %v2812
        %v2878 = vunpack.c.l.b16 %v2813
        %v2879 = vunpack.c.h.b16 %v2813
        %v2880 = vunpack.c.l.b16 %v2814
        %v2881 = vunpack.c.h.b16 %v2814
        %v2882 = vunpack.c.l.b16 %v2815
        %v2883 = vunpack.c.h.b16 %v2815
        %v2884 = vunpack.c.l.b16 %v2816
        %v2885 = vunpack.c.h.b16 %v2816
        %v2886 = vunpack.c.l.b16 %v2817
        %v2887 = vunpack.c.h.b16 %v2817
        %v2888 = vunpack.c.l.b16 %v2818
        %v2889 = vunpack.c.h.b16 %v2818
        %v2890 = vunpack.c.l.b16 %v2819
        %v2891 = vunpack.c.h.b16 %v2819
        %v2892 = vunpack.c.l.b16 %v2820
        %v2893 = vunpack.c.h.b16 %v2820
        %v2894 = vunpack.c.l.b16 %v2821
        %v2895 = vunpack.c.h.b16 %v2821
        %v2896 = vunpack.c.l.b16 %v2822
        %v2897 = vunpack.c.h.b16 %v2822
        %v2898 = vunpack.c.l.b16 %v2823
        %v2899 = vunpack.c.h.b16 %v2823
        %v2900 = vunpack.c.l.b16 %v2824
        %v2901 = vunpack.c.h.b16 %v2824
        %v2902 = vunpack.c.l.b16 %v2825
        %v2903 = vunpack.c.h.b16 %v2825
        %v2904 = vunpack.c.l.b16 %v2826
        %v2905 = vunpack.c.h.b16 %v2826
        %v2906 = vunpack.c.l.b16 %v2827
        %v2907 = vunpack.c.h.b16 %v2827
        %v2908 = vpack.c.b16 %v2878, %v2876
        %v2909 = vpack.c.b16 %v2879, %v2877
        %v2910 = vpack.c.b16 %v2882, %v2880
        %v2911 = vpack.c.b16 %v2883, %v2881
        %v2912 = vpack.c.b16 %v2886, %v2884
        %v2913 = vpack.c.b16 %v2887, %v2885
        %v2914 = vpack.c.b16 %v2890, %v2888
        %v2915 = vpack.c.b16 %v2891, %v2889
        %v2916 = vpack.c.b16 %v2894, %v2892
        %v2917 = vpack.c.b16 %v2895, %v2893
        %v2918 = vpack.c.b16 %v2898, %v2896
        %v2919 = vpack.c.b16 %v2899, %v2897
        %v2920 = vpack.c.b16 %v2902, %v2900
        %v2921 = vpack.c.b16 %v2903, %v2901
        %v2922 = vpack.c.b16 %v2906, %v2904
        %v2923 = vpack.c.b16 %v2907, %v2905
        %2940 = vmatpush.bf16.msra.mxu0 %v2922
        %2941 = vmatpush.bf16.msra.mxu0 %v2920
        %2942 = vmatpush.bf16.msra.mxu0 %v2918
        %2943 = vmatpush.bf16.msra.mxu0 %v2916
        %2944 = vmatpush.bf16.msra.mxu0 %v2914
        %2945 = vmatpush.bf16.msra.mxu0 %v2912
        %2946 = vmatpush.bf16.msra.mxu0 %v2910
        %2947 = vmatpush.bf16.msra.mxu0 %v2908
        %2948 = vmatmul.bf16.gmra.mxu0 %v2844
        %v2949 = vpop.f32.mrf.mxu0
        %v2950 = vadd.f32 0.0, %v2949
        %v2951 = vpop.f32.mrf.mxu0
        %v2952 = vadd.f32 0.0, %v2951
        %2953 = vmatmul.bf16.gmra.mxu0 %v2845
        %v2954 = vpop.f32.mrf.mxu0
        %v2955 = vadd.f32 0.0, %v2954
        %v2956 = vpop.f32.mrf.mxu0
        %v2957 = vadd.f32 0.0, %v2956
        %2958 = vmatmul.bf16.gmra.mxu0 %v2846
        %v2959 = vpop.f32.mrf.mxu0
        %v2960 = vadd.f32 0.0, %v2959
        %v2961 = vpop.f32.mrf.mxu0
        %v2962 = vadd.f32 0.0, %v2961
        %2963 = vmatmul.bf16.gmra.mxu0 %v2847
        %v2964 = vpop.f32.mrf.mxu0
        %v2965 = vadd.f32 0.0, %v2964
        %v2966 = vpop.f32.mrf.mxu0
        %v2967 = vadd.f32 0.0, %v2966
        %2968 = vmatmul.bf16.gmra.mxu0 %v2848
        %v2969 = vpop.f32.mrf.mxu0
        %v2970 = vadd.f32 0.0, %v2969
        %v2971 = vpop.f32.mrf.mxu0
        %v2972 = vadd.f32 0.0, %v2971
        %2973 = vmatmul.bf16.gmra.mxu0 %v2849
        %v2974 = vpop.f32.mrf.mxu0
        %v2975 = vadd.f32 0.0, %v2974
        %v2976 = vpop.f32.mrf.mxu0
        %v2977 = vadd.f32 0.0, %v2976
        %2978 = vmatmul.bf16.gmra.mxu0 %v2850
        %v2979 = vpop.f32.mrf.mxu0
        %v2980 = vadd.f32 0.0, %v2979
        %v2981 = vpop.f32.mrf.mxu0
        %v2982 = vadd.f32 0.0, %v2981
        %2983 = vmatmul.bf16.gmra.mxu0 %v2851
        %v2984 = vpop.f32.mrf.mxu0
        %v2985 = vadd.f32 0.0, %v2984
        %v2986 = vpop.f32.mrf.mxu0
        %v2987 = vadd.f32 0.0, %v2986
        %2988 = vdwg.mxu0
        %2989 = vmatpush.bf16.msra.mxu0 %v2923
        %2990 = vmatpush.bf16.msra.mxu0 %v2921
        %2991 = vmatpush.bf16.msra.mxu0 %v2919
        %2992 = vmatpush.bf16.msra.mxu0 %v2917
        %2993 = vmatpush.bf16.msra.mxu0 %v2915
        %2994 = vmatpush.bf16.msra.mxu0 %v2913
        %2995 = vmatpush.bf16.msra.mxu0 %v2911
        %2996 = vmatpush.bf16.msra.mxu0 %v2909
        %2997 = vmatmul.bf16.gmra.mxu0 %v2844
        %v2998 = vpop.f32.mrf.mxu0
        %v2999 = vadd.f32 0.0, %v2998
        %v3000 = vpop.f32.mrf.mxu0
        %v3001 = vadd.f32 0.0, %v3000
        %3002 = vmatmul.bf16.gmra.mxu0 %v2845
        %v3003 = vpop.f32.mrf.mxu0
        %v3004 = vadd.f32 0.0, %v3003
        %v3005 = vpop.f32.mrf.mxu0
        %v3006 = vadd.f32 0.0, %v3005
        %3007 = vmatmul.bf16.gmra.mxu0 %v2846
        %v3008 = vpop.f32.mrf.mxu0
        %v3009 = vadd.f32 0.0, %v3008
        %v3010 = vpop.f32.mrf.mxu0
        %v3011 = vadd.f32 0.0, %v3010
        %3012 = vmatmul.bf16.gmra.mxu0 %v2847
        %v3013 = vpop.f32.mrf.mxu0
        %v3014 = vadd.f32 0.0, %v3013
        %v3015 = vpop.f32.mrf.mxu0
        %v3016 = vadd.f32 0.0, %v3015
        %3017 = vmatmul.bf16.gmra.mxu0 %v2848
        %v3018 = vpop.f32.mrf.mxu0
        %v3019 = vadd.f32 0.0, %v3018
        %v3020 = vpop.f32.mrf.mxu0
        %v3021 = vadd.f32 0.0, %v3020
        %3022 = vmatmul.bf16.gmra.mxu0 %v2849
        %v3023 = vpop.f32.mrf.mxu0
        %v3024 = vadd.f32 0.0, %v3023
        %v3025 = vpop.f32.mrf.mxu0
        %v3026 = vadd.f32 0.0, %v3025
        %3027 = vmatmul.bf16.gmra.mxu0 %v2850
        %v3028 = vpop.f32.mrf.mxu0
        %v3029 = vadd.f32 0.0, %v3028
        %v3030 = vpop.f32.mrf.mxu0
        %v3031 = vadd.f32 0.0, %v3030
        %3032 = vmatmul.bf16.gmra.mxu0 %v2851
        %v3033 = vpop.f32.mrf.mxu0
        %v3034 = vadd.f32 0.0, %v3033
        %v3035 = vpop.f32.mrf.mxu0
        %v3036 = vadd.f32 0.0, %v3035
        %3037 = vdwg.mxu0
        %v3038 = vadd.f32 %v2716, %v2950
        %v3039 = vadd.f32 %v2717, %v2999
        %v3040 = vadd.f32 %v2718, %v2952
        %v3041 = vadd.f32 %v2719, %v3001
        %v3042 = vadd.f32 %v2720, %v2955
        %v3043 = vadd.f32 %v2721, %v3004
        %v3044 = vadd.f32 %v2722, %v2957
        %v3045 = vadd.f32 %v2723, %v3006
        %v3046 = vadd.f32 %v2724, %v2960
        %v3047 = vadd.f32 %v2725, %v3009
        %v3048 = vadd.f32 %v2726, %v2962
        %v3049 = vadd.f32 %v2727, %v3011
        %v3050 = vadd.f32 %v2728, %v2965
        %v3051 = vadd.f32 %v2729, %v3014
        %v3052 = vadd.f32 %v2730, %v2967
        %v3053 = vadd.f32 %v2731, %v3016
        %v3054 = vadd.f32 %v2732, %v2970
        %v3055 = vadd.f32 %v2733, %v3019
        %v3056 = vadd.f32 %v2734, %v2972
        %v3057 = vadd.f32 %v2735, %v3021
        %v3058 = vadd.f32 %v2736, %v2975
        %v3059 = vadd.f32 %v2737, %v3024
        %v3060 = vadd.f32 %v2738, %v2977
        %v3061 = vadd.f32 %v2739, %v3026
        %v3062 = vadd.f32 %v2740, %v2980
        %v3063 = vadd.f32 %v2741, %v3029
        %v3064 = vadd.f32 %v2742, %v2982
        %v3065 = vadd.f32 %v2743, %v3031
        %v3066 = vadd.f32 %v2744, %v2985
        %v3067 = vadd.f32 %v2745, %v3034
        %v3068 = vadd.f32 %v2746, %v2987
        %v3069 = vadd.f32 %v2747, %v3036
        %s3070 = scalar_lea.vmem [#allocation2], 24
        %v3071 = vld [vmem:[%s3070] sm:$0xf]
        %v3072 = vld [vmem:[%s3070 + $0x4] sm:$0xf]
        %v3073 = vld [vmem:[%s3070 + $0x8] sm:$0x1]
        %v3074 = vld [vmem:[%s3070 + $0xc] sm:$0xf]
        %v3075 = vld [vmem:[%s3070 + $0x10] sm:$0xf]
        %v3076 = vld [vmem:[%s3070 + $0x14] sm:$0x1]
        %v3077 = vld [vmem:[%s3070 + $0x18] sm:$0xf]
        %v3078 = vld [vmem:[%s3070 + $0x1c] sm:$0xf]
        %v3079 = vld [vmem:[%s3070 + $0x20] sm:$0x1]
        %v3080 = vld [vmem:[%s3070 + $0x24] sm:$0xf]
        %v3081 = vld [vmem:[%s3070 + $0x28] sm:$0xf]
        %v3082 = vld [vmem:[%s3070 + $0x2c] sm:$0x1]
        %v3083 = vld [vmem:[%s3070 + $0x30] sm:$0xf]
        %v3084 = vld [vmem:[%s3070 + $0x34] sm:$0xf]
        %v3085 = vld [vmem:[%s3070 + $0x38] sm:$0x1]
        %v3086 = vld [vmem:[%s3070 + $0x3c] sm:$0xf]
        %v3087 = vld [vmem:[%s3070 + $0x40] sm:$0xf]
        %v3088 = vld [vmem:[%s3070 + $0x44] sm:$0x1]
        %v3089 = vld [vmem:[%s3070 + $0x48] sm:$0xf]
        %v3090 = vld [vmem:[%s3070 + $0x4c] sm:$0xf]
        %v3091 = vld [vmem:[%s3070 + $0x50] sm:$0x1]
        %v3092 = vld [vmem:[%s3070 + $0x54] sm:$0xf]
        %v3093 = vld [vmem:[%s3070 + $0x58] sm:$0xf]
        %v3094 = vld [vmem:[%s3070 + $0x5c] sm:$0x1]
        %v3095 = vld [vmem:[%s3 + $0x300] sm:$0xff]
        %v3096 = vld [vmem:[%s3 + $0x308] sm:$0xff]
        %v3097 = vld [vmem:[%s3 + $0x310] sm:$0xff]
        %v3098 = vld [vmem:[%s3 + $0x318] sm:$0xff]
        %v3099 = vld [vmem:[%s3 + $0x320] sm:$0xff]
        %v3100 = vld [vmem:[%s3 + $0x328] sm:$0xff]
        %v3101 = vld [vmem:[%s3 + $0x330] sm:$0xff]
        %v3102 = vld [vmem:[%s3 + $0x338] sm:$0xff]
        %v3103 = vld [vmem:[%s3 + $0x340] sm:$0xff]
        %v3104 = vld [vmem:[%s3 + $0x348] sm:$0xff]
        %v3105 = vld [vmem:[%s3 + $0x350] sm:$0xff]
        %v3106 = vld [vmem:[%s3 + $0x358] sm:$0xff]
        %v3107 = vld [vmem:[%s3 + $0x360] sm:$0xff]
        %v3108 = vld [vmem:[%s3 + $0x368] sm:$0xff]
        %v3109 = vld [vmem:[%s3 + $0x370] sm:$0xff]
        %v3110 = vld [vmem:[%s3 + $0x378] sm:$0xff]
        %v3127 = vunpack.c.l.b16 %v3071
        %v3128 = vunpack.c.l.b16 %v3072
        %v3129 = vunpack.c.l.b16 %v3074
        %v3130 = vunpack.c.l.b16 %v3075
        %v3131 = vunpack.c.l.b16 %v3077
        %v3132 = vunpack.c.l.b16 %v3078
        %v3133 = vunpack.c.l.b16 %v3080
        %v3134 = vunpack.c.l.b16 %v3081
        %v3135 = vunpack.c.l.b16 %v3083
        %v3136 = vunpack.c.l.b16 %v3084
        %v3137 = vunpack.c.l.b16 %v3086
        %v3138 = vunpack.c.l.b16 %v3087
        %v3139 = vunpack.c.l.b16 %v3089
        %v3140 = vunpack.c.l.b16 %v3090
        %v3141 = vunpack.c.l.b16 %v3092
        %v3142 = vunpack.c.l.b16 %v3093
        %v3143 = vpack.c.b16 %v3128, %v3127
        %v3144 = vpack.c.b16 %v3130, %v3129
        %v3145 = vpack.c.b16 %v3132, %v3131
        %v3146 = vpack.c.b16 %v3134, %v3133
        %v3147 = vpack.c.b16 %v3136, %v3135
        %v3148 = vpack.c.b16 %v3138, %v3137
        %v3149 = vpack.c.b16 %v3140, %v3139
        %v3150 = vpack.c.b16 %v3142, %v3141
        %v3175 = vunpack.c.l.b16 %v3095
        %v3176 = vunpack.c.h.b16 %v3095
        %v3177 = vunpack.c.l.b16 %v3096
        %v3178 = vunpack.c.h.b16 %v3096
        %v3179 = vunpack.c.l.b16 %v3097
        %v3180 = vunpack.c.h.b16 %v3097
        %v3181 = vunpack.c.l.b16 %v3098
        %v3182 = vunpack.c.h.b16 %v3098
        %v3183 = vunpack.c.l.b16 %v3099
        %v3184 = vunpack.c.h.b16 %v3099
        %v3185 = vunpack.c.l.b16 %v3100
        %v3186 = vunpack.c.h.b16 %v3100
        %v3187 = vunpack.c.l.b16 %v3101
        %v3188 = vunpack.c.h.b16 %v3101
        %v3189 = vunpack.c.l.b16 %v3102
        %v3190 = vunpack.c.h.b16 %v3102
        %v3191 = vunpack.c.l.b16 %v3103
        %v3192 = vunpack.c.h.b16 %v3103
        %v3193 = vunpack.c.l.b16 %v3104
        %v3194 = vunpack.c.h.b16 %v3104
        %v3195 = vunpack.c.l.b16 %v3105
        %v3196 = vunpack.c.h.b16 %v3105
        %v3197 = vunpack.c.l.b16 %v3106
        %v3198 = vunpack.c.h.b16 %v3106
        %v3199 = vunpack.c.l.b16 %v3107
        %v3200 = vunpack.c.h.b16 %v3107
        %v3201 = vunpack.c.l.b16 %v3108
        %v3202 = vunpack.c.h.b16 %v3108
        %v3203 = vunpack.c.l.b16 %v3109
        %v3204 = vunpack.c.h.b16 %v3109
        %v3205 = vunpack.c.l.b16 %v3110
        %v3206 = vunpack.c.h.b16 %v3110
        %v3207 = vpack.c.b16 %v3177, %v3175
        %v3208 = vpack.c.b16 %v3178, %v3176
        %v3209 = vpack.c.b16 %v3181, %v3179
        %v3210 = vpack.c.b16 %v3182, %v3180
        %v3211 = vpack.c.b16 %v3185, %v3183
        %v3212 = vpack.c.b16 %v3186, %v3184
        %v3213 = vpack.c.b16 %v3189, %v3187
        %v3214 = vpack.c.b16 %v3190, %v3188
        %v3215 = vpack.c.b16 %v3193, %v3191
        %v3216 = vpack.c.b16 %v3194, %v3192
        %v3217 = vpack.c.b16 %v3197, %v3195
        %v3218 = vpack.c.b16 %v3198, %v3196
        %v3219 = vpack.c.b16 %v3201, %v3199
        %v3220 = vpack.c.b16 %v3202, %v3200
        %v3221 = vpack.c.b16 %v3205, %v3203
        %v3222 = vpack.c.b16 %v3206, %v3204
        %3239 = vmatpush.bf16.msra.mxu0 %v3221
        %3240 = vmatpush.bf16.msra.mxu0 %v3219
        %3241 = vmatpush.bf16.msra.mxu0 %v3217
        %3242 = vmatpush.bf16.msra.mxu0 %v3215
        %3243 = vmatpush.bf16.msra.mxu0 %v3213
        %3244 = vmatpush.bf16.msra.mxu0 %v3211
        %3245 = vmatpush.bf16.msra.mxu0 %v3209
        %3246 = vmatpush.bf16.msra.mxu0 %v3207
        %3247 = vmatmul.bf16.gmra.mxu0 %v3143
        %v3248 = vpop.f32.mrf.mxu0
        %v3249 = vadd.f32 0.0, %v3248
        %v3250 = vpop.f32.mrf.mxu0
        %v3251 = vadd.f32 0.0, %v3250
        %3252 = vmatmul.bf16.gmra.mxu0 %v3144
        %v3253 = vpop.f32.mrf.mxu0
        %v3254 = vadd.f32 0.0, %v3253
        %v3255 = vpop.f32.mrf.mxu0
        %v3256 = vadd.f32 0.0, %v3255
        %3257 = vmatmul.bf16.gmra.mxu0 %v3145
        %v3258 = vpop.f32.mrf.mxu0
        %v3259 = vadd.f32 0.0, %v3258
        %v3260 = vpop.f32.mrf.mxu0
        %v3261 = vadd.f32 0.0, %v3260
        %3262 = vmatmul.bf16.gmra.mxu0 %v3146
        %v3263 = vpop.f32.mrf.mxu0
        %v3264 = vadd.f32 0.0, %v3263
        %v3265 = vpop.f32.mrf.mxu0
        %v3266 = vadd.f32 0.0, %v3265
        %3267 = vmatmul.bf16.gmra.mxu0 %v3147
        %v3268 = vpop.f32.mrf.mxu0
        %v3269 = vadd.f32 0.0, %v3268
        %v3270 = vpop.f32.mrf.mxu0
        %v3271 = vadd.f32 0.0, %v3270
        %3272 = vmatmul.bf16.gmra.mxu0 %v3148
        %v3273 = vpop.f32.mrf.mxu0
        %v3274 = vadd.f32 0.0, %v3273
        %v3275 = vpop.f32.mrf.mxu0
        %v3276 = vadd.f32 0.0, %v3275
        %3277 = vmatmul.bf16.gmra.mxu0 %v3149
        %v3278 = vpop.f32.mrf.mxu0
        %v3279 = vadd.f32 0.0, %v3278
        %v3280 = vpop.f32.mrf.mxu0
        %v3281 = vadd.f32 0.0, %v3280
        %3282 = vmatmul.bf16.gmra.mxu0 %v3150
        %v3283 = vpop.f32.mrf.mxu0
        %v3284 = vadd.f32 0.0, %v3283
        %v3285 = vpop.f32.mrf.mxu0
        %v3286 = vadd.f32 0.0, %v3285
        %3287 = vdwg.mxu0
        %3288 = vmatpush.bf16.msra.mxu0 %v3222
        %3289 = vmatpush.bf16.msra.mxu0 %v3220
        %3290 = vmatpush.bf16.msra.mxu0 %v3218
        %3291 = vmatpush.bf16.msra.mxu0 %v3216
        %3292 = vmatpush.bf16.msra.mxu0 %v3214
        %3293 = vmatpush.bf16.msra.mxu0 %v3212
        %3294 = vmatpush.bf16.msra.mxu0 %v3210
        %3295 = vmatpush.bf16.msra.mxu0 %v3208
        %3296 = vmatmul.bf16.gmra.mxu0 %v3143
        %v3297 = vpop.f32.mrf.mxu0
        %v3298 = vadd.f32 0.0, %v3297
        %v3299 = vpop.f32.mrf.mxu0
        %v3300 = vadd.f32 0.0, %v3299
        %3301 = vmatmul.bf16.gmra.mxu0 %v3144
        %v3302 = vpop.f32.mrf.mxu0
        %v3303 = vadd.f32 0.0, %v3302
        %v3304 = vpop.f32.mrf.mxu0
        %v3305 = vadd.f32 0.0, %v3304
        %3306 = vmatmul.bf16.gmra.mxu0 %v3145
        %v3307 = vpop.f32.mrf.mxu0
        %v3308 = vadd.f32 0.0, %v3307
        %v3309 = vpop.f32.mrf.mxu0
        %v3310 = vadd.f32 0.0, %v3309
        %3311 = vmatmul.bf16.gmra.mxu0 %v3146
        %v3312 = vpop.f32.mrf.mxu0
        %v3313 = vadd.f32 0.0, %v3312
        %v3314 = vpop.f32.mrf.mxu0
        %v3315 = vadd.f32 0.0, %v3314
        %3316 = vmatmul.bf16.gmra.mxu0 %v3147
        %v3317 = vpop.f32.mrf.mxu0
        %v3318 = vadd.f32 0.0, %v3317
        %v3319 = vpop.f32.mrf.mxu0
        %v3320 = vadd.f32 0.0, %v3319
        %3321 = vmatmul.bf16.gmra.mxu0 %v3148
        %v3322 = vpop.f32.mrf.mxu0
        %v3323 = vadd.f32 0.0, %v3322
        %v3324 = vpop.f32.mrf.mxu0
        %v3325 = vadd.f32 0.0, %v3324
        %3326 = vmatmul.bf16.gmra.mxu0 %v3149
        %v3327 = vpop.f32.mrf.mxu0
        %v3328 = vadd.f32 0.0, %v3327
        %v3329 = vpop.f32.mrf.mxu0
        %v3330 = vadd.f32 0.0, %v3329
        %3331 = vmatmul.bf16.gmra.mxu0 %v3150
        %v3332 = vpop.f32.mrf.mxu0
        %v3333 = vadd.f32 0.0, %v3332
        %v3334 = vpop.f32.mrf.mxu0
        %v3335 = vadd.f32 0.0, %v3334
        %3336 = vdwg.mxu0
        %v3337 = vadd.f32 %v3038, %v3249
        %v3338 = vadd.f32 %v3039, %v3298
        %v3339 = vadd.f32 %v3040, %v3251
        %v3340 = vadd.f32 %v3041, %v3300
        %v3341 = vadd.f32 %v3042, %v3254
        %v3342 = vadd.f32 %v3043, %v3303
        %v3343 = vadd.f32 %v3044, %v3256
        %v3344 = vadd.f32 %v3045, %v3305
        %v3345 = vadd.f32 %v3046, %v3259
        %v3346 = vadd.f32 %v3047, %v3308
        %v3347 = vadd.f32 %v3048, %v3261
        %v3348 = vadd.f32 %v3049, %v3310
        %v3349 = vadd.f32 %v3050, %v3264
        %v3350 = vadd.f32 %v3051, %v3313
        %v3351 = vadd.f32 %v3052, %v3266
        %v3352 = vadd.f32 %v3053, %v3315
        %v3353 = vadd.f32 %v3054, %v3269
        %v3354 = vadd.f32 %v3055, %v3318
        %v3355 = vadd.f32 %v3056, %v3271
        %v3356 = vadd.f32 %v3057, %v3320
        %v3357 = vadd.f32 %v3058, %v3274
        %v3358 = vadd.f32 %v3059, %v3323
        %v3359 = vadd.f32 %v3060, %v3276
        %v3360 = vadd.f32 %v3061, %v3325
        %v3361 = vadd.f32 %v3062, %v3279
        %v3362 = vadd.f32 %v3063, %v3328
        %v3363 = vadd.f32 %v3064, %v3281
        %v3364 = vadd.f32 %v3065, %v3330
        %v3365 = vadd.f32 %v3066, %v3284
        %v3366 = vadd.f32 %v3067, %v3333
        %v3367 = vadd.f32 %v3068, %v3286
        %v3368 = vadd.f32 %v3069, %v3335
        %v3370 = vshrl.u32 %v3071, 16
        %v3372 = vrot.slane %v3370, 4
        %v3373 = vshll.u32 %v3071, 16
        %v3375 = vrot.slane %v3373, 5
        %v3376 = vor.u32 %v3372, %v3375
        %v3377 = vrot.slane %v3376, 4
        %v3379 = vshll.u32 %v3072, 16
        %v3381 = vrot.slane %v3379, 5
        %v3382 = vsel %vm1029, %v3377, %v3381
        %v3383 = vshrl.u32 %v3072, 16
        %v3385 = vrot.slane %v3383, 4
        %v3386 = vor.u32 %v3385, %v3381
        %v3387 = vrot.slane %v3386, 4
        %v3389 = vshll.u32 %v3073, 16
        %v3391 = vrot.slane %v3389, 5
        %v3392 = vsel %vm1029, %v3387, %v3391
        %v3394 = vshrl.u32 %v3074, 16
        %v3396 = vrot.slane %v3394, 4
        %v3397 = vshll.u32 %v3074, 16
        %v3399 = vrot.slane %v3397, 5
        %v3400 = vor.u32 %v3396, %v3399
        %v3401 = vrot.slane %v3400, 4
        %v3403 = vshll.u32 %v3075, 16
        %v3405 = vrot.slane %v3403, 5
        %v3406 = vsel %vm1029, %v3401, %v3405
        %v3407 = vshrl.u32 %v3075, 16
        %v3409 = vrot.slane %v3407, 4
        %v3410 = vor.u32 %v3409, %v3405
        %v3411 = vrot.slane %v3410, 4
        %v3413 = vshll.u32 %v3076, 16
        %v3415 = vrot.slane %v3413, 5
        %v3416 = vsel %vm1029, %v3411, %v3415
        %v3418 = vshrl.u32 %v3077, 16
        %v3420 = vrot.slane %v3418, 4
        %v3421 = vshll.u32 %v3077, 16
        %v3423 = vrot.slane %v3421, 5
        %v3424 = vor.u32 %v3420, %v3423
        %v3425 = vrot.slane %v3424, 4
        %v3427 = vshll.u32 %v3078, 16
        %v3429 = vrot.slane %v3427, 5
        %v3430 = vsel %vm1029, %v3425, %v3429
        %v3431 = vshrl.u32 %v3078, 16
        %v3433 = vrot.slane %v3431, 4
        %v3434 = vor.u32 %v3433, %v3429
        %v3435 = vrot.slane %v3434, 4
        %v3437 = vshll.u32 %v3079, 16
        %v3439 = vrot.slane %v3437, 5
        %v3440 = vsel %vm1029, %v3435, %v3439
        %v3442 = vshrl.u32 %v3080, 16
        %v3444 = vrot.slane %v3442, 4
        %v3445 = vshll.u32 %v3080, 16
        %v3447 = vrot.slane %v3445, 5
        %v3448 = vor.u32 %v3444, %v3447
        %v3449 = vrot.slane %v3448, 4
        %v3451 = vshll.u32 %v3081, 16
        %v3453 = vrot.slane %v3451, 5
        %v3454 = vsel %vm1029, %v3449, %v3453
        %v3455 = vshrl.u32 %v3081, 16
        %v3457 = vrot.slane %v3455, 4
        %v3458 = vor.u32 %v3457, %v3453
        %v3459 = vrot.slane %v3458, 4
        %v3461 = vshll.u32 %v3082, 16
        %v3463 = vrot.slane %v3461, 5
        %v3464 = vsel %vm1029, %v3459, %v3463
        %v3466 = vshrl.u32 %v3083, 16
        %v3468 = vrot.slane %v3466, 4
        %v3469 = vshll.u32 %v3083, 16
        %v3471 = vrot.slane %v3469, 5
        %v3472 = vor.u32 %v3468, %v3471
        %v3473 = vrot.slane %v3472, 4
        %v3475 = vshll.u32 %v3084, 16
        %v3477 = vrot.slane %v3475, 5
        %v3478 = vsel %vm1029, %v3473, %v3477
        %v3479 = vshrl.u32 %v3084, 16
        %v3481 = vrot.slane %v3479, 4
        %v3482 = vor.u32 %v3481, %v3477
        %v3483 = vrot.slane %v3482, 4
        %v3485 = vshll.u32 %v3085, 16
        %v3487 = vrot.slane %v3485, 5
        %v3488 = vsel %vm1029, %v3483, %v3487
        %v3490 = vshrl.u32 %v3086, 16
        %v3492 = vrot.slane %v3490, 4
        %v3493 = vshll.u32 %v3086, 16
        %v3495 = vrot.slane %v3493, 5
        %v3496 = vor.u32 %v3492, %v3495
        %v3497 = vrot.slane %v3496, 4
        %v3499 = vshll.u32 %v3087, 16
        %v3501 = vrot.slane %v3499, 5
        %v3502 = vsel %vm1029, %v3497, %v3501
        %v3503 = vshrl.u32 %v3087, 16
        %v3505 = vrot.slane %v3503, 4
        %v3506 = vor.u32 %v3505, %v3501
        %v3507 = vrot.slane %v3506, 4
        %v3509 = vshll.u32 %v3088, 16
        %v3511 = vrot.slane %v3509, 5
        %v3512 = vsel %vm1029, %v3507, %v3511
        %v3514 = vshrl.u32 %v3089, 16
        %v3516 = vrot.slane %v3514, 4
        %v3517 = vshll.u32 %v3089, 16
        %v3519 = vrot.slane %v3517, 5
        %v3520 = vor.u32 %v3516, %v3519
        %v3521 = vrot.slane %v3520, 4
        %v3523 = vshll.u32 %v3090, 16
        %v3525 = vrot.slane %v3523, 5
        %v3526 = vsel %vm1029, %v3521, %v3525
        %v3527 = vshrl.u32 %v3090, 16
        %v3529 = vrot.slane %v3527, 4
        %v3530 = vor.u32 %v3529, %v3525
        %v3531 = vrot.slane %v3530, 4
        %v3533 = vshll.u32 %v3091, 16
        %v3535 = vrot.slane %v3533, 5
        %v3536 = vsel %vm1029, %v3531, %v3535
        %v3538 = vshrl.u32 %v3092, 16
        %v3540 = vrot.slane %v3538, 4
        %v3541 = vshll.u32 %v3092, 16
        %v3543 = vrot.slane %v3541, 5
        %v3544 = vor.u32 %v3540, %v3543
        %v3545 = vrot.slane %v3544, 4
        %v3547 = vshll.u32 %v3093, 16
        %v3549 = vrot.slane %v3547, 5
        %v3550 = vsel %vm1029, %v3545, %v3549
        %v3551 = vshrl.u32 %v3093, 16
        %v3553 = vrot.slane %v3551, 4
        %v3554 = vor.u32 %v3553, %v3549
        %v3555 = vrot.slane %v3554, 4
        %v3557 = vshll.u32 %v3094, 16
        %v3559 = vrot.slane %v3557, 5
        %v3560 = vsel %vm1029, %v3555, %v3559
        %v3561 = vld [vmem:[%s3 + $0x380] sm:$0xff]
        %v3562 = vld [vmem:[%s3 + $0x388] sm:$0xff]
        %v3563 = vld [vmem:[%s3 + $0x390] sm:$0xff]
        %v3564 = vld [vmem:[%s3 + $0x398] sm:$0xff]
        %v3565 = vld [vmem:[%s3 + $0x3a0] sm:$0xff]
        %v3566 = vld [vmem:[%s3 + $0x3a8] sm:$0xff]
        %v3567 = vld [vmem:[%s3 + $0x3b0] sm:$0xff]
        %v3568 = vld [vmem:[%s3 + $0x3b8] sm:$0xff]
        %v3569 = vld [vmem:[%s3 + $0x3c0] sm:$0xff]
        %v3570 = vld [vmem:[%s3 + $0x3c8] sm:$0xff]
        %v3571 = vld [vmem:[%s3 + $0x3d0] sm:$0xff]
        %v3572 = vld [vmem:[%s3 + $0x3d8] sm:$0xff]
        %v3573 = vld [vmem:[%s3 + $0x3e0] sm:$0xff]
        %v3574 = vld [vmem:[%s3 + $0x3e8] sm:$0xff]
        %v3575 = vld [vmem:[%s3 + $0x3f0] sm:$0xff]
        %v3576 = vld [vmem:[%s3 + $0x3f8] sm:$0xff]
        %v3577 = vunpack.c.l.b16 %v3382
        %v3578 = vunpack.c.l.b16 %v3392
        %v3579 = vunpack.c.l.b16 %v3406
        %v3580 = vunpack.c.l.b16 %v3416
        %v3581 = vunpack.c.l.b16 %v3430
        %v3582 = vunpack.c.l.b16 %v3440
        %v3583 = vunpack.c.l.b16 %v3454
        %v3584 = vunpack.c.l.b16 %v3464
        %v3585 = vunpack.c.l.b16 %v3478
        %v3586 = vunpack.c.l.b16 %v3488
        %v3587 = vunpack.c.l.b16 %v3502
        %v3588 = vunpack.c.l.b16 %v3512
        %v3589 = vunpack.c.l.b16 %v3526
        %v3590 = vunpack.c.l.b16 %v3536
        %v3591 = vunpack.c.l.b16 %v3550
        %v3592 = vunpack.c.l.b16 %v3560
        %v3593 = vpack.c.b16 %v3578, %v3577
        %v3594 = vpack.c.b16 %v3580, %v3579
        %v3595 = vpack.c.b16 %v3582, %v3581
        %v3596 = vpack.c.b16 %v3584, %v3583
        %v3597 = vpack.c.b16 %v3586, %v3585
        %v3598 = vpack.c.b16 %v3588, %v3587
        %v3599 = vpack.c.b16 %v3590, %v3589
        %v3600 = vpack.c.b16 %v3592, %v3591
        %v3625 = vunpack.c.l.b16 %v3561
        %v3626 = vunpack.c.h.b16 %v3561
        %v3627 = vunpack.c.l.b16 %v3562
        %v3628 = vunpack.c.h.b16 %v3562
        %v3629 = vunpack.c.l.b16 %v3563
        %v3630 = vunpack.c.h.b16 %v3563
        %v3631 = vunpack.c.l.b16 %v3564
        %v3632 = vunpack.c.h.b16 %v3564
        %v3633 = vunpack.c.l.b16 %v3565
        %v3634 = vunpack.c.h.b16 %v3565
        %v3635 = vunpack.c.l.b16 %v3566
        %v3636 = vunpack.c.h.b16 %v3566
        %v3637 = vunpack.c.l.b16 %v3567
        %v3638 = vunpack.c.h.b16 %v3567
        %v3639 = vunpack.c.l.b16 %v3568
        %v3640 = vunpack.c.h.b16 %v3568
        %v3641 = vunpack.c.l.b16 %v3569
        %v3642 = vunpack.c.h.b16 %v3569
        %v3643 = vunpack.c.l.b16 %v3570
        %v3644 = vunpack.c.h.b16 %v3570
        %v3645 = vunpack.c.l.b16 %v3571
        %v3646 = vunpack.c.h.b16 %v3571
        %v3647 = vunpack.c.l.b16 %v3572
        %v3648 = vunpack.c.h.b16 %v3572
        %v3649 = vunpack.c.l.b16 %v3573
        %v3650 = vunpack.c.h.b16 %v3573
        %v3651 = vunpack.c.l.b16 %v3574
        %v3652 = vunpack.c.h.b16 %v3574
        %v3653 = vunpack.c.l.b16 %v3575
        %v3654 = vunpack.c.h.b16 %v3575
        %v3655 = vunpack.c.l.b16 %v3576
        %v3656 = vunpack.c.h.b16 %v3576
        %v3657 = vpack.c.b16 %v3627, %v3625
        %v3658 = vpack.c.b16 %v3628, %v3626
        %v3659 = vpack.c.b16 %v3631, %v3629
        %v3660 = vpack.c.b16 %v3632, %v3630
        %v3661 = vpack.c.b16 %v3635, %v3633
        %v3662 = vpack.c.b16 %v3636, %v3634
        %v3663 = vpack.c.b16 %v3639, %v3637
        %v3664 = vpack.c.b16 %v3640, %v3638
        %v3665 = vpack.c.b16 %v3643, %v3641
        %v3666 = vpack.c.b16 %v3644, %v3642
        %v3667 = vpack.c.b16 %v3647, %v3645
        %v3668 = vpack.c.b16 %v3648, %v3646
        %v3669 = vpack.c.b16 %v3651, %v3649
        %v3670 = vpack.c.b16 %v3652, %v3650
        %v3671 = vpack.c.b16 %v3655, %v3653
        %v3672 = vpack.c.b16 %v3656, %v3654
        %3689 = vmatpush.bf16.msra.mxu0 %v3671
        %3690 = vmatpush.bf16.msra.mxu0 %v3669
        %3691 = vmatpush.bf16.msra.mxu0 %v3667
        %3692 = vmatpush.bf16.msra.mxu0 %v3665
        %3693 = vmatpush.bf16.msra.mxu0 %v3663
        %3694 = vmatpush.bf16.msra.mxu0 %v3661
        %3695 = vmatpush.bf16.msra.mxu0 %v3659
        %3696 = vmatpush.bf16.msra.mxu0 %v3657
        %3697 = vmatmul.bf16.gmra.mxu0 %v3593
        %v3698 = vpop.f32.mrf.mxu0
        %v3699 = vadd.f32 0.0, %v3698
        %v3700 = vpop.f32.mrf.mxu0
        %v3701 = vadd.f32 0.0, %v3700
        %3702 = vmatmul.bf16.gmra.mxu0 %v3594
        %v3703 = vpop.f32.mrf.mxu0
        %v3704 = vadd.f32 0.0, %v3703
        %v3705 = vpop.f32.mrf.mxu0
        %v3706 = vadd.f32 0.0, %v3705
        %3707 = vmatmul.bf16.gmra.mxu0 %v3595
        %v3708 = vpop.f32.mrf.mxu0
        %v3709 = vadd.f32 0.0, %v3708
        %v3710 = vpop.f32.mrf.mxu0
        %v3711 = vadd.f32 0.0, %v3710
        %3712 = vmatmul.bf16.gmra.mxu0 %v3596
        %v3713 = vpop.f32.mrf.mxu0
        %v3714 = vadd.f32 0.0, %v3713
        %v3715 = vpop.f32.mrf.mxu0
        %v3716 = vadd.f32 0.0, %v3715
        %3717 = vmatmul.bf16.gmra.mxu0 %v3597
        %v3718 = vpop.f32.mrf.mxu0
        %v3719 = vadd.f32 0.0, %v3718
        %v3720 = vpop.f32.mrf.mxu0
        %v3721 = vadd.f32 0.0, %v3720
        %3722 = vmatmul.bf16.gmra.mxu0 %v3598
        %v3723 = vpop.f32.mrf.mxu0
        %v3724 = vadd.f32 0.0, %v3723
        %v3725 = vpop.f32.mrf.mxu0
        %v3726 = vadd.f32 0.0, %v3725
        %3727 = vmatmul.bf16.gmra.mxu0 %v3599
        %v3728 = vpop.f32.mrf.mxu0
        %v3729 = vadd.f32 0.0, %v3728
        %v3730 = vpop.f32.mrf.mxu0
        %v3731 = vadd.f32 0.0, %v3730
        %3732 = vmatmul.bf16.gmra.mxu0 %v3600
        %v3733 = vpop.f32.mrf.mxu0
        %v3734 = vadd.f32 0.0, %v3733
        %v3735 = vpop.f32.mrf.mxu0
        %v3736 = vadd.f32 0.0, %v3735
        %3737 = vdwg.mxu0
        %3738 = vmatpush.bf16.msra.mxu0 %v3672
        %3739 = vmatpush.bf16.msra.mxu0 %v3670
        %3740 = vmatpush.bf16.msra.mxu0 %v3668
        %3741 = vmatpush.bf16.msra.mxu0 %v3666
        %3742 = vmatpush.bf16.msra.mxu0 %v3664
        %3743 = vmatpush.bf16.msra.mxu0 %v3662
        %3744 = vmatpush.bf16.msra.mxu0 %v3660
        %3745 = vmatpush.bf16.msra.mxu0 %v3658
        %3746 = vmatmul.bf16.gmra.mxu0 %v3593
        %v3747 = vpop.f32.mrf.mxu0
        %v3748 = vadd.f32 0.0, %v3747
        %v3749 = vpop.f32.mrf.mxu0
        %v3750 = vadd.f32 0.0, %v3749
        %3751 = vmatmul.bf16.gmra.mxu0 %v3594
        %v3752 = vpop.f32.mrf.mxu0
        %v3753 = vadd.f32 0.0, %v3752
        %v3754 = vpop.f32.mrf.mxu0
        %v3755 = vadd.f32 0.0, %v3754
        %3756 = vmatmul.bf16.gmra.mxu0 %v3595
        %v3757 = vpop.f32.mrf.mxu0
        %v3758 = vadd.f32 0.0, %v3757
        %v3759 = vpop.f32.mrf.mxu0
        %v3760 = vadd.f32 0.0, %v3759
        %3761 = vmatmul.bf16.gmra.mxu0 %v3596
        %v3762 = vpop.f32.mrf.mxu0
        %v3763 = vadd.f32 0.0, %v3762
        %v3764 = vpop.f32.mrf.mxu0
        %v3765 = vadd.f32 0.0, %v3764
        %3766 = vmatmul.bf16.gmra.mxu0 %v3597
        %v3767 = vpop.f32.mrf.mxu0
        %v3768 = vadd.f32 0.0, %v3767
        %v3769 = vpop.f32.mrf.mxu0
        %v3770 = vadd.f32 0.0, %v3769
        %3771 = vmatmul.bf16.gmra.mxu0 %v3598
        %v3772 = vpop.f32.mrf.mxu0
        %v3773 = vadd.f32 0.0, %v3772
        %v3774 = vpop.f32.mrf.mxu0
        %v3775 = vadd.f32 0.0, %v3774
        %3776 = vmatmul.bf16.gmra.mxu0 %v3599
        %v3777 = vpop.f32.mrf.mxu0
        %v3778 = vadd.f32 0.0, %v3777
        %v3779 = vpop.f32.mrf.mxu0
        %v3780 = vadd.f32 0.0, %v3779
        %3781 = vmatmul.bf16.gmra.mxu0 %v3600
        %v3782 = vpop.f32.mrf.mxu0
        %v3783 = vadd.f32 0.0, %v3782
        %v3784 = vpop.f32.mrf.mxu0
        %v3785 = vadd.f32 0.0, %v3784
        %3786 = vdwg.mxu0
        %v3787 = vadd.f32 %v3337, %v3699
        %v3788 = vadd.f32 %v3338, %v3748
        %v3789 = vadd.f32 %v3339, %v3701
        %v3790 = vadd.f32 %v3340, %v3750
        %v3791 = vadd.f32 %v3341, %v3704
        %v3792 = vadd.f32 %v3342, %v3753
        %v3793 = vadd.f32 %v3343, %v3706
        %v3794 = vadd.f32 %v3344, %v3755
        %v3795 = vadd.f32 %v3345, %v3709
        %v3796 = vadd.f32 %v3346, %v3758
        %v3797 = vadd.f32 %v3347, %v3711
        %v3798 = vadd.f32 %v3348, %v3760
        %v3799 = vadd.f32 %v3349, %v3714
        %v3800 = vadd.f32 %v3350, %v3763
        %v3801 = vadd.f32 %v3351, %v3716
        %v3802 = vadd.f32 %v3352, %v3765
        %v3803 = vadd.f32 %v3353, %v3719
        %v3804 = vadd.f32 %v3354, %v3768
        %v3805 = vadd.f32 %v3355, %v3721
        %v3806 = vadd.f32 %v3356, %v3770
        %v3807 = vadd.f32 %v3357, %v3724
        %v3808 = vadd.f32 %v3358, %v3773
        %v3809 = vadd.f32 %v3359, %v3726
        %v3810 = vadd.f32 %v3360, %v3775
        %v3811 = vadd.f32 %v3361, %v3729
        %v3812 = vadd.f32 %v3362, %v3778
        %v3813 = vadd.f32 %v3363, %v3731
        %v3814 = vadd.f32 %v3364, %v3780
        %v3815 = vadd.f32 %v3365, %v3734
        %v3816 = vadd.f32 %v3366, %v3783
        %v3817 = vadd.f32 %v3367, %v3736
        %v3818 = vadd.f32 %v3368, %v3785
        %v3827 = vrot.slane %v3071, 5
        %v3828 = vrot.slane %v3827, 4
        %v3829 = vrot.slane %v3072, 5
        %v3830 = vsel %vm1684, %v3828, %v3829
        %v3831 = vrot.slane %v3829, 4
        %v3832 = vrot.slane %v3073, 5
        %v3833 = vsel %vm1684, %v3831, %v3832
        %v3834 = vrot.slane %v3074, 5
        %v3835 = vrot.slane %v3834, 4
        %v3836 = vrot.slane %v3075, 5
        %v3837 = vsel %vm1684, %v3835, %v3836
        %v3838 = vrot.slane %v3836, 4
        %v3839 = vrot.slane %v3076, 5
        %v3840 = vsel %vm1684, %v3838, %v3839
        %v3841 = vrot.slane %v3077, 5
        %v3842 = vrot.slane %v3841, 4
        %v3843 = vrot.slane %v3078, 5
        %v3844 = vsel %vm1684, %v3842, %v3843
        %v3845 = vrot.slane %v3843, 4
        %v3846 = vrot.slane %v3079, 5
        %v3847 = vsel %vm1684, %v3845, %v3846
        %v3848 = vrot.slane %v3080, 5
        %v3849 = vrot.slane %v3848, 4
        %v3850 = vrot.slane %v3081, 5
        %v3851 = vsel %vm1684, %v3849, %v3850
        %v3852 = vrot.slane %v3850, 4
        %v3853 = vrot.slane %v3082, 5
        %v3854 = vsel %vm1684, %v3852, %v3853
        %v3855 = vrot.slane %v3083, 5
        %v3856 = vrot.slane %v3855, 4
        %v3857 = vrot.slane %v3084, 5
        %v3858 = vsel %vm1684, %v3856, %v3857
        %v3859 = vrot.slane %v3857, 4
        %v3860 = vrot.slane %v3085, 5
        %v3861 = vsel %vm1684, %v3859, %v3860
        %v3862 = vrot.slane %v3086, 5
        %v3863 = vrot.slane %v3862, 4
        %v3864 = vrot.slane %v3087, 5
        %v3865 = vsel %vm1684, %v3863, %v3864
        %v3866 = vrot.slane %v3864, 4
        %v3867 = vrot.slane %v3088, 5
        %v3868 = vsel %vm1684, %v3866, %v3867
        %v3869 = vrot.slane %v3089, 5
        %v3870 = vrot.slane %v3869, 4
        %v3871 = vrot.slane %v3090, 5
        %v3872 = vsel %vm1684, %v3870, %v3871
        %v3873 = vrot.slane %v3871, 4
        %v3874 = vrot.slane %v3091, 5
        %v3875 = vsel %vm1684, %v3873, %v3874
        %v3876 = vrot.slane %v3092, 5
        %v3877 = vrot.slane %v3876, 4
        %v3878 = vrot.slane %v3093, 5
        %v3879 = vsel %vm1684, %v3877, %v3878
        %v3880 = vrot.slane %v3878, 4
        %v3881 = vrot.slane %v3094, 5
        %v3882 = vsel %vm1684, %v3880, %v3881
        %v3883 = vld [vmem:[%s3 + $0x400] sm:$0xff]
        %v3884 = vld [vmem:[%s3 + $0x408] sm:$0xff]
        %v3885 = vld [vmem:[%s3 + $0x410] sm:$0xff]
        %v3886 = vld [vmem:[%s3 + $0x418] sm:$0xff]
        %v3887 = vld [vmem:[%s3 + $0x420] sm:$0xff]
        %v3888 = vld [vmem:[%s3 + $0x428] sm:$0xff]
        %v3889 = vld [vmem:[%s3 + $0x430] sm:$0xff]
        %v3890 = vld [vmem:[%s3 + $0x438] sm:$0xff]
        %v3891 = vld [vmem:[%s3 + $0x440] sm:$0xff]
        %v3892 = vld [vmem:[%s3 + $0x448] sm:$0xff]
        %v3893 = vld [vmem:[%s3 + $0x450] sm:$0xff]
        %v3894 = vld [vmem:[%s3 + $0x458] sm:$0xff]
        %v3895 = vld [vmem:[%s3 + $0x460] sm:$0xff]
        %v3896 = vld [vmem:[%s3 + $0x468] sm:$0xff]
        %v3897 = vld [vmem:[%s3 + $0x470] sm:$0xff]
        %v3898 = vld [vmem:[%s3 + $0x478] sm:$0xff]
        %v3899 = vunpack.c.l.b16 %v3830
        %v3900 = vunpack.c.l.b16 %v3833
        %v3901 = vunpack.c.l.b16 %v3837
        %v3902 = vunpack.c.l.b16 %v3840
        %v3903 = vunpack.c.l.b16 %v3844
        %v3904 = vunpack.c.l.b16 %v3847
        %v3905 = vunpack.c.l.b16 %v3851
        %v3906 = vunpack.c.l.b16 %v3854
        %v3907 = vunpack.c.l.b16 %v3858
        %v3908 = vunpack.c.l.b16 %v3861
        %v3909 = vunpack.c.l.b16 %v3865
        %v3910 = vunpack.c.l.b16 %v3868
        %v3911 = vunpack.c.l.b16 %v3872
        %v3912 = vunpack.c.l.b16 %v3875
        %v3913 = vunpack.c.l.b16 %v3879
        %v3914 = vunpack.c.l.b16 %v3882
        %v3915 = vpack.c.b16 %v3900, %v3899
        %v3916 = vpack.c.b16 %v3902, %v3901
        %v3917 = vpack.c.b16 %v3904, %v3903
        %v3918 = vpack.c.b16 %v3906, %v3905
        %v3919 = vpack.c.b16 %v3908, %v3907
        %v3920 = vpack.c.b16 %v3910, %v3909
        %v3921 = vpack.c.b16 %v3912, %v3911
        %v3922 = vpack.c.b16 %v3914, %v3913
        %v3947 = vunpack.c.l.b16 %v3883
        %v3948 = vunpack.c.h.b16 %v3883
        %v3949 = vunpack.c.l.b16 %v3884
        %v3950 = vunpack.c.h.b16 %v3884
        %v3951 = vunpack.c.l.b16 %v3885
        %v3952 = vunpack.c.h.b16 %v3885
        %v3953 = vunpack.c.l.b16 %v3886
        %v3954 = vunpack.c.h.b16 %v3886
        %v3955 = vunpack.c.l.b16 %v3887
        %v3956 = vunpack.c.h.b16 %v3887
        %v3957 = vunpack.c.l.b16 %v3888
        %v3958 = vunpack.c.h.b16 %v3888
        %v3959 = vunpack.c.l.b16 %v3889
        %v3960 = vunpack.c.h.b16 %v3889
        %v3961 = vunpack.c.l.b16 %v3890
        %v3962 = vunpack.c.h.b16 %v3890
        %v3963 = vunpack.c.l.b16 %v3891
        %v3964 = vunpack.c.h.b16 %v3891
        %v3965 = vunpack.c.l.b16 %v3892
        %v3966 = vunpack.c.h.b16 %v3892
        %v3967 = vunpack.c.l.b16 %v3893
        %v3968 = vunpack.c.h.b16 %v3893
        %v3969 = vunpack.c.l.b16 %v3894
        %v3970 = vunpack.c.h.b16 %v3894
        %v3971 = vunpack.c.l.b16 %v3895
        %v3972 = vunpack.c.h.b16 %v3895
        %v3973 = vunpack.c.l.b16 %v3896
        %v3974 = vunpack.c.h.b16 %v3896
        %v3975 = vunpack.c.l.b16 %v3897
        %v3976 = vunpack.c.h.b16 %v3897
        %v3977 = vunpack.c.l.b16 %v3898
        %v3978 = vunpack.c.h.b16 %v3898
        %v3979 = vpack.c.b16 %v3949, %v3947
        %v3980 = vpack.c.b16 %v3950, %v3948
        %v3981 = vpack.c.b16 %v3953, %v3951
        %v3982 = vpack.c.b16 %v3954, %v3952
        %v3983 = vpack.c.b16 %v3957, %v3955
        %v3984 = vpack.c.b16 %v3958, %v3956
        %v3985 = vpack.c.b16 %v3961, %v3959
        %v3986 = vpack.c.b16 %v3962, %v3960
        %v3987 = vpack.c.b16 %v3965, %v3963
        %v3988 = vpack.c.b16 %v3966, %v3964
        %v3989 = vpack.c.b16 %v3969, %v3967
        %v3990 = vpack.c.b16 %v3970, %v3968
        %v3991 = vpack.c.b16 %v3973, %v3971
        %v3992 = vpack.c.b16 %v3974, %v3972
        %v3993 = vpack.c.b16 %v3977, %v3975
        %v3994 = vpack.c.b16 %v3978, %v3976
        %4011 = vmatpush.bf16.msra.mxu0 %v3993
        %4012 = vmatpush.bf16.msra.mxu0 %v3991
        %4013 = vmatpush.bf16.msra.mxu0 %v3989
        %4014 = vmatpush.bf16.msra.mxu0 %v3987
        %4015 = vmatpush.bf16.msra.mxu0 %v3985
        %4016 = vmatpush.bf16.msra.mxu0 %v3983
        %4017 = vmatpush.bf16.msra.mxu0 %v3981
        %4018 = vmatpush.bf16.msra.mxu0 %v3979
        %4019 = vmatmul.bf16.gmra.mxu0 %v3915
        %v4020 = vpop.f32.mrf.mxu0
        %v4021 = vadd.f32 0.0, %v4020
        %v4022 = vpop.f32.mrf.mxu0
        %v4023 = vadd.f32 0.0, %v4022
        %4024 = vmatmul.bf16.gmra.mxu0 %v3916
        %v4025 = vpop.f32.mrf.mxu0
        %v4026 = vadd.f32 0.0, %v4025
        %v4027 = vpop.f32.mrf.mxu0
        %v4028 = vadd.f32 0.0, %v4027
        %4029 = vmatmul.bf16.gmra.mxu0 %v3917
        %v4030 = vpop.f32.mrf.mxu0
        %v4031 = vadd.f32 0.0, %v4030
        %v4032 = vpop.f32.mrf.mxu0
        %v4033 = vadd.f32 0.0, %v4032
        %4034 = vmatmul.bf16.gmra.mxu0 %v3918
        %v4035 = vpop.f32.mrf.mxu0
        %v4036 = vadd.f32 0.0, %v4035
        %v4037 = vpop.f32.mrf.mxu0
        %v4038 = vadd.f32 0.0, %v4037
        %4039 = vmatmul.bf16.gmra.mxu0 %v3919
        %v4040 = vpop.f32.mrf.mxu0
        %v4041 = vadd.f32 0.0, %v4040
        %v4042 = vpop.f32.mrf.mxu0
        %v4043 = vadd.f32 0.0, %v4042
        %4044 = vmatmul.bf16.gmra.mxu0 %v3920
        %v4045 = vpop.f32.mrf.mxu0
        %v4046 = vadd.f32 0.0, %v4045
        %v4047 = vpop.f32.mrf.mxu0
        %v4048 = vadd.f32 0.0, %v4047
        %4049 = vmatmul.bf16.gmra.mxu0 %v3921
        %v4050 = vpop.f32.mrf.mxu0
        %v4051 = vadd.f32 0.0, %v4050
        %v4052 = vpop.f32.mrf.mxu0
        %v4053 = vadd.f32 0.0, %v4052
        %4054 = vmatmul.bf16.gmra.mxu0 %v3922
        %v4055 = vpop.f32.mrf.mxu0
        %v4056 = vadd.f32 0.0, %v4055
        %v4057 = vpop.f32.mrf.mxu0
        %v4058 = vadd.f32 0.0, %v4057
        %4059 = vdwg.mxu0
        %4060 = vmatpush.bf16.msra.mxu0 %v3994
        %4061 = vmatpush.bf16.msra.mxu0 %v3992
        %4062 = vmatpush.bf16.msra.mxu0 %v3990
        %4063 = vmatpush.bf16.msra.mxu0 %v3988
        %4064 = vmatpush.bf16.msra.mxu0 %v3986
        %4065 = vmatpush.bf16.msra.mxu0 %v3984
        %4066 = vmatpush.bf16.msra.mxu0 %v3982
        %4067 = vmatpush.bf16.msra.mxu0 %v3980
        %4068 = vmatmul.bf16.gmra.mxu0 %v3915
        %v4069 = vpop.f32.mrf.mxu0
        %v4070 = vadd.f32 0.0, %v4069
        %v4071 = vpop.f32.mrf.mxu0
        %v4072 = vadd.f32 0.0, %v4071
        %4073 = vmatmul.bf16.gmra.mxu0 %v3916
        %v4074 = vpop.f32.mrf.mxu0
        %v4075 = vadd.f32 0.0, %v4074
        %v4076 = vpop.f32.mrf.mxu0
        %v4077 = vadd.f32 0.0, %v4076
        %4078 = vmatmul.bf16.gmra.mxu0 %v3917
        %v4079 = vpop.f32.mrf.mxu0
        %v4080 = vadd.f32 0.0, %v4079
        %v4081 = vpop.f32.mrf.mxu0
        %v4082 = vadd.f32 0.0, %v4081
        %4083 = vmatmul.bf16.gmra.mxu0 %v3918
        %v4084 = vpop.f32.mrf.mxu0
        %v4085 = vadd.f32 0.0, %v4084
        %v4086 = vpop.f32.mrf.mxu0
        %v4087 = vadd.f32 0.0, %v4086
        %4088 = vmatmul.bf16.gmra.mxu0 %v3919
        %v4089 = vpop.f32.mrf.mxu0
        %v4090 = vadd.f32 0.0, %v4089
        %v4091 = vpop.f32.mrf.mxu0
        %v4092 = vadd.f32 0.0, %v4091
        %4093 = vmatmul.bf16.gmra.mxu0 %v3920
        %v4094 = vpop.f32.mrf.mxu0
        %v4095 = vadd.f32 0.0, %v4094
        %v4096 = vpop.f32.mrf.mxu0
        %v4097 = vadd.f32 0.0, %v4096
        %4098 = vmatmul.bf16.gmra.mxu0 %v3921
        %v4099 = vpop.f32.mrf.mxu0
        %v4100 = vadd.f32 0.0, %v4099
        %v4101 = vpop.f32.mrf.mxu0
        %v4102 = vadd.f32 0.0, %v4101
        %4103 = vmatmul.bf16.gmra.mxu0 %v3922
        %v4104 = vpop.f32.mrf.mxu0
        %v4105 = vadd.f32 0.0, %v4104
        %v4106 = vpop.f32.mrf.mxu0
        %v4107 = vadd.f32 0.0, %v4106
        %4108 = vdwg.mxu0
        %v4109 = vadd.f32 %v3787, %v4021
        %v4110 = vadd.f32 %v3788, %v4070
        %v4111 = vadd.f32 %v3789, %v4023
        %v4112 = vadd.f32 %v3790, %v4072
        %v4113 = vadd.f32 %v3791, %v4026
        %v4114 = vadd.f32 %v3792, %v4075
        %v4115 = vadd.f32 %v3793, %v4028
        %v4116 = vadd.f32 %v3794, %v4077
        %v4117 = vadd.f32 %v3795, %v4031
        %v4118 = vadd.f32 %v3796, %v4080
        %v4119 = vadd.f32 %v3797, %v4033
        %v4120 = vadd.f32 %v3798, %v4082
        %v4121 = vadd.f32 %v3799, %v4036
        %v4122 = vadd.f32 %v3800, %v4085
        %v4123 = vadd.f32 %v3801, %v4038
        %v4124 = vadd.f32 %v3802, %v4087
        %v4125 = vadd.f32 %v3803, %v4041
        %v4126 = vadd.f32 %v3804, %v4090
        %v4127 = vadd.f32 %v3805, %v4043
        %v4128 = vadd.f32 %v3806, %v4092
        %v4129 = vadd.f32 %v3807, %v4046
        %v4130 = vadd.f32 %v3808, %v4095
        %v4131 = vadd.f32 %v3809, %v4048
        %v4132 = vadd.f32 %v3810, %v4097
        %v4133 = vadd.f32 %v3811, %v4051
        %v4134 = vadd.f32 %v3812, %v4100
        %v4135 = vadd.f32 %v3813, %v4053
        %v4136 = vadd.f32 %v3814, %v4102
        %v4137 = vadd.f32 %v3815, %v4056
        %v4138 = vadd.f32 %v3816, %v4105
        %v4139 = vadd.f32 %v3817, %v4058
        %v4140 = vadd.f32 %v3818, %v4107
        %v4141 = vld [vmem:[%s4] sm:$0x3]
        %v4143 = vperm.slane %v4141, 0
        %v4144 = vperm.slane %v4141, 1
        %v4147 = vadd.f32 %v4109, %v4143
        %v4148 = vadd.f32 %v4110, %v4144
        %v4149 = vadd.f32 %v4111, %v4143
        %v4150 = vadd.f32 %v4112, %v4144
        %v4151 = vadd.f32 %v4113, %v4143
        %v4152 = vadd.f32 %v4114, %v4144
        %v4153 = vadd.f32 %v4115, %v4143
        %v4154 = vadd.f32 %v4116, %v4144
        %v4155 = vadd.f32 %v4117, %v4143
        %v4156 = vadd.f32 %v4118, %v4144
        %v4157 = vadd.f32 %v4119, %v4143
        %v4158 = vadd.f32 %v4120, %v4144
        %v4159 = vadd.f32 %v4121, %v4143
        %v4160 = vadd.f32 %v4122, %v4144
        %v4161 = vadd.f32 %v4123, %v4143
        %v4162 = vadd.f32 %v4124, %v4144
        %v4163 = vadd.f32 %v4125, %v4143
        %v4164 = vadd.f32 %v4126, %v4144
        %v4165 = vadd.f32 %v4127, %v4143
        %v4166 = vadd.f32 %v4128, %v4144
        %v4167 = vadd.f32 %v4129, %v4143
        %v4168 = vadd.f32 %v4130, %v4144
        %v4169 = vadd.f32 %v4131, %v4143
        %v4170 = vadd.f32 %v4132, %v4144
        %v4171 = vadd.f32 %v4133, %v4143
        %v4172 = vadd.f32 %v4134, %v4144
        %v4173 = vadd.f32 %v4135, %v4143
        %v4174 = vadd.f32 %v4136, %v4144
        %v4175 = vadd.f32 %v4137, %v4143
        %v4176 = vadd.f32 %v4138, %v4144
        %v4177 = vadd.f32 %v4139, %v4143
        %v4178 = vadd.f32 %v4140, %v4144
        %vm4179 = vcmp.gt.f32.partialorder %v4147, 0.0
        %vm4180 = vcmp.gt.f32.partialorder %v4148, 0.0
        %vm4181 = vcmp.gt.f32.partialorder %v4149, 0.0
        %vm4182 = vcmp.gt.f32.partialorder %v4150, 0.0
        %vm4183 = vcmp.gt.f32.partialorder %v4151, 0.0
        %vm4184 = vcmp.gt.f32.partialorder %v4152, 0.0
        %vm4185 = vcmp.gt.f32.partialorder %v4153, 0.0
        %vm4186 = vcmp.gt.f32.partialorder %v4154, 0.0
        %vm4187 = vcmp.gt.f32.partialorder %v4155, 0.0
        %vm4188 = vcmp.gt.f32.partialorder %v4156, 0.0
        %vm4189 = vcmp.gt.f32.partialorder %v4157, 0.0
        %vm4190 = vcmp.gt.f32.partialorder %v4158, 0.0
        %vm4191 = vcmp.gt.f32.partialorder %v4159, 0.0
        %vm4192 = vcmp.gt.f32.partialorder %v4160, 0.0
        %vm4193 = vcmp.gt.f32.partialorder %v4161, 0.0
        %vm4194 = vcmp.gt.f32.partialorder %v4162, 0.0
        %vm4195 = vcmp.gt.f32.partialorder %v4163, 0.0
        %vm4196 = vcmp.gt.f32.partialorder %v4164, 0.0
        %vm4197 = vcmp.gt.f32.partialorder %v4165, 0.0
        %vm4198 = vcmp.gt.f32.partialorder %v4166, 0.0
        %vm4199 = vcmp.gt.f32.partialorder %v4167, 0.0
        %vm4200 = vcmp.gt.f32.partialorder %v4168, 0.0
        %vm4201 = vcmp.gt.f32.partialorder %v4169, 0.0
        %vm4202 = vcmp.gt.f32.partialorder %v4170, 0.0
        %vm4203 = vcmp.gt.f32.partialorder %v4171, 0.0
        %vm4204 = vcmp.gt.f32.partialorder %v4172, 0.0
        %vm4205 = vcmp.gt.f32.partialorder %v4173, 0.0
        %vm4206 = vcmp.gt.f32.partialorder %v4174, 0.0
        %vm4207 = vcmp.gt.f32.partialorder %v4175, 0.0
        %vm4208 = vcmp.gt.f32.partialorder %v4176, 0.0
        %vm4209 = vcmp.gt.f32.partialorder %v4177, 0.0
        %vm4210 = vcmp.gt.f32.partialorder %v4178, 0.0
        %v4211 = vmul.f32 %v4147, 0.1
        %v4212 = vmul.f32 %v4148, 0.1
        %v4213 = vmul.f32 %v4149, 0.1
        %v4214 = vmul.f32 %v4150, 0.1
        %v4215 = vmul.f32 %v4151, 0.1
        %v4216 = vmul.f32 %v4152, 0.1
        %v4217 = vmul.f32 %v4153, 0.1
        %v4218 = vmul.f32 %v4154, 0.1
        %v4219 = vmul.f32 %v4155, 0.1
        %v4220 = vmul.f32 %v4156, 0.1
        %v4221 = vmul.f32 %v4157, 0.1
        %v4222 = vmul.f32 %v4158, 0.1
        %v4223 = vmul.f32 %v4159, 0.1
        %v4224 = vmul.f32 %v4160, 0.1
        %v4225 = vmul.f32 %v4161, 0.1
        %v4226 = vmul.f32 %v4162, 0.1
        %v4227 = vmul.f32 %v4163, 0.1
        %v4228 = vmul.f32 %v4164, 0.1
        %v4229 = vmul.f32 %v4165, 0.1
        %v4230 = vmul.f32 %v4166, 0.1
        %v4231 = vmul.f32 %v4167, 0.1
        %v4232 = vmul.f32 %v4168, 0.1
        %v4233 = vmul.f32 %v4169, 0.1
        %v4234 = vmul.f32 %v4170, 0.1
        %v4235 = vmul.f32 %v4171, 0.1
        %v4236 = vmul.f32 %v4172, 0.1
        %v4237 = vmul.f32 %v4173, 0.1
        %v4238 = vmul.f32 %v4174, 0.1
        %v4239 = vmul.f32 %v4175, 0.1
        %v4240 = vmul.f32 %v4176, 0.1
        %v4241 = vmul.f32 %v4177, 0.1
        %v4242 = vmul.f32 %v4178, 0.1
        %v4243 = vsel %vm4179, %v4147, %v4211
        %v4244 = vsel %vm4180, %v4148, %v4212
        %v4245 = vsel %vm4181, %v4149, %v4213
        %v4246 = vsel %vm4182, %v4150, %v4214
        %v4247 = vsel %vm4183, %v4151, %v4215
        %v4248 = vsel %vm4184, %v4152, %v4216
        %v4249 = vsel %vm4185, %v4153, %v4217
        %v4250 = vsel %vm4186, %v4154, %v4218
        %v4251 = vsel %vm4187, %v4155, %v4219
        %v4252 = vsel %vm4188, %v4156, %v4220
        %v4253 = vsel %vm4189, %v4157, %v4221
        %v4254 = vsel %vm4190, %v4158, %v4222
        %v4255 = vsel %vm4191, %v4159, %v4223
        %v4256 = vsel %vm4192, %v4160, %v4224
        %v4257 = vsel %vm4193, %v4161, %v4225
        %v4258 = vsel %vm4194, %v4162, %v4226
        %v4259 = vsel %vm4195, %v4163, %v4227
        %v4260 = vsel %vm4196, %v4164, %v4228
        %v4261 = vsel %vm4197, %v4165, %v4229
        %v4262 = vsel %vm4198, %v4166, %v4230
        %v4263 = vsel %vm4199, %v4167, %v4231
        %v4264 = vsel %vm4200, %v4168, %v4232
        %v4265 = vsel %vm4201, %v4169, %v4233
        %v4266 = vsel %vm4202, %v4170, %v4234
        %v4267 = vsel %vm4203, %v4171, %v4235
        %v4268 = vsel %vm4204, %v4172, %v4236
        %v4269 = vsel %vm4205, %v4173, %v4237
        %v4270 = vsel %vm4206, %v4174, %v4238
        %v4271 = vsel %vm4207, %v4175, %v4239
        %v4272 = vsel %vm4208, %v4176, %v4240
        %v4273 = vsel %vm4209, %v4177, %v4241
        %v4274 = vsel %vm4210, %v4178, %v4242
        %s4275 = sadd.s32 %s239, 1
        %s4276 = smul.u32 %s4275, 4
        %s4277 = smul.addr %s4276, 8
        %s4278 = scalar_lea.vmem %s236, %s4277
        %v4279 = vld [vmem:[%s4278] sm:$0xff]
        %v4280 = vld [vmem:[%s4278 + $0x8] sm:$0xff]
        %v4281 = vld [vmem:[%s4278 + $0x10] sm:$0xff]
        %v4282 = vld [vmem:[%s4278 + $0x18] sm:$0xff]
        %v4283 = vld [vmem:[%s4278 + $0x20] sm:$0xff]
        %v4284 = vld [vmem:[%s4278 + $0x28] sm:$0xff]
        %v4285 = vld [vmem:[%s4278 + $0x30] sm:$0xff]
        %v4286 = vld [vmem:[%s4278 + $0x38] sm:$0xff]
        %v4287 = vld [vmem:[%s4278 + $0x40] sm:$0xff]
        %v4288 = vld [vmem:[%s4278 + $0x48] sm:$0xff]
        %v4289 = vld [vmem:[%s4278 + $0x50] sm:$0xff]
        %v4290 = vld [vmem:[%s4278 + $0x58] sm:$0xff]
        %v4291 = vld [vmem:[%s4278 + $0x60] sm:$0xff]
        %v4292 = vld [vmem:[%s4278 + $0x68] sm:$0xff]
        %v4293 = vld [vmem:[%s4278 + $0x70] sm:$0xff]
        %v4294 = vld [vmem:[%s4278 + $0x78] sm:$0xff]
        %v4295 = vld [vmem:[%s4278 + $0x80] sm:$0xff]
        %v4296 = vld [vmem:[%s4278 + $0x88] sm:$0xff]
        %v4297 = vld [vmem:[%s4278 + $0x90] sm:$0xff]
        %v4298 = vld [vmem:[%s4278 + $0x98] sm:$0xff]
        %v4299 = vld [vmem:[%s4278 + $0xa0] sm:$0xff]
        %v4300 = vld [vmem:[%s4278 + $0xa8] sm:$0xff]
        %v4301 = vld [vmem:[%s4278 + $0xb0] sm:$0xff]
        %v4302 = vld [vmem:[%s4278 + $0xb8] sm:$0xff]
        %v4303 = vld [vmem:[%s4278 + $0xc0] sm:$0xff]
        %v4304 = vld [vmem:[%s4278 + $0xc8] sm:$0xff]
        %v4305 = vld [vmem:[%s4278 + $0xd0] sm:$0xff]
        %v4306 = vld [vmem:[%s4278 + $0xd8] sm:$0xff]
        %v4307 = vld [vmem:[%s4278 + $0xe0] sm:$0xff]
        %v4308 = vld [vmem:[%s4278 + $0xe8] sm:$0xff]
        %v4309 = vld [vmem:[%s4278 + $0xf0] sm:$0xff]
        %v4310 = vld [vmem:[%s4278 + $0xf8] sm:$0xff]
        %v4311 = vadd.f32 %v4243, %v4279
        %v4312 = vadd.f32 %v4244, %v4280
        %v4313 = vadd.f32 %v4245, %v4281
        %v4314 = vadd.f32 %v4246, %v4282
        %v4315 = vadd.f32 %v4247, %v4283
        %v4316 = vadd.f32 %v4248, %v4284
        %v4317 = vadd.f32 %v4249, %v4285
        %v4318 = vadd.f32 %v4250, %v4286
        %v4319 = vadd.f32 %v4251, %v4287
        %v4320 = vadd.f32 %v4252, %v4288
        %v4321 = vadd.f32 %v4253, %v4289
        %v4322 = vadd.f32 %v4254, %v4290
        %v4323 = vadd.f32 %v4255, %v4291
        %v4324 = vadd.f32 %v4256, %v4292
        %v4325 = vadd.f32 %v4257, %v4293
        %v4326 = vadd.f32 %v4258, %v4294
        %v4327 = vadd.f32 %v4259, %v4295
        %v4328 = vadd.f32 %v4260, %v4296
        %v4329 = vadd.f32 %v4261, %v4297
        %v4330 = vadd.f32 %v4262, %v4298
        %v4331 = vadd.f32 %v4263, %v4299
        %v4332 = vadd.f32 %v4264, %v4300
        %v4333 = vadd.f32 %v4265, %v4301
        %v4334 = vadd.f32 %v4266, %v4302
        %v4335 = vadd.f32 %v4267, %v4303
        %v4336 = vadd.f32 %v4268, %v4304
        %v4337 = vadd.f32 %v4269, %v4305
        %v4338 = vadd.f32 %v4270, %v4306
        %v4339 = vadd.f32 %v4271, %v4307
        %v4340 = vadd.f32 %v4272, %v4308
        %v4341 = vadd.f32 %v4273, %v4309
        %v4342 = vadd.f32 %v4274, %v4310
        %4343 = vst [vmem:[%s231] sm:$0xff] %v4311
        %4344 = vst [vmem:[%s231 + $0x8] sm:$0xff] %v4312
        %4345 = vst [vmem:[%s231 + $0x10] sm:$0xff] %v4313
        %4346 = vst [vmem:[%s231 + $0x18] sm:$0xff] %v4314
        %4347 = vst [vmem:[%s231 + $0x20] sm:$0xff] %v4315
        %4348 = vst [vmem:[%s231 + $0x28] sm:$0xff] %v4316
        %4349 = vst [vmem:[%s231 + $0x30] sm:$0xff] %v4317
        %4350 = vst [vmem:[%s231 + $0x38] sm:$0xff] %v4318
        %4351 = vst [vmem:[%s231 + $0x40] sm:$0xff] %v4319
        %4352 = vst [vmem:[%s231 + $0x48] sm:$0xff] %v4320
        %4353 = vst [vmem:[%s231 + $0x50] sm:$0xff] %v4321
        %4354 = vst [vmem:[%s231 + $0x58] sm:$0xff] %v4322
        %4355 = vst [vmem:[%s231 + $0x60] sm:$0xff] %v4323
        %4356 = vst [vmem:[%s231 + $0x68] sm:$0xff] %v4324
        %4357 = vst [vmem:[%s231 + $0x70] sm:$0xff] %v4325
        %4358 = vst [vmem:[%s231 + $0x78] sm:$0xff] %v4326
        %4359 = vst [vmem:[%s231 + $0x80] sm:$0xff] %v4327
        %4360 = vst [vmem:[%s231 + $0x88] sm:$0xff] %v4328
        %4361 = vst [vmem:[%s231 + $0x90] sm:$0xff] %v4329
        %4362 = vst [vmem:[%s231 + $0x98] sm:$0xff] %v4330
        %4363 = vst [vmem:[%s231 + $0xa0] sm:$0xff] %v4331
        %4364 = vst [vmem:[%s231 + $0xa8] sm:$0xff] %v4332
        %4365 = vst [vmem:[%s231 + $0xb0] sm:$0xff] %v4333
        %4366 = vst [vmem:[%s231 + $0xb8] sm:$0xff] %v4334
        %4367 = vst [vmem:[%s231 + $0xc0] sm:$0xff] %v4335
        %4368 = vst [vmem:[%s231 + $0xc8] sm:$0xff] %v4336
        %4369 = vst [vmem:[%s231 + $0xd0] sm:$0xff] %v4337
        %4370 = vst [vmem:[%s231 + $0xd8] sm:$0xff] %v4338
        %4371 = vst [vmem:[%s231 + $0xe0] sm:$0xff] %v4339
        %4372 = vst [vmem:[%s231 + $0xe8] sm:$0xff] %v4340
        %4373 = vst [vmem:[%s231 + $0xf0] sm:$0xff] %v4341
        %4374 = vst [vmem:[%s231 + $0xf8] sm:$0xff] %v4342
        %s4375 = sand.u32 %s151, 1
        %s4376 = scalar_lea.sflag [#allocation4], %s4375
        %s4377 = sand.u32 %s151, 1
        %s4378 = smul.addr %s4377, 256
        %s4379 = scalar_lea.vmem [#allocation3], %s4378
        // Predicated region
        $region49: #{darknet_block_pallas.1} parent=39 // pred_check
          %p4380 = pneg %p161
        $region50: #{darknet_block_pallas.1} parent=39 // pred_check_branch
          %4382 = sbr.rel (%p4380) target = $region52
        $region51: #{darknet_block_pallas.1} parent=39 // pred_region
          %s4383 = smul.u32 8, %s24
          %4385 = vsyncadd %s4376, 0
          %s4386 = smul.addr %s4383, 4
          %s4387 = smul.addr %s23, 64
          %s4388 = sadd.s32 %s4386, %s4387
          %s4389 = smul.addr %s4388, 8
          %s4390 = scalar_lea.hbm %s5, %s4389
          %s4391 = sshll.u32 %s4379, 4
          %s4392 = int_to_ptr.vmem [resolvable:$true] %s4391
          %s4393 = sshll.u32 %s4390, 4
          %s4394 = int_to_ptr.hbm [resolvable:$true] %s4393
          %4399 = dma.vmem_to_hbm [thread:$0]  %s4392, 4096, %s4394, %s4376, 256, 256, 16
        $region52: #{darknet_block_pallas.1} parent=39 // pred_fallthru
          _
      $region40: #{darknet_block_pallas.1} parent=5 // pred_fallthru
        _
      %p4400 = scmp.le.s32.totalorder 2, %s14
      // Predicated region
      $region53: #{darknet_block_pallas.1} parent=5 // pred_check
        %p4401 = pneg %p4400
      $region54: #{darknet_block_pallas.1} parent=5 // pred_check_branch
        %4403 = sbr.rel (%p4401) target = $region56
      $region55: #{darknet_block_pallas.1} parent=5 // pred_region
        %s4404 = ssub.s32 %s14, 2
        // Predicated region
        $region57: #{darknet_block_pallas.1} parent=55 // pred_check
          %p4405 = pneg %p167
        $region58: #{darknet_block_pallas.1} parent=55 // pred_check_branch
          %4407 = sbr.rel (%p4405) target = $region60
        $region59: #{darknet_block_pallas.1} parent=55 // pred_region
          %s4408 = sand.u32 %s152, 1
          %s4409 = scalar_lea.sflag [#allocation4], %s4408
          %s4410 = sand.u32 %s152, 1
          %s4411 = smul.addr %s4410, 256
          %s4412 = scalar_lea.vmem [#allocation3], %s4411
          %4414 = dma.done %s4409, 4096
        $region60: #{darknet_block_pallas.1} parent=55 // pred_fallthru
          _
      $region56: #{darknet_block_pallas.1} parent=5 // pred_fallthru
        _
    $region6: #{darknet_block_pallas.1} parent=1 // loop_footer
      %s18 = sadd.s32 1, %s14
    $region7: #{darknet_block_pallas.1} parent=1 // loop_footer_branch
      %13 = sbr.rel target = $region3
    $region8: #{darknet_block_pallas.1} parent=1 // loop_exit
      _
    %4415 = vsyncpa [#allocation4], 1
    %s4416 = scalar_lea.sflag [#allocation4], 1
    %4417 = vsyncpa %s4416, 1

</llo_original>
